<compile_context>
chip_gen: v7x
topology: tpu7x:2x2x1
jax: 0.10.0
libtpu: 0.0.40
codegen_flags: <defaults>
</compile_context>

<pallas_src>
import jax
import jax.numpy as jnp
from jax import lax
from jax.experimental import pallas as pl
from jax.experimental.pallas import tpu as pltpu

KERNELS = (5, 9, 13)          # SPP max-pool kernel sizes (odd -> shape preserving)
BASE_K = KERNELS[0]           # 5: the cascaded pool size
PAD = BASE_K // 2             # 2: halo needed per cascade stage
N_POOL = len(KERNELS)
N_GROUPS = N_POOL + 1         # identity + pools

# Cascade identity requires the arithmetic chain k_i = i*(BASE_K-1)+1.
assert all(k == i * (BASE_K - 1) + 1 for i, k in enumerate(KERNELS, start=1)), KERNELS


def _neg_value(dtype):
    """A value lower than any real input (halo fill for max pooling)."""
    if jnp.issubdtype(dtype, jnp.floating):
        return jnp.array(-jnp.inf, dtype)
    return jnp.array(jnp.iinfo(dtype).min, dtype)


def _round_up(a, b):
    return -(-a // b) * b


def _row_chunk(row_width):
    """Rows per chunk so one (rows, row_width, 128) f32 copy is ~16 vregs."""
    tiles = -(-row_width // 8)
    return max(1, 16 // tiles)


def _spp_kernel(x_ref, out_ref, pad_ref, hm_ref):
    """One (batch, channel-tile) block.

    x_ref:   (1, H, W, TC)            input tile, channels on lanes
    out_ref: (1, H, W, N_GROUPS*TC)   [x | pool5 | pool9 | pool13] on lanes
    pad_ref: (H, WP, TC)              work buffer; cols [W, WP) are -inf halo
    hm_ref:  (H + 2*PAD, W, TC)       horizontal-max buffer; +-PAD rows are -inf
    """
    H, W, TC = x_ref.shape[1], x_ref.shape[2], x_ref.shape[3]
    WP = pad_ref.shape[1]
    HP = hm_ref.shape[0]
    neg = _neg_value(x_ref.dtype)

    # Group 0: identity (lane-aligned full-tile store).
    out_ref[0, :, :, 0:TC] = x_ref[0]

    # One-time -inf halos (centers are rewritten every stage, halos persist).
    pad_ref[:, W:WP, :] = jnp.full((H, WP - W, TC), neg, pad_ref.dtype)
    hm_ref[0:PAD, :, :] = jnp.full((PAD, W, TC), neg, hm_ref.dtype)
    hm_ref[PAD + H:HP, :, :] = jnp.full((PAD, W, TC), neg, hm_ref.dtype)

    # Stage-0 source: the input itself.
    pad_ref[:, 0:W, :] = x_ref[0]

    ch_h = _row_chunk(WP)
    ch_v = _row_chunk(W)
    # Symmetric circular shifts {+-1 .. +-PAD}: wrapped reads land in the -inf
    # right halo, so the result equals a -inf-padded window max (and the result
    # is independent of the roll sign convention).
    shifts = [d for d in range(1, PAD + 1)] + [WP - d for d in range(1, PAD + 1)]

    for s in range(N_POOL):
        # Horizontal 1xBASE_K max: one aligned load per row chunk + XLU rolls.
        for r0 in range(0, H, ch_h):
            rc = min(ch_h, H - r0)
            blk = pad_ref[r0:r0 + rc, :, :]
            hm = blk
            for sh in shifts:
                hm = jnp.maximum(hm, pltpu.roll(blk, shift=sh, axis=1))
            hm_ref[PAD + r0:PAD + r0 + rc, :, :] = hm[:, 0:W, :]

        # Vertical BASE_Kx1 max: leading-dim slices (free offsets).  Write the
        # stage result to the output AND (for all but the last stage) straight
        # back into the work buffer — no separate center re-copy.
        last = s == N_POOL - 1
        lo = (s + 1) * TC
        for r0 in range(0, H, ch_v):
            rc = min(ch_v, H - r0)
            vm = hm_ref[r0:r0 + rc, :, :]
            for di in range(1, BASE_K):
                vm = jnp.maximum(vm, hm_ref[r0 + di:r0 + di + rc, :, :])
            out_ref[0, r0:r0 + rc, :, lo:lo + TC] = vm
            if not last:
                pad_ref[r0:r0 + rc, 0:W, :] = vm


def _plan(H, W, C, dtype):
    """Pick channel tile, padded widths and a VMEM limit from the footprint."""
    itemsize = jnp.dtype(dtype).itemsize
    cp = _round_up(C, 128)
    sub = max(8, 32 // itemsize)            # sublane granule (8 f32 / 16 bf16)
    WP = _round_up(W + PAD, sub)            # right halo >= PAD, tile aligned
    HP = H + 2 * PAD

    def footprint(tc):
        blocks = 2 * (H * W * tc) + 2 * (H * W * N_GROUPS * tc)   # double-buffered
        scratch = H * WP * tc + HP * W * tc
        return (blocks + scratch) * itemsize

    budget = 16 * 1024 * 1024               # keep v7x (64 MiB physical) safe
    c_tile = 128
    for tc in [t for t in range(cp, 0, -128) if cp % t == 0]:
        if footprint(tc) <= budget:
            c_tile = tc                      # biggest tile that fits (v6e likes big)
            break
    fp = footprint(c_tile)
    # TODO(synk): for very large H*W (fp > budget even at c_tile=128), tile H in
    # the grid with a 2*PAD overlapping halo instead of raising the limit; that
    # would also feed both v7x TensorCores for B=1, C<=128 shapes.
    vmem_limit = min(max(int(1.4 * fp), 32 * 1024 * 1024), 96 * 1024 * 1024)
    return cp, c_tile, WP, vmem_limit


def spp_nhwc(x):
    """x: (B, H, W, C) channels-last -> (B, H, W, N_GROUPS*C) in torch concat order.

    When C % 128 == 0 and one channel tile covers all channels this path has no
    wrapper transposes or reshapes at all.
    """
    B, H, W, C = x.shape
    cp, c_tile, WP, vmem_limit = _plan(H, W, C, x.dtype)
    if cp != C:
        x = jnp.pad(x, ((0, 0), (0, 0), (0, 0), (0, cp - C)))
    n_ct = cp // c_tile

    out = pl.pallas_call(
        _spp_kernel,
        out_shape=jax.ShapeDtypeStruct((B, H, W, n_ct * N_GROUPS * c_tile), x.dtype),
        grid=(B, n_ct),
        in_specs=[pl.BlockSpec((1, H, W, c_tile), lambda b, c: (b, 0, 0, c))],
        out_specs=pl.BlockSpec((1, H, W, N_GROUPS * c_tile),
                               lambda b, c: (b, 0, 0, c)),
        scratch_shapes=[
            pltpu.VMEM((H, WP, c_tile), x.dtype),
            pltpu.VMEM((H + 2 * PAD, W, c_tile), x.dtype),
        ],
        compiler_params=pltpu.CompilerParams(
            dimension_semantics=("parallel", "parallel"),
            vmem_limit_bytes=vmem_limit,
        ),
    )(x)

    if n_ct == 1 and cp == C:
        return out                          # already (B, H, W, N_GROUPS*C): free
    # General case: un-interleave channel tiles and drop channel padding.
    out = out.reshape(B, H, W, n_ct, N_GROUPS, c_tile)
    out = jnp.transpose(out, (0, 1, 2, 4, 3, 5)).reshape(B, H, W, N_GROUPS, cp)
    return out[..., :C].reshape(B, H, W, N_GROUPS * C)


def spp(x):
    """x: (B, C, H, W) (torch layout) -> (B, N_GROUPS*C, H, W), matching SPP.forward.

    NOTE: the two transposes below exist only to honor the torch NCHW API; use
    `spp_nhwc` directly in channels-last models to avoid them entirely.
    """
    y = spp_nhwc(jnp.transpose(x, (0, 2, 3, 1)))
    return jnp.transpose(y, (0, 3, 1, 2))


def _spp_reference(x):
    """Pure-JAX reference matching torch SPP forward (NCHW)."""
    if jnp.issubdtype(x.dtype, jnp.floating):
        init = -jnp.inf
    else:
        init = int(jnp.iinfo(x.dtype).min)
    outs = [x]
    for k in KERNELS:
        p = k // 2
        outs.append(lax.reduce_window(
            x, init, lax.max,
            window_dimensions=(1, 1, k, k),
            window_strides=(1, 1, 1, 1),
            padding=[(0, 0), (0, 0), (p, p), (p, p)]))
    return jnp.concatenate(outs, axis=1)


if __name__ == "__main__":
    key = jax.random.PRNGKey(0)

    # Torch-layout path (matches SPP.forward exactly).
    B, C, H, W = 2, 4, 16, 16
    x = jax.random.normal(key, (B, C, H, W), dtype=jnp.float32)
    out = jax.block_until_ready(jax.jit(spp)(x))
    ref = _spp_reference(x)
    assert out.shape == (B, N_GROUPS * C, H, W), out.shape
    assert jnp.allclose(out, ref, atol=1e-6, rtol=1e-6), "NCHW mismatch vs reference"

    # Channels-last fast path (C % 128 == 0): no layout transposes at all.
    x2 = jax.random.normal(jax.random.PRNGKey(1), (1, 128, 8, 8), dtype=jnp.float32)
    y2 = jax.block_until_ready(jax.jit(spp_nhwc)(jnp.transpose(x2, (0, 2, 3, 1))))
    ref2 = jnp.transpose(_spp_reference(x2), (0, 2, 3, 1))
    assert y2.shape == ref2.shape, y2.shape
    assert jnp.allclose(y2, ref2, atol=1e-6, rtol=1e-6), "NHWC mismatch vs reference"

    print("KERNEL_OK")
</pallas_src>

<mosaic_0001>
module attributes {stable_mosaic.version = 11 : i64} {
  func.func @_spp_kernel(%arg0: i32, %arg1: i32, %arg2: memref<1x16x16x128xf32, #tpu.memory_space<vmem>>, %arg3: memref<1x16x16x512xf32, #tpu.memory_space<vmem>>, %arg4: memref<16x24x128xf32, #tpu.memory_space<vmem>>, %arg5: memref<20x16x128xf32, #tpu.memory_space<vmem>>) attributes {dimension_semantics = [#tpu.dimension_semantics<parallel>, #tpu.dimension_semantics<parallel>], iteration_bounds = array<i64: 2, 1>, scalar_prefetch = 0 : i64, scratch_operands = 2 : i64, tpu.core_type = #tpu.core_type<tc>, window_params = [{transform_indices = @transform_0, window_bounds = array<i64: 1, 16, 16, 128>}, {transform_indices = @transform_1, window_bounds = array<i64: 1, 16, 16, 512>}]} {
    %c0 = arith.constant 0 : index
    %c0_0 = arith.constant 0 : index
    %c0_1 = arith.constant 0 : index
    %c0_2 = arith.constant 0 : index
    %0 = vector.load %arg2[%c0, %c0_0, %c0_1, %c0_2] : memref<1x16x16x128xf32, #tpu.memory_space<vmem>>, vector<1x16x16x128xf32>
    %1 = vector.shape_cast %0 : vector<1x16x16x128xf32> to vector<16x16x128xf32>
    %c0_3 = arith.constant 0 : index
    %c0_4 = arith.constant 0 : index
    %c0_5 = arith.constant 0 : index
    %c0_6 = arith.constant 0 : index
    %2 = vector.load %arg3[%c0_3, %c0_4, %c0_5, %c0_6] : memref<1x16x16x512xf32, #tpu.memory_space<vmem>>, vector<1x16x16x128xf32>
    %3 = vector.shape_cast %2 : vector<1x16x16x128xf32> to vector<16x16x128xf32>
    %4 = vector.shape_cast %1 : vector<16x16x128xf32> to vector<1x16x16x128xf32>
    tpu.vector_store %arg3[%c0_3, %c0_4, %c0_5, %c0_6], %4 {strides = array<i32>} : memref<1x16x16x512xf32, #tpu.memory_space<vmem>>, vector<1x16x16x128xf32>,
    %cst = arith.constant 0xFF800000 : f32
    %5 = vector.broadcast %cst : f32 to vector<16x8x128xf32>
    %c0_7 = arith.constant 0 : index
    %c16 = arith.constant 16 : index
    %c0_8 = arith.constant 0 : index
    %6 = vector.load %arg4[%c0_7, %c16, %c0_8] : memref<16x24x128xf32, #tpu.memory_space<vmem>>, vector<16x8x128xf32>
    tpu.vector_store %arg4[%c0_7, %c16, %c0_8], %5 {strides = array<i32>} : memref<16x24x128xf32, #tpu.memory_space<vmem>>, vector<16x8x128xf32>,
    %cst_9 = arith.constant 0xFF800000 : f32
    %7 = vector.broadcast %cst_9 : f32 to vector<2x16x128xf32>
    %c0_10 = arith.constant 0 : index
    %c0_11 = arith.constant 0 : index
    %c0_12 = arith.constant 0 : index
    %8 = vector.load %arg5[%c0_10, %c0_11, %c0_12] : memref<20x16x128xf32, #tpu.memory_space<vmem>>, vector<2x16x128xf32>
    tpu.vector_store %arg5[%c0_10, %c0_11, %c0_12], %7 {strides = array<i32>} : memref<20x16x128xf32, #tpu.memory_space<vmem>>, vector<2x16x128xf32>,
    %cst_13 = arith.constant 0xFF800000 : f32
    %9 = vector.broadcast %cst_13 : f32 to vector<2x16x128xf32>
    %c18 = arith.constant 18 : index
    %c0_14 = arith.constant 0 : index
    %c0_15 = arith.constant 0 : index
    %10 = vector.load %arg5[%c18, %c0_14, %c0_15] : memref<20x16x128xf32, #tpu.memory_space<vmem>>, vector<2x16x128xf32>
    tpu.vector_store %arg5[%c18, %c0_14, %c0_15], %9 {strides = array<i32>} : memref<20x16x128xf32, #tpu.memory_space<vmem>>, vector<2x16x128xf32>,
    %c0_16 = arith.constant 0 : index
    %c0_17 = arith.constant 0 : index
    %c0_18 = arith.constant 0 : index
    %c0_19 = arith.constant 0 : index
    %11 = vector.load %arg2[%c0_16, %c0_17, %c0_18, %c0_19] : memref<1x16x16x128xf32, #tpu.memory_space<vmem>>, vector<1x16x16x128xf32>
    %12 = vector.shape_cast %11 : vector<1x16x16x128xf32> to vector<16x16x128xf32>
    %c0_20 = arith.constant 0 : index
    %c0_21 = arith.constant 0 : index
    %c0_22 = arith.constant 0 : index
    %13 = vector.load %arg4[%c0_20, %c0_21, %c0_22] : memref<16x24x128xf32, #tpu.memory_space<vmem>>, vector<16x16x128xf32>
    tpu.vector_store %arg4[%c0_20, %c0_21, %c0_22], %12 {strides = array<i32>} : memref<16x24x128xf32, #tpu.memory_space<vmem>>, vector<16x16x128xf32>,
    %c0_23 = arith.constant 0 : index
    %c0_24 = arith.constant 0 : index
    %c0_25 = arith.constant 0 : index
    %14 = vector.load %arg4[%c0_23, %c0_24, %c0_25] : memref<16x24x128xf32, #tpu.memory_space<vmem>>, vector<5x24x128xf32>
    %c1_i32 = arith.constant 1 : i32
    %15 = tpu.dynamic_rotate %14 by %c1_i32 dim 1 : vector<5x24x128xf32>, i32 -> vector<5x24x128xf32>
    %16 = arith.maximumf %14, %15 : vector<5x24x128xf32>
    %c2_i32 = arith.constant 2 : i32
    %17 = tpu.dynamic_rotate %14 by %c2_i32 dim 1 : vector<5x24x128xf32>, i32 -> vector<5x24x128xf32>
    %18 = arith.maximumf %16, %17 : vector<5x24x128xf32>
    %c23_i32 = arith.constant 23 : i32
    %19 = tpu.dynamic_rotate %14 by %c23_i32 dim 1 : vector<5x24x128xf32>, i32 -> vector<5x24x128xf32>
    %20 = arith.maximumf %18, %19 : vector<5x24x128xf32>
    %c22_i32 = arith.constant 22 : i32
    %21 = tpu.dynamic_rotate %14 by %c22_i32 dim 1 : vector<5x24x128xf32>, i32 -> vector<5x24x128xf32>
    %22 = arith.maximumf %20, %21 : vector<5x24x128xf32>
    %23 = vector.extract_strided_slice %22 {offsets = [0, 0, 0], sizes = [5, 16, 128], strides = [1, 1, 1]} : vector<5x24x128xf32> to vector<5x16x128xf32>
    %c2 = arith.constant 2 : index
    %c0_26 = arith.constant 0 : index
    %c0_27 = arith.constant 0 : index
    %24 = vector.load %arg5[%c2, %c0_26, %c0_27] : memref<20x16x128xf32, #tpu.memory_space<vmem>>, vector<5x16x128xf32>
    tpu.vector_store %arg5[%c2, %c0_26, %c0_27], %23 {strides = array<i32>} : memref<20x16x128xf32, #tpu.memory_space<vmem>>, vector<5x16x128xf32>,
    %c5 = arith.constant 5 : index
    %c0_28 = arith.constant 0 : index
    %c0_29 = arith.constant 0 : index
    %25 = vector.load %arg4[%c5, %c0_28, %c0_29] : memref<16x24x128xf32, #tpu.memory_space<vmem>>, vector<5x24x128xf32>
    %c1_i32_30 = arith.constant 1 : i32
    %26 = tpu.dynamic_rotate %25 by %c1_i32_30 dim 1 : vector<5x24x128xf32>, i32 -> vector<5x24x128xf32>
    %27 = arith.maximumf %25, %26 : vector<5x24x128xf32>
    %c2_i32_31 = arith.constant 2 : i32
    %28 = tpu.dynamic_rotate %25 by %c2_i32_31 dim 1 : vector<5x24x128xf32>, i32 -> vector<5x24x128xf32>
    %29 = arith.maximumf %27, %28 : vector<5x24x128xf32>
    %c23_i32_32 = arith.constant 23 : i32
    %30 = tpu.dynamic_rotate %25 by %c23_i32_32 dim 1 : vector<5x24x128xf32>, i32 -> vector<5x24x128xf32>
    %31 = arith.maximumf %29, %30 : vector<5x24x128xf32>
    %c22_i32_33 = arith.constant 22 : i32
    %32 = tpu.dynamic_rotate %25 by %c22_i32_33 dim 1 : vector<5x24x128xf32>, i32 -> vector<5x24x128xf32>
    %33 = arith.maximumf %31, %32 : vector<5x24x128xf32>
    %34 = vector.extract_strided_slice %33 {offsets = [0, 0, 0], sizes = [5, 16, 128], strides = [1, 1, 1]} : vector<5x24x128xf32> to vector<5x16x128xf32>
    %c7 = arith.constant 7 : index
    %c0_34 = arith.constant 0 : index
    %c0_35 = arith.constant 0 : index
    %35 = vector.load %arg5[%c7, %c0_34, %c0_35] : memref<20x16x128xf32, #tpu.memory_space<vmem>>, vector<5x16x128xf32>
    tpu.vector_store %arg5[%c7, %c0_34, %c0_35], %34 {strides = array<i32>} : memref<20x16x128xf32, #tpu.memory_space<vmem>>, vector<5x16x128xf32>,
    %c10 = arith.constant 10 : index
    %c0_36 = arith.constant 0 : index
    %c0_37 = arith.constant 0 : index
    %36 = vector.load %arg4[%c10, %c0_36, %c0_37] : memref<16x24x128xf32, #tpu.memory_space<vmem>>, vector<5x24x128xf32>
    %c1_i32_38 = arith.constant 1 : i32
    %37 = tpu.dynamic_rotate %36 by %c1_i32_38 dim 1 : vector<5x24x128xf32>, i32 -> vector<5x24x128xf32>
    %38 = arith.maximumf %36, %37 : vector<5x24x128xf32>
    %c2_i32_39 = arith.constant 2 : i32
    %39 = tpu.dynamic_rotate %36 by %c2_i32_39 dim 1 : vector<5x24x128xf32>, i32 -> vector<5x24x128xf32>
    %40 = arith.maximumf %38, %39 : vector<5x24x128xf32>
    %c23_i32_40 = arith.constant 23 : i32
    %41 = tpu.dynamic_rotate %36 by %c23_i32_40 dim 1 : vector<5x24x128xf32>, i32 -> vector<5x24x128xf32>
    %42 = arith.maximumf %40, %41 : vector<5x24x128xf32>
    %c22_i32_41 = arith.constant 22 : i32
    %43 = tpu.dynamic_rotate %36 by %c22_i32_41 dim 1 : vector<5x24x128xf32>, i32 -> vector<5x24x128xf32>
    %44 = arith.maximumf %42, %43 : vector<5x24x128xf32>
    %45 = vector.extract_strided_slice %44 {offsets = [0, 0, 0], sizes = [5, 16, 128], strides = [1, 1, 1]} : vector<5x24x128xf32> to vector<5x16x128xf32>
    %c12 = arith.constant 12 : index
    %c0_42 = arith.constant 0 : index
    %c0_43 = arith.constant 0 : index
    %46 = vector.load %arg5[%c12, %c0_42, %c0_43] : memref<20x16x128xf32, #tpu.memory_space<vmem>>, vector<5x16x128xf32>
    tpu.vector_store %arg5[%c12, %c0_42, %c0_43], %45 {strides = array<i32>} : memref<20x16x128xf32, #tpu.memory_space<vmem>>, vector<5x16x128xf32>,
    %c15 = arith.constant 15 : index
    %c0_44 = arith.constant 0 : index
    %c0_45 = arith.constant 0 : index
    %47 = vector.load %arg4[%c15, %c0_44, %c0_45] : memref<16x24x128xf32, #tpu.memory_space<vmem>>, vector<1x24x128xf32>
    %c1_i32_46 = arith.constant 1 : i32
    %48 = tpu.dynamic_rotate %47 by %c1_i32_46 dim 1 : vector<1x24x128xf32>, i32 -> vector<1x24x128xf32>
    %49 = arith.maximumf %47, %48 : vector<1x24x128xf32>
    %c2_i32_47 = arith.constant 2 : i32
    %50 = tpu.dynamic_rotate %47 by %c2_i32_47 dim 1 : vector<1x24x128xf32>, i32 -> vector<1x24x128xf32>
    %51 = arith.maximumf %49, %50 : vector<1x24x128xf32>
    %c23_i32_48 = arith.constant 23 : i32
    %52 = tpu.dynamic_rotate %47 by %c23_i32_48 dim 1 : vector<1x24x128xf32>, i32 -> vector<1x24x128xf32>
    %53 = arith.maximumf %51, %52 : vector<1x24x128xf32>
    %c22_i32_49 = arith.constant 22 : i32
    %54 = tpu.dynamic_rotate %47 by %c22_i32_49 dim 1 : vector<1x24x128xf32>, i32 -> vector<1x24x128xf32>
    %55 = arith.maximumf %53, %54 : vector<1x24x128xf32>
    %56 = vector.extract_strided_slice %55 {offsets = [0, 0, 0], sizes = [1, 16, 128], strides = [1, 1, 1]} : vector<1x24x128xf32> to vector<1x16x128xf32>
    %c17 = arith.constant 17 : index
    %c0_50 = arith.constant 0 : index
    %c0_51 = arith.constant 0 : index
    %57 = vector.load %arg5[%c17, %c0_50, %c0_51] : memref<20x16x128xf32, #tpu.memory_space<vmem>>, vector<1x16x128xf32>
    tpu.vector_store %arg5[%c17, %c0_50, %c0_51], %56 {strides = array<i32>} : memref<20x16x128xf32, #tpu.memory_space<vmem>>, vector<1x16x128xf32>,
    %c0_52 = arith.constant 0 : index
    %c0_53 = arith.constant 0 : index
    %c0_54 = arith.constant 0 : index
    %58 = vector.load %arg5[%c0_52, %c0_53, %c0_54] : memref<20x16x128xf32, #tpu.memory_space<vmem>>, vector<8x16x128xf32>
    %c1 = arith.constant 1 : index
    %c0_55 = arith.constant 0 : index
    %c0_56 = arith.constant 0 : index
    %59 = vector.load %arg5[%c1, %c0_55, %c0_56] : memref<20x16x128xf32, #tpu.memory_space<vmem>>, vector<8x16x128xf32>
    %60 = arith.maximumf %58, %59 : vector<8x16x128xf32>
    %c2_57 = arith.constant 2 : index
    %c0_58 = arith.constant 0 : index
    %c0_59 = arith.constant 0 : index
    %61 = vector.load %arg5[%c2_57, %c0_58, %c0_59] : memref<20x16x128xf32, #tpu.memory_space<vmem>>, vector<8x16x128xf32>
    %62 = arith.maximumf %60, %61 : vector<8x16x128xf32>
    %c3 = arith.constant 3 : index
    %c0_60 = arith.constant 0 : index
    %c0_61 = arith.constant 0 : index
    %63 = vector.load %arg5[%c3, %c0_60, %c0_61] : memref<20x16x128xf32, #tpu.memory_space<vmem>>, vector<8x16x128xf32>
    %64 = arith.maximumf %62, %63 : vector<8x16x128xf32>
    %c4 = arith.constant 4 : index
    %c0_62 = arith.constant 0 : index
    %c0_63 = arith.constant 0 : index
    %65 = vector.load %arg5[%c4, %c0_62, %c0_63] : memref<20x16x128xf32, #tpu.memory_space<vmem>>, vector<8x16x128xf32>
    %66 = arith.maximumf %64, %65 : vector<8x16x128xf32>
    %c0_64 = arith.constant 0 : index
    %c0_65 = arith.constant 0 : index
    %c0_66 = arith.constant 0 : index
    %c128 = arith.constant 128 : index
    %67 = vector.load %arg3[%c0_64, %c0_65, %c0_66, %c128] : memref<1x16x16x512xf32, #tpu.memory_space<vmem>>, vector<1x8x16x128xf32>
    %68 = vector.shape_cast %67 : vector<1x8x16x128xf32> to vector<8x16x128xf32>
    %69 = vector.shape_cast %66 : vector<8x16x128xf32> to vector<1x8x16x128xf32>
    tpu.vector_store %arg3[%c0_64, %c0_65, %c0_66, %c128], %69 {strides = array<i32>} : memref<1x16x16x512xf32, #tpu.memory_space<vmem>>, vector<1x8x16x128xf32>,
    %c0_67 = arith.constant 0 : index
    %c0_68 = arith.constant 0 : index
    %c0_69 = arith.constant 0 : index
    %70 = vector.load %arg4[%c0_67, %c0_68, %c0_69] : memref<16x24x128xf32, #tpu.memory_space<vmem>>, vector<8x16x128xf32>
    tpu.vector_store %arg4[%c0_67, %c0_68, %c0_69], %66 {strides = array<i32>} : memref<16x24x128xf32, #tpu.memory_space<vmem>>, vector<8x16x128xf32>,
    %c8 = arith.constant 8 : index
    %c0_70 = arith.constant 0 : index
    %c0_71 = arith.constant 0 : index
    %71 = vector.load %arg5[%c8, %c0_70, %c0_71] : memref<20x16x128xf32, #tpu.memory_space<vmem>>, vector<8x16x128xf32>
    %c9 = arith.constant 9 : index
    %c0_72 = arith.constant 0 : index
    %c0_73 = arith.constant 0 : index
    %72 = vector.load %arg5[%c9, %c0_72, %c0_73] : memref<20x16x128xf32, #tpu.memory_space<vmem>>, vector<8x16x128xf32>
    %73 = arith.maximumf %71, %72 : vector<8x16x128xf32>
    %c10_74 = arith.constant 10 : index
    %c0_75 = arith.constant 0 : index
    %c0_76 = arith.constant 0 : index
    %74 = vector.load %arg5[%c10_74, %c0_75, %c0_76] : memref<20x16x128xf32, #tpu.memory_space<vmem>>, vector<8x16x128xf32>
    %75 = arith.maximumf %73, %74 : vector<8x16x128xf32>
    %c11 = arith.constant 11 : index
    %c0_77 = arith.constant 0 : index
    %c0_78 = arith.constant 0 : index
    %76 = vector.load %arg5[%c11, %c0_77, %c0_78] : memref<20x16x128xf32, #tpu.memory_space<vmem>>, vector<8x16x128xf32>
    %77 = arith.maximumf %75, %76 : vector<8x16x128xf32>
    %c12_79 = arith.constant 12 : index
    %c0_80 = arith.constant 0 : index
    %c0_81 = arith.constant 0 : index
    %78 = vector.load %arg5[%c12_79, %c0_80, %c0_81] : memref<20x16x128xf32, #tpu.memory_space<vmem>>, vector<8x16x128xf32>
    %79 = arith.maximumf %77, %78 : vector<8x16x128xf32>
    %c0_82 = arith.constant 0 : index
    %c8_83 = arith.constant 8 : index
    %c0_84 = arith.constant 0 : index
    %c128_85 = arith.constant 128 : index
    %80 = vector.load %arg3[%c0_82, %c8_83, %c0_84, %c128_85] : memref<1x16x16x512xf32, #tpu.memory_space<vmem>>, vector<1x8x16x128xf32>
    %81 = vector.shape_cast %80 : vector<1x8x16x128xf32> to vector<8x16x128xf32>
    %82 = vector.shape_cast %79 : vector<8x16x128xf32> to vector<1x8x16x128xf32>
    tpu.vector_store %arg3[%c0_82, %c8_83, %c0_84, %c128_85], %82 {strides = array<i32>} : memref<1x16x16x512xf32, #tpu.memory_space<vmem>>, vector<1x8x16x128xf32>,
    %c8_86 = arith.constant 8 : index
    %c0_87 = arith.constant 0 : index
    %c0_88 = arith.constant 0 : index
    %83 = vector.load %arg4[%c8_86, %c0_87, %c0_88] : memref<16x24x128xf32, #tpu.memory_space<vmem>>, vector<8x16x128xf32>
    tpu.vector_store %arg4[%c8_86, %c0_87, %c0_88], %79 {strides = array<i32>} : memref<16x24x128xf32, #tpu.memory_space<vmem>>, vector<8x16x128xf32>,
    %c0_89 = arith.constant 0 : index
    %c0_90 = arith.constant 0 : index
    %c0_91 = arith.constant 0 : index
    %84 = vector.load %arg4[%c0_89, %c0_90, %c0_91] : memref<16x24x128xf32, #tpu.memory_space<vmem>>, vector<5x24x128xf32>
    %c1_i32_92 = arith.constant 1 : i32
    %85 = tpu.dynamic_rotate %84 by %c1_i32_92 dim 1 : vector<5x24x128xf32>, i32 -> vector<5x24x128xf32>
    %86 = arith.maximumf %84, %85 : vector<5x24x128xf32>
    %c2_i32_93 = arith.constant 2 : i32
    %87 = tpu.dynamic_rotate %84 by %c2_i32_93 dim 1 : vector<5x24x128xf32>, i32 -> vector<5x24x128xf32>
    %88 = arith.maximumf %86, %87 : vector<5x24x128xf32>
    %c23_i32_94 = arith.constant 23 : i32
    %89 = tpu.dynamic_rotate %84 by %c23_i32_94 dim 1 : vector<5x24x128xf32>, i32 -> vector<5x24x128xf32>
    %90 = arith.maximumf %88, %89 : vector<5x24x128xf32>
    %c22_i32_95 = arith.constant 22 : i32
    %91 = tpu.dynamic_rotate %84 by %c22_i32_95 dim 1 : vector<5x24x128xf32>, i32 -> vector<5x24x128xf32>
    %92 = arith.maximumf %90, %91 : vector<5x24x128xf32>
    %93 = vector.extract_strided_slice %92 {offsets = [0, 0, 0], sizes = [5, 16, 128], strides = [1, 1, 1]} : vector<5x24x128xf32> to vector<5x16x128xf32>
    %c2_96 = arith.constant 2 : index
    %c0_97 = arith.constant 0 : index
    %c0_98 = arith.constant 0 : index
    %94 = vector.load %arg5[%c2_96, %c0_97, %c0_98] : memref<20x16x128xf32, #tpu.memory_space<vmem>>, vector<5x16x128xf32>
    tpu.vector_store %arg5[%c2_96, %c0_97, %c0_98], %93 {strides = array<i32>} : memref<20x16x128xf32, #tpu.memory_space<vmem>>, vector<5x16x128xf32>,
    %c5_99 = arith.constant 5 : index
    %c0_100 = arith.constant 0 : index
    %c0_101 = arith.constant 0 : index
    %95 = vector.load %arg4[%c5_99, %c0_100, %c0_101] : memref<16x24x128xf32, #tpu.memory_space<vmem>>, vector<5x24x128xf32>
    %c1_i32_102 = arith.constant 1 : i32
    %96 = tpu.dynamic_rotate %95 by %c1_i32_102 dim 1 : vector<5x24x128xf32>, i32 -> vector<5x24x128xf32>
    %97 = arith.maximumf %95, %96 : vector<5x24x128xf32>
    %c2_i32_103 = arith.constant 2 : i32
    %98 = tpu.dynamic_rotate %95 by %c2_i32_103 dim 1 : vector<5x24x128xf32>, i32 -> vector<5x24x128xf32>
    %99 = arith.maximumf %97, %98 : vector<5x24x128xf32>
    %c23_i32_104 = arith.constant 23 : i32
    %100 = tpu.dynamic_rotate %95 by %c23_i32_104 dim 1 : vector<5x24x128xf32>, i32 -> vector<5x24x128xf32>
    %101 = arith.maximumf %99, %100 : vector<5x24x128xf32>
    %c22_i32_105 = arith.constant 22 : i32
    %102 = tpu.dynamic_rotate %95 by %c22_i32_105 dim 1 : vector<5x24x128xf32>, i32 -> vector<5x24x128xf32>
    %103 = arith.maximumf %101, %102 : vector<5x24x128xf32>
    %104 = vector.extract_strided_slice %103 {offsets = [0, 0, 0], sizes = [5, 16, 128], strides = [1, 1, 1]} : vector<5x24x128xf32> to vector<5x16x128xf32>
    %c7_106 = arith.constant 7 : index
    %c0_107 = arith.constant 0 : index
    %c0_108 = arith.constant 0 : index
    %105 = vector.load %arg5[%c7_106, %c0_107, %c0_108] : memref<20x16x128xf32, #tpu.memory_space<vmem>>, vector<5x16x128xf32>
    tpu.vector_store %arg5[%c7_106, %c0_107, %c0_108], %104 {strides = array<i32>} : memref<20x16x128xf32, #tpu.memory_space<vmem>>, vector<5x16x128xf32>,
    %c10_109 = arith.constant 10 : index
    %c0_110 = arith.constant 0 : index
    %c0_111 = arith.constant 0 : index
    %106 = vector.load %arg4[%c10_109, %c0_110, %c0_111] : memref<16x24x128xf32, #tpu.memory_space<vmem>>, vector<5x24x128xf32>
    %c1_i32_112 = arith.constant 1 : i32
    %107 = tpu.dynamic_rotate %106 by %c1_i32_112 dim 1 : vector<5x24x128xf32>, i32 -> vector<5x24x128xf32>
    %108 = arith.maximumf %106, %107 : vector<5x24x128xf32>
    %c2_i32_113 = arith.constant 2 : i32
    %109 = tpu.dynamic_rotate %106 by %c2_i32_113 dim 1 : vector<5x24x128xf32>, i32 -> vector<5x24x128xf32>
    %110 = arith.maximumf %108, %109 : vector<5x24x128xf32>
    %c23_i32_114 = arith.constant 23 : i32
    %111 = tpu.dynamic_rotate %106 by %c23_i32_114 dim 1 : vector<5x24x128xf32>, i32 -> vector<5x24x128xf32>
    %112 = arith.maximumf %110, %111 : vector<5x24x128xf32>
    %c22_i32_115 = arith.constant 22 : i32
    %113 = tpu.dynamic_rotate %106 by %c22_i32_115 dim 1 : vector<5x24x128xf32>, i32 -> vector<5x24x128xf32>
    %114 = arith.maximumf %112, %113 : vector<5x24x128xf32>
    %115 = vector.extract_strided_slice %114 {offsets = [0, 0, 0], sizes = [5, 16, 128], strides = [1, 1, 1]} : vector<5x24x128xf32> to vector<5x16x128xf32>
    %c12_116 = arith.constant 12 : index
    %c0_117 = arith.constant 0 : index
    %c0_118 = arith.constant 0 : index
    %116 = vector.load %arg5[%c12_116, %c0_117, %c0_118] : memref<20x16x128xf32, #tpu.memory_space<vmem>>, vector<5x16x128xf32>
    tpu.vector_store %arg5[%c12_116, %c0_117, %c0_118], %115 {strides = array<i32>} : memref<20x16x128xf32, #tpu.memory_space<vmem>>, vector<5x16x128xf32>,
    %c15_119 = arith.constant 15 : index
    %c0_120 = arith.constant 0 : index
    %c0_121 = arith.constant 0 : index
    %117 = vector.load %arg4[%c15_119, %c0_120, %c0_121] : memref<16x24x128xf32, #tpu.memory_space<vmem>>, vector<1x24x128xf32>
    %c1_i32_122 = arith.constant 1 : i32
    %118 = tpu.dynamic_rotate %117 by %c1_i32_122 dim 1 : vector<1x24x128xf32>, i32 -> vector<1x24x128xf32>
    %119 = arith.maximumf %117, %118 : vector<1x24x128xf32>
    %c2_i32_123 = arith.constant 2 : i32
    %120 = tpu.dynamic_rotate %117 by %c2_i32_123 dim 1 : vector<1x24x128xf32>, i32 -> vector<1x24x128xf32>
    %121 = arith.maximumf %119, %120 : vector<1x24x128xf32>
    %c23_i32_124 = arith.constant 23 : i32
    %122 = tpu.dynamic_rotate %117 by %c23_i32_124 dim 1 : vector<1x24x128xf32>, i32 -> vector<1x24x128xf32>
    %123 = arith.maximumf %121, %122 : vector<1x24x128xf32>
    %c22_i32_125 = arith.constant 22 : i32
    %124 = tpu.dynamic_rotate %117 by %c22_i32_125 dim 1 : vector<1x24x128xf32>, i32 -> vector<1x24x128xf32>
    %125 = arith.maximumf %123, %124 : vector<1x24x128xf32>
    %126 = vector.extract_strided_slice %125 {offsets = [0, 0, 0], sizes = [1, 16, 128], strides = [1, 1, 1]} : vector<1x24x128xf32> to vector<1x16x128xf32>
    %c17_126 = arith.constant 17 : index
    %c0_127 = arith.constant 0 : index
    %c0_128 = arith.constant 0 : index
    %127 = vector.load %arg5[%c17_126, %c0_127, %c0_128] : memref<20x16x128xf32, #tpu.memory_space<vmem>>, vector<1x16x128xf32>
    tpu.vector_store %arg5[%c17_126, %c0_127, %c0_128], %126 {strides = array<i32>} : memref<20x16x128xf32, #tpu.memory_space<vmem>>, vector<1x16x128xf32>,
    %c0_129 = arith.constant 0 : index
    %c0_130 = arith.constant 0 : index
    %c0_131 = arith.constant 0 : index
    %128 = vector.load %arg5[%c0_129, %c0_130, %c0_131] : memref<20x16x128xf32, #tpu.memory_space<vmem>>, vector<8x16x128xf32>
    %c1_132 = arith.constant 1 : index
    %c0_133 = arith.constant 0 : index
    %c0_134 = arith.constant 0 : index
    %129 = vector.load %arg5[%c1_132, %c0_133, %c0_134] : memref<20x16x128xf32, #tpu.memory_space<vmem>>, vector<8x16x128xf32>
    %130 = arith.maximumf %128, %129 : vector<8x16x128xf32>
    %c2_135 = arith.constant 2 : index
    %c0_136 = arith.constant 0 : index
    %c0_137 = arith.constant 0 : index
    %131 = vector.load %arg5[%c2_135, %c0_136, %c0_137] : memref<20x16x128xf32, #tpu.memory_space<vmem>>, vector<8x16x128xf32>
    %132 = arith.maximumf %130, %131 : vector<8x16x128xf32>
    %c3_138 = arith.constant 3 : index
    %c0_139 = arith.constant 0 : index
    %c0_140 = arith.constant 0 : index
    %133 = vector.load %arg5[%c3_138, %c0_139, %c0_140] : memref<20x16x128xf32, #tpu.memory_space<vmem>>, vector<8x16x128xf32>
    %134 = arith.maximumf %132, %133 : vector<8x16x128xf32>
    %c4_141 = arith.constant 4 : index
    %c0_142 = arith.constant 0 : index
    %c0_143 = arith.constant 0 : index
    %135 = vector.load %arg5[%c4_141, %c0_142, %c0_143] : memref<20x16x128xf32, #tpu.memory_space<vmem>>, vector<8x16x128xf32>
    %136 = arith.maximumf %134, %135 : vector<8x16x128xf32>
    %c0_144 = arith.constant 0 : index
    %c0_145 = arith.constant 0 : index
    %c0_146 = arith.constant 0 : index
    %c256 = arith.constant 256 : index
    %137 = vector.load %arg3[%c0_144, %c0_145, %c0_146, %c256] : memref<1x16x16x512xf32, #tpu.memory_space<vmem>>, vector<1x8x16x128xf32>
    %138 = vector.shape_cast %137 : vector<1x8x16x128xf32> to vector<8x16x128xf32>
    %139 = vector.shape_cast %136 : vector<8x16x128xf32> to vector<1x8x16x128xf32>
    tpu.vector_store %arg3[%c0_144, %c0_145, %c0_146, %c256], %139 {strides = array<i32>} : memref<1x16x16x512xf32, #tpu.memory_space<vmem>>, vector<1x8x16x128xf32>,
    %c0_147 = arith.constant 0 : index
    %c0_148 = arith.constant 0 : index
    %c0_149 = arith.constant 0 : index
    %140 = vector.load %arg4[%c0_147, %c0_148, %c0_149] : memref<16x24x128xf32, #tpu.memory_space<vmem>>, vector<8x16x128xf32>
    tpu.vector_store %arg4[%c0_147, %c0_148, %c0_149], %136 {strides = array<i32>} : memref<16x24x128xf32, #tpu.memory_space<vmem>>, vector<8x16x128xf32>,
    %c8_150 = arith.constant 8 : index
    %c0_151 = arith.constant 0 : index
    %c0_152 = arith.constant 0 : index
    %141 = vector.load %arg5[%c8_150, %c0_151, %c0_152] : memref<20x16x128xf32, #tpu.memory_space<vmem>>, vector<8x16x128xf32>
    %c9_153 = arith.constant 9 : index
    %c0_154 = arith.constant 0 : index
    %c0_155 = arith.constant 0 : index
    %142 = vector.load %arg5[%c9_153, %c0_154, %c0_155] : memref<20x16x128xf32, #tpu.memory_space<vmem>>, vector<8x16x128xf32>
    %143 = arith.maximumf %141, %142 : vector<8x16x128xf32>
    %c10_156 = arith.constant 10 : index
    %c0_157 = arith.constant 0 : index
    %c0_158 = arith.constant 0 : index
    %144 = vector.load %arg5[%c10_156, %c0_157, %c0_158] : memref<20x16x128xf32, #tpu.memory_space<vmem>>, vector<8x16x128xf32>
    %145 = arith.maximumf %143, %144 : vector<8x16x128xf32>
    %c11_159 = arith.constant 11 : index
    %c0_160 = arith.constant 0 : index
    %c0_161 = arith.constant 0 : index
    %146 = vector.load %arg5[%c11_159, %c0_160, %c0_161] : memref<20x16x128xf32, #tpu.memory_space<vmem>>, vector<8x16x128xf32>
    %147 = arith.maximumf %145, %146 : vector<8x16x128xf32>
    %c12_162 = arith.constant 12 : index
    %c0_163 = arith.constant 0 : index
    %c0_164 = arith.constant 0 : index
    %148 = vector.load %arg5[%c12_162, %c0_163, %c0_164] : memref<20x16x128xf32, #tpu.memory_space<vmem>>, vector<8x16x128xf32>
    %149 = arith.maximumf %147, %148 : vector<8x16x128xf32>
    %c0_165 = arith.constant 0 : index
    %c8_166 = arith.constant 8 : index
    %c0_167 = arith.constant 0 : index
    %c256_168 = arith.constant 256 : index
    %150 = vector.load %arg3[%c0_165, %c8_166, %c0_167, %c256_168] : memref<1x16x16x512xf32, #tpu.memory_space<vmem>>, vector<1x8x16x128xf32>
    %151 = vector.shape_cast %150 : vector<1x8x16x128xf32> to vector<8x16x128xf32>
    %152 = vector.shape_cast %149 : vector<8x16x128xf32> to vector<1x8x16x128xf32>
    tpu.vector_store %arg3[%c0_165, %c8_166, %c0_167, %c256_168], %152 {strides = array<i32>} : memref<1x16x16x512xf32, #tpu.memory_space<vmem>>, vector<1x8x16x128xf32>,
    %c8_169 = arith.constant 8 : index
    %c0_170 = arith.constant 0 : index
    %c0_171 = arith.constant 0 : index
    %153 = vector.load %arg4[%c8_169, %c0_170, %c0_171] : memref<16x24x128xf32, #tpu.memory_space<vmem>>, vector<8x16x128xf32>
    tpu.vector_store %arg4[%c8_169, %c0_170, %c0_171], %149 {strides = array<i32>} : memref<16x24x128xf32, #tpu.memory_space<vmem>>, vector<8x16x128xf32>,
    %c0_172 = arith.constant 0 : index
    %c0_173 = arith.constant 0 : index
    %c0_174 = arith.constant 0 : index
    %154 = vector.load %arg4[%c0_172, %c0_173, %c0_174] : memref<16x24x128xf32, #tpu.memory_space<vmem>>, vector<5x24x128xf32>
    %c1_i32_175 = arith.constant 1 : i32
    %155 = tpu.dynamic_rotate %154 by %c1_i32_175 dim 1 : vector<5x24x128xf32>, i32 -> vector<5x24x128xf32>
    %156 = arith.maximumf %154, %155 : vector<5x24x128xf32>
    %c2_i32_176 = arith.constant 2 : i32
    %157 = tpu.dynamic_rotate %154 by %c2_i32_176 dim 1 : vector<5x24x128xf32>, i32 -> vector<5x24x128xf32>
    %158 = arith.maximumf %156, %157 : vector<5x24x128xf32>
    %c23_i32_177 = arith.constant 23 : i32
    %159 = tpu.dynamic_rotate %154 by %c23_i32_177 dim 1 : vector<5x24x128xf32>, i32 -> vector<5x24x128xf32>
    %160 = arith.maximumf %158, %159 : vector<5x24x128xf32>
    %c22_i32_178 = arith.constant 22 : i32
    %161 = tpu.dynamic_rotate %154 by %c22_i32_178 dim 1 : vector<5x24x128xf32>, i32 -> vector<5x24x128xf32>
    %162 = arith.maximumf %160, %161 : vector<5x24x128xf32>
    %163 = vector.extract_strided_slice %162 {offsets = [0, 0, 0], sizes = [5, 16, 128], strides = [1, 1, 1]} : vector<5x24x128xf32> to vector<5x16x128xf32>
    %c2_179 = arith.constant 2 : index
    %c0_180 = arith.constant 0 : index
    %c0_181 = arith.constant 0 : index
    %164 = vector.load %arg5[%c2_179, %c0_180, %c0_181] : memref<20x16x128xf32, #tpu.memory_space<vmem>>, vector<5x16x128xf32>
    tpu.vector_store %arg5[%c2_179, %c0_180, %c0_181], %163 {strides = array<i32>} : memref<20x16x128xf32, #tpu.memory_space<vmem>>, vector<5x16x128xf32>,
    %c5_182 = arith.constant 5 : index
    %c0_183 = arith.constant 0 : index
    %c0_184 = arith.constant 0 : index
    %165 = vector.load %arg4[%c5_182, %c0_183, %c0_184] : memref<16x24x128xf32, #tpu.memory_space<vmem>>, vector<5x24x128xf32>
    %c1_i32_185 = arith.constant 1 : i32
    %166 = tpu.dynamic_rotate %165 by %c1_i32_185 dim 1 : vector<5x24x128xf32>, i32 -> vector<5x24x128xf32>
    %167 = arith.maximumf %165, %166 : vector<5x24x128xf32>
    %c2_i32_186 = arith.constant 2 : i32
    %168 = tpu.dynamic_rotate %165 by %c2_i32_186 dim 1 : vector<5x24x128xf32>, i32 -> vector<5x24x128xf32>
    %169 = arith.maximumf %167, %168 : vector<5x24x128xf32>
    %c23_i32_187 = arith.constant 23 : i32
    %170 = tpu.dynamic_rotate %165 by %c23_i32_187 dim 1 : vector<5x24x128xf32>, i32 -> vector<5x24x128xf32>
    %171 = arith.maximumf %169, %170 : vector<5x24x128xf32>
    %c22_i32_188 = arith.constant 22 : i32
    %172 = tpu.dynamic_rotate %165 by %c22_i32_188 dim 1 : vector<5x24x128xf32>, i32 -> vector<5x24x128xf32>
    %173 = arith.maximumf %171, %172 : vector<5x24x128xf32>
    %174 = vector.extract_strided_slice %173 {offsets = [0, 0, 0], sizes = [5, 16, 128], strides = [1, 1, 1]} : vector<5x24x128xf32> to vector<5x16x128xf32>
    %c7_189 = arith.constant 7 : index
    %c0_190 = arith.constant 0 : index
    %c0_191 = arith.constant 0 : index
    %175 = vector.load %arg5[%c7_189, %c0_190, %c0_191] : memref<20x16x128xf32, #tpu.memory_space<vmem>>, vector<5x16x128xf32>
    tpu.vector_store %arg5[%c7_189, %c0_190, %c0_191], %174 {strides = array<i32>} : memref<20x16x128xf32, #tpu.memory_space<vmem>>, vector<5x16x128xf32>,
    %c10_192 = arith.constant 10 : index
    %c0_193 = arith.constant 0 : index
    %c0_194 = arith.constant 0 : index
    %176 = vector.load %arg4[%c10_192, %c0_193, %c0_194] : memref<16x24x128xf32, #tpu.memory_space<vmem>>, vector<5x24x128xf32>
    %c1_i32_195 = arith.constant 1 : i32
    %177 = tpu.dynamic_rotate %176 by %c1_i32_195 dim 1 : vector<5x24x128xf32>, i32 -> vector<5x24x128xf32>
    %178 = arith.maximumf %176, %177 : vector<5x24x128xf32>
    %c2_i32_196 = arith.constant 2 : i32
    %179 = tpu.dynamic_rotate %176 by %c2_i32_196 dim 1 : vector<5x24x128xf32>, i32 -> vector<5x24x128xf32>
    %180 = arith.maximumf %178, %179 : vector<5x24x128xf32>
    %c23_i32_197 = arith.constant 23 : i32
    %181 = tpu.dynamic_rotate %176 by %c23_i32_197 dim 1 : vector<5x24x128xf32>, i32 -> vector<5x24x128xf32>
    %182 = arith.maximumf %180, %181 : vector<5x24x128xf32>
    %c22_i32_198 = arith.constant 22 : i32
    %183 = tpu.dynamic_rotate %176 by %c22_i32_198 dim 1 : vector<5x24x128xf32>, i32 -> vector<5x24x128xf32>
    %184 = arith.maximumf %182, %183 : vector<5x24x128xf32>
    %185 = vector.extract_strided_slice %184 {offsets = [0, 0, 0], sizes = [5, 16, 128], strides = [1, 1, 1]} : vector<5x24x128xf32> to vector<5x16x128xf32>
    %c12_199 = arith.constant 12 : index
    %c0_200 = arith.constant 0 : index
    %c0_201 = arith.constant 0 : index
    %186 = vector.load %arg5[%c12_199, %c0_200, %c0_201] : memref<20x16x128xf32, #tpu.memory_space<vmem>>, vector<5x16x128xf32>
    tpu.vector_store %arg5[%c12_199, %c0_200, %c0_201], %185 {strides = array<i32>} : memref<20x16x128xf32, #tpu.memory_space<vmem>>, vector<5x16x128xf32>,
    %c15_202 = arith.constant 15 : index
    %c0_203 = arith.constant 0 : index
    %c0_204 = arith.constant 0 : index
    %187 = vector.load %arg4[%c15_202, %c0_203, %c0_204] : memref<16x24x128xf32, #tpu.memory_space<vmem>>, vector<1x24x128xf32>
    %c1_i32_205 = arith.constant 1 : i32
    %188 = tpu.dynamic_rotate %187 by %c1_i32_205 dim 1 : vector<1x24x128xf32>, i32 -> vector<1x24x128xf32>
    %189 = arith.maximumf %187, %188 : vector<1x24x128xf32>
    %c2_i32_206 = arith.constant 2 : i32
    %190 = tpu.dynamic_rotate %187 by %c2_i32_206 dim 1 : vector<1x24x128xf32>, i32 -> vector<1x24x128xf32>
    %191 = arith.maximumf %189, %190 : vector<1x24x128xf32>
    %c23_i32_207 = arith.constant 23 : i32
    %192 = tpu.dynamic_rotate %187 by %c23_i32_207 dim 1 : vector<1x24x128xf32>, i32 -> vector<1x24x128xf32>
    %193 = arith.maximumf %191, %192 : vector<1x24x128xf32>
    %c22_i32_208 = arith.constant 22 : i32
    %194 = tpu.dynamic_rotate %187 by %c22_i32_208 dim 1 : vector<1x24x128xf32>, i32 -> vector<1x24x128xf32>
    %195 = arith.maximumf %193, %194 : vector<1x24x128xf32>
    %196 = vector.extract_strided_slice %195 {offsets = [0, 0, 0], sizes = [1, 16, 128], strides = [1, 1, 1]} : vector<1x24x128xf32> to vector<1x16x128xf32>
    %c17_209 = arith.constant 17 : index
    %c0_210 = arith.constant 0 : index
    %c0_211 = arith.constant 0 : index
    %197 = vector.load %arg5[%c17_209, %c0_210, %c0_211] : memref<20x16x128xf32, #tpu.memory_space<vmem>>, vector<1x16x128xf32>
    tpu.vector_store %arg5[%c17_209, %c0_210, %c0_211], %196 {strides = array<i32>} : memref<20x16x128xf32, #tpu.memory_space<vmem>>, vector<1x16x128xf32>,
    %c0_212 = arith.constant 0 : index
    %c0_213 = arith.constant 0 : index
    %c0_214 = arith.constant 0 : index
    %198 = vector.load %arg5[%c0_212, %c0_213, %c0_214] : memref<20x16x128xf32, #tpu.memory_space<vmem>>, vector<8x16x128xf32>
    %c1_215 = arith.constant 1 : index
    %c0_216 = arith.constant 0 : index
    %c0_217 = arith.constant 0 : index
    %199 = vector.load %arg5[%c1_215, %c0_216, %c0_217] : memref<20x16x128xf32, #tpu.memory_space<vmem>>, vector<8x16x128xf32>
    %200 = arith.maximumf %198, %199 : vector<8x16x128xf32>
    %c2_218 = arith.constant 2 : index
    %c0_219 = arith.constant 0 : index
    %c0_220 = arith.constant 0 : index
    %201 = vector.load %arg5[%c2_218, %c0_219, %c0_220] : memref<20x16x128xf32, #tpu.memory_space<vmem>>, vector<8x16x128xf32>
    %202 = arith.maximumf %200, %201 : vector<8x16x128xf32>
    %c3_221 = arith.constant 3 : index
    %c0_222 = arith.constant 0 : index
    %c0_223 = arith.constant 0 : index
    %203 = vector.load %arg5[%c3_221, %c0_222, %c0_223] : memref<20x16x128xf32, #tpu.memory_space<vmem>>, vector<8x16x128xf32>
    %204 = arith.maximumf %202, %203 : vector<8x16x128xf32>
    %c4_224 = arith.constant 4 : index
    %c0_225 = arith.constant 0 : index
    %c0_226 = arith.constant 0 : index
    %205 = vector.load %arg5[%c4_224, %c0_225, %c0_226] : memref<20x16x128xf32, #tpu.memory_space<vmem>>, vector<8x16x128xf32>
    %206 = arith.maximumf %204, %205 : vector<8x16x128xf32>
    %c0_227 = arith.constant 0 : index
    %c0_228 = arith.constant 0 : index
    %c0_229 = arith.constant 0 : index
    %c384 = arith.constant 384 : index
    %207 = vector.load %arg3[%c0_227, %c0_228, %c0_229, %c384] : memref<1x16x16x512xf32, #tpu.memory_space<vmem>>, vector<1x8x16x128xf32>
    %208 = vector.shape_cast %207 : vector<1x8x16x128xf32> to vector<8x16x128xf32>
    %209 = vector.shape_cast %206 : vector<8x16x128xf32> to vector<1x8x16x128xf32>
    tpu.vector_store %arg3[%c0_227, %c0_228, %c0_229, %c384], %209 {strides = array<i32>} : memref<1x16x16x512xf32, #tpu.memory_space<vmem>>, vector<1x8x16x128xf32>,
    %c8_230 = arith.constant 8 : index
    %c0_231 = arith.constant 0 : index
    %c0_232 = arith.constant 0 : index
    %210 = vector.load %arg5[%c8_230, %c0_231, %c0_232] : memref<20x16x128xf32, #tpu.memory_space<vmem>>, vector<8x16x128xf32>
    %c9_233 = arith.constant 9 : index
    %c0_234 = arith.constant 0 : index
    %c0_235 = arith.constant 0 : index
    %211 = vector.load %arg5[%c9_233, %c0_234, %c0_235] : memref<20x16x128xf32, #tpu.memory_space<vmem>>, vector<8x16x128xf32>
    %212 = arith.maximumf %210, %211 : vector<8x16x128xf32>
    %c10_236 = arith.constant 10 : index
    %c0_237 = arith.constant 0 : index
    %c0_238 = arith.constant 0 : index
    %213 = vector.load %arg5[%c10_236, %c0_237, %c0_238] : memref<20x16x128xf32, #tpu.memory_space<vmem>>, vector<8x16x128xf32>
    %214 = arith.maximumf %212, %213 : vector<8x16x128xf32>
    %c11_239 = arith.constant 11 : index
    %c0_240 = arith.constant 0 : index
    %c0_241 = arith.constant 0 : index
    %215 = vector.load %arg5[%c11_239, %c0_240, %c0_241] : memref<20x16x128xf32, #tpu.memory_space<vmem>>, vector<8x16x128xf32>
    %216 = arith.maximumf %214, %215 : vector<8x16x128xf32>
    %c12_242 = arith.constant 12 : index
    %c0_243 = arith.constant 0 : index
    %c0_244 = arith.constant 0 : index
    %217 = vector.load %arg5[%c12_242, %c0_243, %c0_244] : memref<20x16x128xf32, #tpu.memory_space<vmem>>, vector<8x16x128xf32>
    %218 = arith.maximumf %216, %217 : vector<8x16x128xf32>
    %c0_245 = arith.constant 0 : index
    %c8_246 = arith.constant 8 : index
    %c0_247 = arith.constant 0 : index
    %c384_248 = arith.constant 384 : index
    %219 = vector.load %arg3[%c0_245, %c8_246, %c0_247, %c384_248] : memref<1x16x16x512xf32, #tpu.memory_space<vmem>>, vector<1x8x16x128xf32>
    %220 = vector.shape_cast %219 : vector<1x8x16x128xf32> to vector<8x16x128xf32>
    %221 = vector.shape_cast %218 : vector<8x16x128xf32> to vector<1x8x16x128xf32>
    tpu.vector_store %arg3[%c0_245, %c8_246, %c0_247, %c384_248], %221 {strides = array<i32>} : memref<1x16x16x512xf32, #tpu.memory_space<vmem>>, vector<1x8x16x128xf32>,
    return
  }
  func.func @transform_0(%arg0: i32, %arg1: i32) -> (i32, i32, i32, i32) {
    %c0_i32 = arith.constant 0 : i32
    %c0_i32_0 = arith.constant 0 : i32
    %c0_i32_1 = arith.constant 0 : i32
    return %arg0, %c0_i32, %c0_i32_0, %arg1 : i32, i32, i32, i32
  }
  func.func @transform_1(%arg0: i32, %arg1: i32) -> (i32, i32, i32, i32) {
    %c0_i32 = arith.constant 0 : i32
    %c0_i32_0 = arith.constant 0 : i32
    %c0_i32_1 = arith.constant 0 : i32
    return %arg0, %c0_i32, %c0_i32_0, %arg1 : i32, i32, i32, i32
  }
}

</mosaic_0001>

<llo_original>
// kernel: spp.1
$region0: #{spp.1}
  #allocation0 [shape = 'u32[]', space=smem, size = 0x4, offset = 0x4, fixed_abs, tag = 'smem constant byte address 0x4 - core index']
  #allocation1 [shape = 'u32[144,128]{1,0:T(1,128)}', space=vmem, size = 0x12000, scoped, tag = 'internal scratch']
  #allocation2 [shape = 'f32[16,24,128]{2,1,0:T(8,128)}', space=vmem, size = 0x30000, scoped, tag = 'scratch operand']
  #allocation3 [shape = 'f32[20,16,128]{2,1,0:T(8,128)}', space=vmem, size = 0x28000, scoped, tag = 'scratch operand']
  %s0 = inlined_call_operand.vmem [shape: f32[2,16,16,128], index: 0, kind: input, shape index: {}]
  %s1 = inlined_call_operand.vmem [shape: f32[2,16,16,512], index: 1, kind: output, shape index: {}]
  %s2 = sld [smem:[#allocation0]]
  $region37: #{spp.1} parent=0
    _
  %s4 = ssub.s32 1, %s2
  %s5 = scalar_select 0, %s4, %s2
  loop: start=0, step=1, limit=4
  $region2: #{spp.1} parent=0 // loop_pre_header
    _
  $region3: #{spp.1} parent=0 // loop_header
    %s7 = sphi 0, %s11
    %p8 = scmp.ge.s32.totalorder %s7, 4
    %s14 = sphi 0, %s26
    %s15 = sphi 0, %s22
    %s16 = sphi 0, %s14
    %s17 = sphi 0, %s15
    %s18 = sphi 0, %s16
    %s19 = sphi 0, %s17
    %s31 = sphi 0, %s33
    %s34 = sphi 0, %s31
    %s35 = sphi 0, %s34
    %s51 = sphi 0, %s35
    %s59 = sphi 0, %s61
    %s62 = sphi 0, %s59
    %s63 = sphi 0, %s62
    %s79 = sphi 0, %s63
  $region4: #{spp.1} parent=0 // loop_header_branch
    %10 = sbr.rel (%p8) target = $region8
  $region5: #{spp.1} parent=0 // loop_body
    %s12 = ssub.s32 %s7, 1
    %s13 = ssub.s32 %s7, 2
    %s20 = sadd.s32 1, %s15
    %p21 = scmp.ge.s32.totalorder %s20, 1
    %s22 = scalar_select %p21, 0, %s20
    %s23 = sadd.s32 1, %s14
    %s24 = scalar_select %p21, %s23, %s14
    %p25 = scmp.ge.s32.totalorder %s24, 2
    %s26 = scalar_select %p25, 0, %s24
    %s27 = ssub.s32 %s14, %s26
    %s28 = ssub.s32 %s15, %s22
    %s29 = sor.u32 %s27, %s28
    %p30 = scmp.eq.s32.totalorder %s29, 0
    %s32 = sadd.s32 %s31, 1
    %s33 = scalar_select %p30, %s31, %s32
    %p36 = pneg %p30
    %p37 = scmp.eq.s32.totalorder %s7, 1
    %p38 = por %p36, %p37
    %p39 = scmp.ne.s32.totalorder %s31, %s34
    %p40 = scmp.eq.s32.totalorder %s7, 0
    %p41 = por %p39, %p40
    %p42 = scmp.ne.s32.totalorder %s31, %s34
    %p43 = scmp.eq.s32.totalorder %s12, 1
    %p44 = por %p42, %p43
    %p45 = scmp.ne.s32.totalorder %s34, %s35
    %p46 = scmp.eq.s32.totalorder %s12, 0
    %p47 = por %p45, %p46
    %p48 = scmp.ne.s32.totalorder %s34, %s35
    %p49 = scmp.eq.s32.totalorder %s13, 1
    %p50 = por %p48, %p49
    %p52 = scmp.ne.s32.totalorder %s35, %s51
    %p53 = scmp.eq.s32.totalorder %s13, 0
    %p54 = por %p52, %p53
    %s55 = ssub.s32 %s14, %s26
    %s56 = ssub.s32 %s15, %s22
    %s57 = sor.u32 %s55, %s56
    %p58 = scmp.eq.s32.totalorder %s57, 0
    %s60 = sadd.s32 %s59, 1
    %s61 = scalar_select %p58, %s59, %s60
    %p64 = pneg %p58
    %p65 = scmp.eq.s32.totalorder %s7, 1
    %p66 = por %p64, %p65
    %p67 = scmp.ne.s32.totalorder %s59, %s62
    %p68 = scmp.eq.s32.totalorder %s7, 0
    %p69 = por %p67, %p68
    %p70 = scmp.ne.s32.totalorder %s59, %s62
    %p71 = scmp.eq.s32.totalorder %s12, 1
    %p72 = por %p70, %p71
    %p73 = scmp.ne.s32.totalorder %s62, %s63
    %p74 = scmp.eq.s32.totalorder %s12, 0
    %p75 = por %p73, %p74
    %p76 = scmp.ne.s32.totalorder %s62, %s63
    %p77 = scmp.eq.s32.totalorder %s13, 1
    %p78 = por %p76, %p77
    %p80 = scmp.ne.s32.totalorder %s63, %s79
    %p81 = scmp.eq.s32.totalorder %s13, 0
    %p82 = por %p80, %p81
    %p83 = scmp.le.s32.totalorder 1, %s7
    %p84 = scmp.lt.s32.totalorder %s7, 3
    %p85 = pnand %p83, %p84
    %p86 = pneg %p85
    // Predicated region
    $region9: #{spp.1} parent=5 // pred_check
      _
    $region10: #{spp.1} parent=5 // pred_check_branch
      %88 = sbr.rel (%p85) target = $region12
    $region11: #{spp.1} parent=5 // pred_region
      %s89 = ssub.s32 %s7, 1
    $region12: #{spp.1} parent=5 // pred_fallthru
      _
    %p90 = scmp.lt.s32.totalorder %s7, 2
    // Predicated region
    $region13: #{spp.1} parent=5 // pred_check
      %p91 = pneg %p90
    $region14: #{spp.1} parent=5 // pred_check_branch
      %93 = sbr.rel (%p91) target = $region16
    $region15: #{spp.1} parent=5 // pred_region
      // Predicated region
      $region17: #{spp.1} parent=15 // pred_check
        %p94 = pneg %p41
      $region18: #{spp.1} parent=15 // pred_check_branch
        %96 = sbr.rel (%p94) target = $region20
      $region19: #{spp.1} parent=15 // pred_region
        %p97 = scmp.lt.s32.totalorder %s14, 1
        %s98 = scalar_select %p97, %s14, 1
        %p99 = scmp.lt.s32.totalorder %s15, 0
        %s100 = scalar_select %p99, %s15, 0
        %s101 = smul.addr %s98, 32
        %s102 = sadd.s32 %s100, %s101
        %s103 = smul.addr %s102, 8
        %s104 = scalar_lea.vmem %s0, %s103
      $region20: #{spp.1} parent=15 // pred_fallthru
        _
    $region16: #{spp.1} parent=5 // pred_fallthru
      _
    %p105 = scmp.le.s32.totalorder 1, %s7
    %p106 = scmp.lt.s32.totalorder %s7, 3
    %p107 = pnand %p105, %p106
    %p108 = pneg %p107
    // Predicated region
    $region21: #{spp.1} parent=5 // pred_check
      _
    $region22: #{spp.1} parent=5 // pred_check_branch
      %110 = sbr.rel (%p107) target = $region24
    $region23: #{spp.1} parent=5 // pred_region
      %s111 = ssub.s32 %s7, 1
      %p112 = scmp.lt.s32.totalorder %s16, 1
      %s113 = scalar_select %p112, %s16, 1
      %p114 = scmp.lt.s32.totalorder %s17, 0
      %s115 = scalar_select %p114, %s17, 0
      %s116 = smul.addr %s113, 32
      %s117 = sadd.s32 %s115, %s116
      %s118 = smul.addr %s117, 8
      %s119 = scalar_lea.vmem %s0, %s118
      %p120 = pneg %p47
      %p121 = pneg %p44
      %p122 = pneg %p75
      %p123 = pneg %p72
      %s124 = smul.u32 4, %s17
      %p125 = scmp.lt.s32.totalorder %s16, 1
      %s126 = scalar_select %p125, %s16, 1
      %p127 = scmp.lt.s32.totalorder %s124, 3
      %s128 = scalar_select %p127, %s124, 3
      %s129 = smul.addr %s126, 128
      %s130 = sadd.s32 %s128, %s129
      %s131 = smul.addr %s130, 8
      %s132 = scalar_lea.vmem %s1, %s131
      %p133 = scmp.lt.s32.totalorder %s16, 1
      %s134 = scalar_select %p133, %s16, 1
      %p135 = scmp.lt.s32.totalorder %s17, 0
      %s136 = scalar_select %p135, %s17, 0
      %s137 = smul.addr %s134, 32
      %s138 = sadd.s32 %s136, %s137
      %s139 = smul.addr %s138, 8
      %s140 = scalar_lea.vmem %s0, %s139
      %s141 = smul.u32 4, %s17
      %p142 = scmp.lt.s32.totalorder %s16, 1
      %s143 = scalar_select %p142, %s16, 1
      %p144 = scmp.lt.s32.totalorder %s141, 3
      %s145 = scalar_select %p144, %s141, 3
      %s146 = smul.addr %s143, 128
      %s147 = sadd.s32 %s145, %s146
      %s148 = smul.addr %s147, 8
      %s149 = scalar_lea.vmem %s1, %s148
      %s150 = smul.u32 4, %s17
      %v151 = vld [vmem:[%s140] sm:$0xff]
      %v152 = vld [vmem:[%s140 + $0x8] sm:$0xff]
      %v153 = vld [vmem:[%s140 + $0x10] sm:$0xff]
      %v154 = vld [vmem:[%s140 + $0x18] sm:$0xff]
      %v155 = vld [vmem:[%s140 + $0x20] sm:$0xff]
      %v156 = vld [vmem:[%s140 + $0x28] sm:$0xff]
      %v157 = vld [vmem:[%s140 + $0x30] sm:$0xff]
      %v158 = vld [vmem:[%s140 + $0x38] sm:$0xff]
      %v159 = vld [vmem:[%s140 + $0x40] sm:$0xff]
      %v160 = vld [vmem:[%s140 + $0x48] sm:$0xff]
      %v161 = vld [vmem:[%s140 + $0x50] sm:$0xff]
      %v162 = vld [vmem:[%s140 + $0x58] sm:$0xff]
      %v163 = vld [vmem:[%s140 + $0x60] sm:$0xff]
      %v164 = vld [vmem:[%s140 + $0x68] sm:$0xff]
      %v165 = vld [vmem:[%s140 + $0x70] sm:$0xff]
      %v166 = vld [vmem:[%s140 + $0x78] sm:$0xff]
      %v167 = vld [vmem:[%s140 + $0x80] sm:$0xff]
      %v168 = vld [vmem:[%s140 + $0x88] sm:$0xff]
      %v169 = vld [vmem:[%s140 + $0x90] sm:$0xff]
      %v170 = vld [vmem:[%s140 + $0x98] sm:$0xff]
      %v171 = vld [vmem:[%s140 + $0xa0] sm:$0xff]
      %v172 = vld [vmem:[%s140 + $0xa8] sm:$0xff]
      %v173 = vld [vmem:[%s140 + $0xb0] sm:$0xff]
      %v174 = vld [vmem:[%s140 + $0xb8] sm:$0xff]
      %v175 = vld [vmem:[%s140 + $0xc0] sm:$0xff]
      %v176 = vld [vmem:[%s140 + $0xc8] sm:$0xff]
      %v177 = vld [vmem:[%s140 + $0xd0] sm:$0xff]
      %v178 = vld [vmem:[%s140 + $0xd8] sm:$0xff]
      %v179 = vld [vmem:[%s140 + $0xe0] sm:$0xff]
      %v180 = vld [vmem:[%s140 + $0xe8] sm:$0xff]
      %v181 = vld [vmem:[%s140 + $0xf0] sm:$0xff]
      %v182 = vld [vmem:[%s140 + $0xf8] sm:$0xff]
      %183 = vst [vmem:[%s149] sm:$0xff] %v151
      %184 = vst [vmem:[%s149 + $0x20] sm:$0xff] %v152
      %185 = vst [vmem:[%s149 + $0x40] sm:$0xff] %v153
      %186 = vst [vmem:[%s149 + $0x60] sm:$0xff] %v154
      %187 = vst [vmem:[%s149 + $0x80] sm:$0xff] %v155
      %188 = vst [vmem:[%s149 + $0xa0] sm:$0xff] %v156
      %189 = vst [vmem:[%s149 + $0xc0] sm:$0xff] %v157
      %190 = vst [vmem:[%s149 + $0xe0] sm:$0xff] %v158
      %191 = vst [vmem:[%s149 + $0x100] sm:$0xff] %v159
      %192 = vst [vmem:[%s149 + $0x120] sm:$0xff] %v160
      %193 = vst [vmem:[%s149 + $0x140] sm:$0xff] %v161
      %194 = vst [vmem:[%s149 + $0x160] sm:$0xff] %v162
      %195 = vst [vmem:[%s149 + $0x180] sm:$0xff] %v163
      %196 = vst [vmem:[%s149 + $0x1a0] sm:$0xff] %v164
      %197 = vst [vmem:[%s149 + $0x1c0] sm:$0xff] %v165
      %198 = vst [vmem:[%s149 + $0x1e0] sm:$0xff] %v166
      %199 = vst [vmem:[%s149 + $0x200] sm:$0xff] %v167
      %200 = vst [vmem:[%s149 + $0x220] sm:$0xff] %v168
      %201 = vst [vmem:[%s149 + $0x240] sm:$0xff] %v169
      %202 = vst [vmem:[%s149 + $0x260] sm:$0xff] %v170
      %203 = vst [vmem:[%s149 + $0x280] sm:$0xff] %v171
      %204 = vst [vmem:[%s149 + $0x2a0] sm:$0xff] %v172
      %205 = vst [vmem:[%s149 + $0x2c0] sm:$0xff] %v173
      %206 = vst [vmem:[%s149 + $0x2e0] sm:$0xff] %v174
      %207 = vst [vmem:[%s149 + $0x300] sm:$0xff] %v175
      %208 = vst [vmem:[%s149 + $0x320] sm:$0xff] %v176
      %209 = vst [vmem:[%s149 + $0x340] sm:$0xff] %v177
      %210 = vst [vmem:[%s149 + $0x360] sm:$0xff] %v178
      %211 = vst [vmem:[%s149 + $0x380] sm:$0xff] %v179
      %212 = vst [vmem:[%s149 + $0x3a0] sm:$0xff] %v180
      %213 = vst [vmem:[%s149 + $0x3c0] sm:$0xff] %v181
      %214 = vst [vmem:[%s149 + $0x3e0] sm:$0xff] %v182
      %215 = vst [vmem:[#allocation2 + $0x10] sm:$0xff] -inf
      %216 = vst [vmem:[#allocation2 + $0x28] sm:$0xff] -inf
      %217 = vst [vmem:[#allocation2 + $0x40] sm:$0xff] -inf
      %218 = vst [vmem:[#allocation2 + $0x58] sm:$0xff] -inf
      %219 = vst [vmem:[#allocation2 + $0x70] sm:$0xff] -inf
      %220 = vst [vmem:[#allocation2 + $0x88] sm:$0xff] -inf
      %221 = vst [vmem:[#allocation2 + $0xa0] sm:$0xff] -inf
      %222 = vst [vmem:[#allocation2 + $0xb8] sm:$0xff] -inf
      %223 = vst [vmem:[#allocation2 + $0xd0] sm:$0xff] -inf
      %224 = vst [vmem:[#allocation2 + $0xe8] sm:$0xff] -inf
      %225 = vst [vmem:[#allocation2 + $0x100] sm:$0xff] -inf
      %226 = vst [vmem:[#allocation2 + $0x118] sm:$0xff] -inf
      %227 = vst [vmem:[#allocation2 + $0x130] sm:$0xff] -inf
      %228 = vst [vmem:[#allocation2 + $0x148] sm:$0xff] -inf
      %229 = vst [vmem:[#allocation2 + $0x160] sm:$0xff] -inf
      %230 = vst [vmem:[#allocation2 + $0x178] sm:$0xff] -inf
      %231 = vst [vmem:[#allocation3] sm:$0xff] -inf
      %232 = vst [vmem:[#allocation3 + $0x8] sm:$0xff] -inf
      %233 = vst [vmem:[#allocation3 + $0x10] sm:$0xff] -inf
      %234 = vst [vmem:[#allocation3 + $0x18] sm:$0xff] -inf
      %s235 = scalar_lea.vmem [#allocation3], 288
      %236 = vst [vmem:[%s235] sm:$0xff] -inf
      %237 = vst [vmem:[%s235 + $0x8] sm:$0xff] -inf
      %238 = vst [vmem:[%s235 + $0x10] sm:$0xff] -inf
      %239 = vst [vmem:[%s235 + $0x18] sm:$0xff] -inf
      %v240 = vld [vmem:[%s140] sm:$0xff]
      %v241 = vld [vmem:[%s140 + $0x8] sm:$0xff]
      %v242 = vld [vmem:[%s140 + $0x10] sm:$0xff]
      %v243 = vld [vmem:[%s140 + $0x18] sm:$0xff]
      %v244 = vld [vmem:[%s140 + $0x20] sm:$0xff]
      %v245 = vld [vmem:[%s140 + $0x28] sm:$0xff]
      %v246 = vld [vmem:[%s140 + $0x30] sm:$0xff]
      %v247 = vld [vmem:[%s140 + $0x38] sm:$0xff]
      %v248 = vld [vmem:[%s140 + $0x40] sm:$0xff]
      %v249 = vld [vmem:[%s140 + $0x48] sm:$0xff]
      %v250 = vld [vmem:[%s140 + $0x50] sm:$0xff]
      %v251 = vld [vmem:[%s140 + $0x58] sm:$0xff]
      %v252 = vld [vmem:[%s140 + $0x60] sm:$0xff]
      %v253 = vld [vmem:[%s140 + $0x68] sm:$0xff]
      %v254 = vld [vmem:[%s140 + $0x70] sm:$0xff]
      %v255 = vld [vmem:[%s140 + $0x78] sm:$0xff]
      %v256 = vld [vmem:[%s140 + $0x80] sm:$0xff]
      %v257 = vld [vmem:[%s140 + $0x88] sm:$0xff]
      %v258 = vld [vmem:[%s140 + $0x90] sm:$0xff]
      %v259 = vld [vmem:[%s140 + $0x98] sm:$0xff]
      %v260 = vld [vmem:[%s140 + $0xa0] sm:$0xff]
      %v261 = vld [vmem:[%s140 + $0xa8] sm:$0xff]
      %v262 = vld [vmem:[%s140 + $0xb0] sm:$0xff]
      %v263 = vld [vmem:[%s140 + $0xb8] sm:$0xff]
      %v264 = vld [vmem:[%s140 + $0xc0] sm:$0xff]
      %v265 = vld [vmem:[%s140 + $0xc8] sm:$0xff]
      %v266 = vld [vmem:[%s140 + $0xd0] sm:$0xff]
      %v267 = vld [vmem:[%s140 + $0xd8] sm:$0xff]
      %v268 = vld [vmem:[%s140 + $0xe0] sm:$0xff]
      %v269 = vld [vmem:[%s140 + $0xe8] sm:$0xff]
      %v270 = vld [vmem:[%s140 + $0xf0] sm:$0xff]
      %v271 = vld [vmem:[%s140 + $0xf8] sm:$0xff]
      %272 = vst [vmem:[#allocation2] sm:$0xff] %v240
      %273 = vst [vmem:[#allocation2 + $0x8] sm:$0xff] %v241
      %274 = vst [vmem:[#allocation2 + $0x18] sm:$0xff] %v242
      %275 = vst [vmem:[#allocation2 + $0x20] sm:$0xff] %v243
      %276 = vst [vmem:[#allocation2 + $0x30] sm:$0xff] %v244
      %277 = vst [vmem:[#allocation2 + $0x38] sm:$0xff] %v245
      %278 = vst [vmem:[#allocation2 + $0x48] sm:$0xff] %v246
      %279 = vst [vmem:[#allocation2 + $0x50] sm:$0xff] %v247
      %280 = vst [vmem:[#allocation2 + $0x60] sm:$0xff] %v248
      %281 = vst [vmem:[#allocation2 + $0x68] sm:$0xff] %v249
      %282 = vst [vmem:[#allocation2 + $0x78] sm:$0xff] %v250
      %283 = vst [vmem:[#allocation2 + $0x80] sm:$0xff] %v251
      %284 = vst [vmem:[#allocation2 + $0x90] sm:$0xff] %v252
      %285 = vst [vmem:[#allocation2 + $0x98] sm:$0xff] %v253
      %286 = vst [vmem:[#allocation2 + $0xa8] sm:$0xff] %v254
      %287 = vst [vmem:[#allocation2 + $0xb0] sm:$0xff] %v255
      %288 = vst [vmem:[#allocation2 + $0xc0] sm:$0xff] %v256
      %289 = vst [vmem:[#allocation2 + $0xc8] sm:$0xff] %v257
      %290 = vst [vmem:[#allocation2 + $0xd8] sm:$0xff] %v258
      %291 = vst [vmem:[#allocation2 + $0xe0] sm:$0xff] %v259
      %292 = vst [vmem:[#allocation2 + $0xf0] sm:$0xff] %v260
      %293 = vst [vmem:[#allocation2 + $0xf8] sm:$0xff] %v261
      %294 = vst [vmem:[#allocation2 + $0x108] sm:$0xff] %v262
      %295 = vst [vmem:[#allocation2 + $0x110] sm:$0xff] %v263
      %296 = vst [vmem:[#allocation2 + $0x120] sm:$0xff] %v264
      %297 = vst [vmem:[#allocation2 + $0x128] sm:$0xff] %v265
      %298 = vst [vmem:[#allocation2 + $0x138] sm:$0xff] %v266
      %299 = vst [vmem:[#allocation2 + $0x140] sm:$0xff] %v267
      %300 = vst [vmem:[#allocation2 + $0x150] sm:$0xff] %v268
      %301 = vst [vmem:[#allocation2 + $0x158] sm:$0xff] %v269
      %302 = vst [vmem:[#allocation2 + $0x168] sm:$0xff] %v270
      %303 = vst [vmem:[#allocation2 + $0x170] sm:$0xff] %v271
      %v304 = vld [vmem:[#allocation2] sm:$0xff]
      %v305 = vld [vmem:[#allocation2 + $0x8] sm:$0xff]
      %v306 = vld [vmem:[#allocation2 + $0x10] sm:$0xff]
      %v307 = vld [vmem:[#allocation2 + $0x18] sm:$0xff]
      %v308 = vld [vmem:[#allocation2 + $0x20] sm:$0xff]
      %v309 = vld [vmem:[#allocation2 + $0x28] sm:$0xff]
      %v310 = vld [vmem:[#allocation2 + $0x30] sm:$0xff]
      %v311 = vld [vmem:[#allocation2 + $0x38] sm:$0xff]
      %v312 = vld [vmem:[#allocation2 + $0x40] sm:$0xff]
      %v313 = vld [vmem:[#allocation2 + $0x48] sm:$0xff]
      %v314 = vld [vmem:[#allocation2 + $0x50] sm:$0xff]
      %v315 = vld [vmem:[#allocation2 + $0x58] sm:$0xff]
      %v316 = vld [vmem:[#allocation2 + $0x60] sm:$0xff]
      %v317 = vld [vmem:[#allocation2 + $0x68] sm:$0xff]
      %v318 = vld [vmem:[#allocation2 + $0x70] sm:$0xff]
      %v319 = vrot.slane %v304, 7
      %v320 = vrot.slane %v307, 7
      %v321 = vrot.slane %v310, 7
      %v322 = vrot.slane %v313, 7
      %v323 = vrot.slane %v316, 7
      %v324 = vrot.slane %v305, 7
      %v325 = vrot.slane %v308, 7
      %v326 = vrot.slane %v311, 7
      %v327 = vrot.slane %v314, 7
      %v328 = vrot.slane %v317, 7
      %v329 = vrot.slane %v306, 7
      %v330 = vrot.slane %v309, 7
      %v331 = vrot.slane %v312, 7
      %v332 = vrot.slane %v315, 7
      %v333 = vrot.slane %v318, 7
      %v334 = vlaneseq
      %v335 = vshrl.u32 %v334, 7
      %vm336 = vcmp.lt.s32.totalorder %v335, 1
      %v337 = vsel %vm336, %v319, %v324
      %v338 = vsel %vm336, %v320, %v325
      %v339 = vsel %vm336, %v321, %v326
      %v340 = vsel %vm336, %v322, %v327
      %v341 = vsel %vm336, %v323, %v328
      %v342 = vsel %vm336, %v329, %v319
      %v343 = vsel %vm336, %v330, %v320
      %v344 = vsel %vm336, %v331, %v321
      %v345 = vsel %vm336, %v332, %v322
      %v346 = vsel %vm336, %v333, %v323
      %v347 = vmax.f32 %v304, %v342
      %v348 = vmax.f32 %v305, %v337
      %v349 = vmax.f32 %v307, %v343
      %v350 = vmax.f32 %v308, %v338
      %v351 = vmax.f32 %v310, %v344
      %v352 = vmax.f32 %v311, %v339
      %v353 = vmax.f32 %v313, %v345
      %v354 = vmax.f32 %v314, %v340
      %v355 = vmax.f32 %v316, %v346
      %v356 = vmax.f32 %v317, %v341
      %v357 = vrot.slane %v304, 6
      %v358 = vrot.slane %v307, 6
      %v359 = vrot.slane %v310, 6
      %v360 = vrot.slane %v313, 6
      %v361 = vrot.slane %v316, 6
      %v362 = vrot.slane %v305, 6
      %v363 = vrot.slane %v308, 6
      %v364 = vrot.slane %v311, 6
      %v365 = vrot.slane %v314, 6
      %v366 = vrot.slane %v317, 6
      %v367 = vrot.slane %v306, 6
      %v368 = vrot.slane %v309, 6
      %v369 = vrot.slane %v312, 6
      %v370 = vrot.slane %v315, 6
      %v371 = vrot.slane %v318, 6
      %vm372 = vcmp.lt.s32.totalorder %v335, 2
      %v373 = vsel %vm372, %v357, %v362
      %v374 = vsel %vm372, %v358, %v363
      %v375 = vsel %vm372, %v359, %v364
      %v376 = vsel %vm372, %v360, %v365
      %v377 = vsel %vm372, %v361, %v366
      %v378 = vsel %vm372, %v367, %v357
      %v379 = vsel %vm372, %v368, %v358
      %v380 = vsel %vm372, %v369, %v359
      %v381 = vsel %vm372, %v370, %v360
      %v382 = vsel %vm372, %v371, %v361
      %v383 = vmax.f32 %v347, %v378
      %v384 = vmax.f32 %v348, %v373
      %v385 = vmax.f32 %v349, %v379
      %v386 = vmax.f32 %v350, %v374
      %v387 = vmax.f32 %v351, %v380
      %v388 = vmax.f32 %v352, %v375
      %v389 = vmax.f32 %v353, %v381
      %v390 = vmax.f32 %v354, %v376
      %v391 = vmax.f32 %v355, %v382
      %v392 = vmax.f32 %v356, %v377
      %v393 = vrot.slane %v304, 1
      %v394 = vrot.slane %v307, 1
      %v395 = vrot.slane %v310, 1
      %v396 = vrot.slane %v313, 1
      %v397 = vrot.slane %v316, 1
      %v398 = vrot.slane %v305, 1
      %v399 = vrot.slane %v308, 1
      %v400 = vrot.slane %v311, 1
      %v401 = vrot.slane %v314, 1
      %v402 = vrot.slane %v317, 1
      %v403 = vrot.slane %v306, 1
      %v404 = vrot.slane %v309, 1
      %v405 = vrot.slane %v312, 1
      %v406 = vrot.slane %v315, 1
      %v407 = vrot.slane %v318, 1
      %vm408 = vcmp.lt.s32.totalorder %v335, 7
      %v409 = vsel %vm408, %v398, %v403
      %v410 = vsel %vm408, %v399, %v404
      %v411 = vsel %vm408, %v400, %v405
      %v412 = vsel %vm408, %v401, %v406
      %v413 = vsel %vm408, %v402, %v407
      %v414 = vsel %vm408, %v393, %v398
      %v415 = vsel %vm408, %v394, %v399
      %v416 = vsel %vm408, %v395, %v400
      %v417 = vsel %vm408, %v396, %v401
      %v418 = vsel %vm408, %v397, %v402
      %v419 = vmax.f32 %v383, %v414
      %v420 = vmax.f32 %v384, %v409
      %v421 = vmax.f32 %v385, %v415
      %v422 = vmax.f32 %v386, %v410
      %v423 = vmax.f32 %v387, %v416
      %v424 = vmax.f32 %v388, %v411
      %v425 = vmax.f32 %v389, %v417
      %v426 = vmax.f32 %v390, %v412
      %v427 = vmax.f32 %v391, %v418
      %v428 = vmax.f32 %v392, %v413
      %v429 = vrot.slane %v304, 2
      %v430 = vrot.slane %v307, 2
      %v431 = vrot.slane %v310, 2
      %v432 = vrot.slane %v313, 2
      %v433 = vrot.slane %v316, 2
      %v434 = vrot.slane %v305, 2
      %v435 = vrot.slane %v308, 2
      %v436 = vrot.slane %v311, 2
      %v437 = vrot.slane %v314, 2
      %v438 = vrot.slane %v317, 2
      %v439 = vrot.slane %v306, 2
      %v440 = vrot.slane %v309, 2
      %v441 = vrot.slane %v312, 2
      %v442 = vrot.slane %v315, 2
      %v443 = vrot.slane %v318, 2
      %vm444 = vcmp.lt.s32.totalorder %v335, 6
      %v445 = vsel %vm444, %v434, %v439
      %v446 = vsel %vm444, %v435, %v440
      %v447 = vsel %vm444, %v436, %v441
      %v448 = vsel %vm444, %v437, %v442
      %v449 = vsel %vm444, %v438, %v443
      %v450 = vsel %vm444, %v429, %v434
      %v451 = vsel %vm444, %v430, %v435
      %v452 = vsel %vm444, %v431, %v436
      %v453 = vsel %vm444, %v432, %v437
      %v454 = vsel %vm444, %v433, %v438
      %v455 = vmax.f32 %v419, %v450
      %v456 = vmax.f32 %v420, %v445
      %v457 = vmax.f32 %v421, %v451
      %v458 = vmax.f32 %v422, %v446
      %v459 = vmax.f32 %v423, %v452
      %v460 = vmax.f32 %v424, %v447
      %v461 = vmax.f32 %v425, %v453
      %v462 = vmax.f32 %v426, %v448
      %v463 = vmax.f32 %v427, %v454
      %v464 = vmax.f32 %v428, %v449
      %s465 = scalar_lea.vmem [#allocation3], 32
      %466 = vst [vmem:[%s465] sm:$0xff] %v455
      %467 = vst [vmem:[%s465 + $0x8] sm:$0xff] %v456
      %468 = vst [vmem:[%s465 + $0x10] sm:$0xff] %v457
      %469 = vst [vmem:[%s465 + $0x18] sm:$0xff] %v458
      %470 = vst [vmem:[%s465 + $0x20] sm:$0xff] %v459
      %471 = vst [vmem:[%s465 + $0x28] sm:$0xff] %v460
      %472 = vst [vmem:[%s465 + $0x30] sm:$0xff] %v461
      %473 = vst [vmem:[%s465 + $0x38] sm:$0xff] %v462
      %474 = vst [vmem:[%s465 + $0x40] sm:$0xff] %v463
      %475 = vst [vmem:[%s465 + $0x48] sm:$0xff] %v464
      %s476 = scalar_lea.vmem [#allocation2], 120
      %v477 = vld [vmem:[%s476] sm:$0xff]
      %v478 = vld [vmem:[%s476 + $0x8] sm:$0xff]
      %v479 = vld [vmem:[%s476 + $0x10] sm:$0xff]
      %v480 = vld [vmem:[%s476 + $0x18] sm:$0xff]
      %v481 = vld [vmem:[%s476 + $0x20] sm:$0xff]
      %v482 = vld [vmem:[%s476 + $0x28] sm:$0xff]
      %v483 = vld [vmem:[%s476 + $0x30] sm:$0xff]
      %v484 = vld [vmem:[%s476 + $0x38] sm:$0xff]
      %v485 = vld [vmem:[%s476 + $0x40] sm:$0xff]
      %v486 = vld [vmem:[%s476 + $0x48] sm:$0xff]
      %v487 = vld [vmem:[%s476 + $0x50] sm:$0xff]
      %v488 = vld [vmem:[%s476 + $0x58] sm:$0xff]
      %v489 = vld [vmem:[%s476 + $0x60] sm:$0xff]
      %v490 = vld [vmem:[%s476 + $0x68] sm:$0xff]
      %v491 = vld [vmem:[%s476 + $0x70] sm:$0xff]
      %v492 = vrot.slane %v477, 7
      %v493 = vrot.slane %v480, 7
      %v494 = vrot.slane %v483, 7
      %v495 = vrot.slane %v486, 7
      %v496 = vrot.slane %v489, 7
      %v497 = vrot.slane %v478, 7
      %v498 = vrot.slane %v481, 7
      %v499 = vrot.slane %v484, 7
      %v500 = vrot.slane %v487, 7
      %v501 = vrot.slane %v490, 7
      %v502 = vrot.slane %v479, 7
      %v503 = vrot.slane %v482, 7
      %v504 = vrot.slane %v485, 7
      %v505 = vrot.slane %v488, 7
      %v506 = vrot.slane %v491, 7
      %v507 = vsel %vm336, %v492, %v497
      %v508 = vsel %vm336, %v493, %v498
      %v509 = vsel %vm336, %v494, %v499
      %v510 = vsel %vm336, %v495, %v500
      %v511 = vsel %vm336, %v496, %v501
      %v512 = vsel %vm336, %v502, %v492
      %v513 = vsel %vm336, %v503, %v493
      %v514 = vsel %vm336, %v504, %v494
      %v515 = vsel %vm336, %v505, %v495
      %v516 = vsel %vm336, %v506, %v496
      %v517 = vmax.f32 %v477, %v512
      %v518 = vmax.f32 %v478, %v507
      %v519 = vmax.f32 %v480, %v513
      %v520 = vmax.f32 %v481, %v508
      %v521 = vmax.f32 %v483, %v514
      %v522 = vmax.f32 %v484, %v509
      %v523 = vmax.f32 %v486, %v515
      %v524 = vmax.f32 %v487, %v510
      %v525 = vmax.f32 %v489, %v516
      %v526 = vmax.f32 %v490, %v511
      %v527 = vrot.slane %v477, 6
      %v528 = vrot.slane %v480, 6
      %v529 = vrot.slane %v483, 6
      %v530 = vrot.slane %v486, 6
      %v531 = vrot.slane %v489, 6
      %v532 = vrot.slane %v478, 6
      %v533 = vrot.slane %v481, 6
      %v534 = vrot.slane %v484, 6
      %v535 = vrot.slane %v487, 6
      %v536 = vrot.slane %v490, 6
      %v537 = vrot.slane %v479, 6
      %v538 = vrot.slane %v482, 6
      %v539 = vrot.slane %v485, 6
      %v540 = vrot.slane %v488, 6
      %v541 = vrot.slane %v491, 6
      %v542 = vsel %vm372, %v527, %v532
      %v543 = vsel %vm372, %v528, %v533
      %v544 = vsel %vm372, %v529, %v534
      %v545 = vsel %vm372, %v530, %v535
      %v546 = vsel %vm372, %v531, %v536
      %v547 = vsel %vm372, %v537, %v527
      %v548 = vsel %vm372, %v538, %v528
      %v549 = vsel %vm372, %v539, %v529
      %v550 = vsel %vm372, %v540, %v530
      %v551 = vsel %vm372, %v541, %v531
      %v552 = vmax.f32 %v517, %v547
      %v553 = vmax.f32 %v518, %v542
      %v554 = vmax.f32 %v519, %v548
      %v555 = vmax.f32 %v520, %v543
      %v556 = vmax.f32 %v521, %v549
      %v557 = vmax.f32 %v522, %v544
      %v558 = vmax.f32 %v523, %v550
      %v559 = vmax.f32 %v524, %v545
      %v560 = vmax.f32 %v525, %v551
      %v561 = vmax.f32 %v526, %v546
      %v562 = vrot.slane %v477, 1
      %v563 = vrot.slane %v480, 1
      %v564 = vrot.slane %v483, 1
      %v565 = vrot.slane %v486, 1
      %v566 = vrot.slane %v489, 1
      %v567 = vrot.slane %v478, 1
      %v568 = vrot.slane %v481, 1
      %v569 = vrot.slane %v484, 1
      %v570 = vrot.slane %v487, 1
      %v571 = vrot.slane %v490, 1
      %v572 = vrot.slane %v479, 1
      %v573 = vrot.slane %v482, 1
      %v574 = vrot.slane %v485, 1
      %v575 = vrot.slane %v488, 1
      %v576 = vrot.slane %v491, 1
      %v577 = vsel %vm408, %v567, %v572
      %v578 = vsel %vm408, %v568, %v573
      %v579 = vsel %vm408, %v569, %v574
      %v580 = vsel %vm408, %v570, %v575
      %v581 = vsel %vm408, %v571, %v576
      %v582 = vsel %vm408, %v562, %v567
      %v583 = vsel %vm408, %v563, %v568
      %v584 = vsel %vm408, %v564, %v569
      %v585 = vsel %vm408, %v565, %v570
      %v586 = vsel %vm408, %v566, %v571
      %v587 = vmax.f32 %v552, %v582
      %v588 = vmax.f32 %v553, %v577
      %v589 = vmax.f32 %v554, %v583
      %v590 = vmax.f32 %v555, %v578
      %v591 = vmax.f32 %v556, %v584
      %v592 = vmax.f32 %v557, %v579
      %v593 = vmax.f32 %v558, %v585
      %v594 = vmax.f32 %v559, %v580
      %v595 = vmax.f32 %v560, %v586
      %v596 = vmax.f32 %v561, %v581
      %v597 = vrot.slane %v477, 2
      %v598 = vrot.slane %v480, 2
      %v599 = vrot.slane %v483, 2
      %v600 = vrot.slane %v486, 2
      %v601 = vrot.slane %v489, 2
      %v602 = vrot.slane %v478, 2
      %v603 = vrot.slane %v481, 2
      %v604 = vrot.slane %v484, 2
      %v605 = vrot.slane %v487, 2
      %v606 = vrot.slane %v490, 2
      %v607 = vrot.slane %v479, 2
      %v608 = vrot.slane %v482, 2
      %v609 = vrot.slane %v485, 2
      %v610 = vrot.slane %v488, 2
      %v611 = vrot.slane %v491, 2
      %v612 = vsel %vm444, %v602, %v607
      %v613 = vsel %vm444, %v603, %v608
      %v614 = vsel %vm444, %v604, %v609
      %v615 = vsel %vm444, %v605, %v610
      %v616 = vsel %vm444, %v606, %v611
      %v617 = vsel %vm444, %v597, %v602
      %v618 = vsel %vm444, %v598, %v603
      %v619 = vsel %vm444, %v599, %v604
      %v620 = vsel %vm444, %v600, %v605
      %v621 = vsel %vm444, %v601, %v606
      %v622 = vmax.f32 %v587, %v617
      %v623 = vmax.f32 %v588, %v612
      %v624 = vmax.f32 %v589, %v618
      %v625 = vmax.f32 %v590, %v613
      %v626 = vmax.f32 %v591, %v619
      %v627 = vmax.f32 %v592, %v614
      %v628 = vmax.f32 %v593, %v620
      %v629 = vmax.f32 %v594, %v615
      %v630 = vmax.f32 %v595, %v621
      %v631 = vmax.f32 %v596, %v616
      %s632 = scalar_lea.vmem [#allocation3], 112
      %633 = vst [vmem:[%s632] sm:$0xff] %v622
      %634 = vst [vmem:[%s632 + $0x8] sm:$0xff] %v623
      %635 = vst [vmem:[%s632 + $0x10] sm:$0xff] %v624
      %636 = vst [vmem:[%s632 + $0x18] sm:$0xff] %v625
      %637 = vst [vmem:[%s632 + $0x20] sm:$0xff] %v626
      %638 = vst [vmem:[%s632 + $0x28] sm:$0xff] %v627
      %639 = vst [vmem:[%s632 + $0x30] sm:$0xff] %v628
      %640 = vst [vmem:[%s632 + $0x38] sm:$0xff] %v629
      %641 = vst [vmem:[%s632 + $0x40] sm:$0xff] %v630
      %642 = vst [vmem:[%s632 + $0x48] sm:$0xff] %v631
      %s643 = scalar_lea.vmem [#allocation2], 240
      %v644 = vld [vmem:[%s643] sm:$0xff]
      %v645 = vld [vmem:[%s643 + $0x8] sm:$0xff]
      %v646 = vld [vmem:[%s643 + $0x10] sm:$0xff]
      %v647 = vld [vmem:[%s643 + $0x18] sm:$0xff]
      %v648 = vld [vmem:[%s643 + $0x20] sm:$0xff]
      %v649 = vld [vmem:[%s643 + $0x28] sm:$0xff]
      %v650 = vld [vmem:[%s643 + $0x30] sm:$0xff]
      %v651 = vld [vmem:[%s643 + $0x38] sm:$0xff]
      %v652 = vld [vmem:[%s643 + $0x40] sm:$0xff]
      %v653 = vld [vmem:[%s643 + $0x48] sm:$0xff]
      %v654 = vld [vmem:[%s643 + $0x50] sm:$0xff]
      %v655 = vld [vmem:[%s643 + $0x58] sm:$0xff]
      %v656 = vld [vmem:[%s643 + $0x60] sm:$0xff]
      %v657 = vld [vmem:[%s643 + $0x68] sm:$0xff]
      %v658 = vld [vmem:[%s643 + $0x70] sm:$0xff]
      %v659 = vrot.slane %v644, 7
      %v660 = vrot.slane %v647, 7
      %v661 = vrot.slane %v650, 7
      %v662 = vrot.slane %v653, 7
      %v663 = vrot.slane %v656, 7
      %v664 = vrot.slane %v645, 7
      %v665 = vrot.slane %v648, 7
      %v666 = vrot.slane %v651, 7
      %v667 = vrot.slane %v654, 7
      %v668 = vrot.slane %v657, 7
      %v669 = vrot.slane %v646, 7
      %v670 = vrot.slane %v649, 7
      %v671 = vrot.slane %v652, 7
      %v672 = vrot.slane %v655, 7
      %v673 = vrot.slane %v658, 7
      %v674 = vsel %vm336, %v659, %v664
      %v675 = vsel %vm336, %v660, %v665
      %v676 = vsel %vm336, %v661, %v666
      %v677 = vsel %vm336, %v662, %v667
      %v678 = vsel %vm336, %v663, %v668
      %v679 = vsel %vm336, %v669, %v659
      %v680 = vsel %vm336, %v670, %v660
      %v681 = vsel %vm336, %v671, %v661
      %v682 = vsel %vm336, %v672, %v662
      %v683 = vsel %vm336, %v673, %v663
      %v684 = vmax.f32 %v644, %v679
      %v685 = vmax.f32 %v645, %v674
      %v686 = vmax.f32 %v647, %v680
      %v687 = vmax.f32 %v648, %v675
      %v688 = vmax.f32 %v650, %v681
      %v689 = vmax.f32 %v651, %v676
      %v690 = vmax.f32 %v653, %v682
      %v691 = vmax.f32 %v654, %v677
      %v692 = vmax.f32 %v656, %v683
      %v693 = vmax.f32 %v657, %v678
      %v694 = vrot.slane %v644, 6
      %v695 = vrot.slane %v647, 6
      %v696 = vrot.slane %v650, 6
      %v697 = vrot.slane %v653, 6
      %v698 = vrot.slane %v656, 6
      %v699 = vrot.slane %v645, 6
      %v700 = vrot.slane %v648, 6
      %v701 = vrot.slane %v651, 6
      %v702 = vrot.slane %v654, 6
      %v703 = vrot.slane %v657, 6
      %v704 = vrot.slane %v646, 6
      %v705 = vrot.slane %v649, 6
      %v706 = vrot.slane %v652, 6
      %v707 = vrot.slane %v655, 6
      %v708 = vrot.slane %v658, 6
      %v709 = vsel %vm372, %v694, %v699
      %v710 = vsel %vm372, %v695, %v700
      %v711 = vsel %vm372, %v696, %v701
      %v712 = vsel %vm372, %v697, %v702
      %v713 = vsel %vm372, %v698, %v703
      %v714 = vsel %vm372, %v704, %v694
      %v715 = vsel %vm372, %v705, %v695
      %v716 = vsel %vm372, %v706, %v696
      %v717 = vsel %vm372, %v707, %v697
      %v718 = vsel %vm372, %v708, %v698
      %v719 = vmax.f32 %v684, %v714
      %v720 = vmax.f32 %v685, %v709
      %v721 = vmax.f32 %v686, %v715
      %v722 = vmax.f32 %v687, %v710
      %v723 = vmax.f32 %v688, %v716
      %v724 = vmax.f32 %v689, %v711
      %v725 = vmax.f32 %v690, %v717
      %v726 = vmax.f32 %v691, %v712
      %v727 = vmax.f32 %v692, %v718
      %v728 = vmax.f32 %v693, %v713
      %v729 = vrot.slane %v644, 1
      %v730 = vrot.slane %v647, 1
      %v731 = vrot.slane %v650, 1
      %v732 = vrot.slane %v653, 1
      %v733 = vrot.slane %v656, 1
      %v734 = vrot.slane %v645, 1
      %v735 = vrot.slane %v648, 1
      %v736 = vrot.slane %v651, 1
      %v737 = vrot.slane %v654, 1
      %v738 = vrot.slane %v657, 1
      %v739 = vrot.slane %v646, 1
      %v740 = vrot.slane %v649, 1
      %v741 = vrot.slane %v652, 1
      %v742 = vrot.slane %v655, 1
      %v743 = vrot.slane %v658, 1
      %v744 = vsel %vm408, %v734, %v739
      %v745 = vsel %vm408, %v735, %v740
      %v746 = vsel %vm408, %v736, %v741
      %v747 = vsel %vm408, %v737, %v742
      %v748 = vsel %vm408, %v738, %v743
      %v749 = vsel %vm408, %v729, %v734
      %v750 = vsel %vm408, %v730, %v735
      %v751 = vsel %vm408, %v731, %v736
      %v752 = vsel %vm408, %v732, %v737
      %v753 = vsel %vm408, %v733, %v738
      %v754 = vmax.f32 %v719, %v749
      %v755 = vmax.f32 %v720, %v744
      %v756 = vmax.f32 %v721, %v750
      %v757 = vmax.f32 %v722, %v745
      %v758 = vmax.f32 %v723, %v751
      %v759 = vmax.f32 %v724, %v746
      %v760 = vmax.f32 %v725, %v752
      %v761 = vmax.f32 %v726, %v747
      %v762 = vmax.f32 %v727, %v753
      %v763 = vmax.f32 %v728, %v748
      %v764 = vrot.slane %v644, 2
      %v765 = vrot.slane %v647, 2
      %v766 = vrot.slane %v650, 2
      %v767 = vrot.slane %v653, 2
      %v768 = vrot.slane %v656, 2
      %v769 = vrot.slane %v645, 2
      %v770 = vrot.slane %v648, 2
      %v771 = vrot.slane %v651, 2
      %v772 = vrot.slane %v654, 2
      %v773 = vrot.slane %v657, 2
      %v774 = vrot.slane %v646, 2
      %v775 = vrot.slane %v649, 2
      %v776 = vrot.slane %v652, 2
      %v777 = vrot.slane %v655, 2
      %v778 = vrot.slane %v658, 2
      %v779 = vsel %vm444, %v769, %v774
      %v780 = vsel %vm444, %v770, %v775
      %v781 = vsel %vm444, %v771, %v776
      %v782 = vsel %vm444, %v772, %v777
      %v783 = vsel %vm444, %v773, %v778
      %v784 = vsel %vm444, %v764, %v769
      %v785 = vsel %vm444, %v765, %v770
      %v786 = vsel %vm444, %v766, %v771
      %v787 = vsel %vm444, %v767, %v772
      %v788 = vsel %vm444, %v768, %v773
      %v789 = vmax.f32 %v754, %v784
      %v790 = vmax.f32 %v755, %v779
      %v791 = vmax.f32 %v756, %v785
      %v792 = vmax.f32 %v757, %v780
      %v793 = vmax.f32 %v758, %v786
      %v794 = vmax.f32 %v759, %v781
      %v795 = vmax.f32 %v760, %v787
      %v796 = vmax.f32 %v761, %v782
      %v797 = vmax.f32 %v762, %v788
      %v798 = vmax.f32 %v763, %v783
      %s799 = scalar_lea.vmem [#allocation3], 192
      %800 = vst [vmem:[%s799] sm:$0xff] %v789
      %801 = vst [vmem:[%s799 + $0x8] sm:$0xff] %v790
      %802 = vst [vmem:[%s799 + $0x10] sm:$0xff] %v791
      %803 = vst [vmem:[%s799 + $0x18] sm:$0xff] %v792
      %804 = vst [vmem:[%s799 + $0x20] sm:$0xff] %v793
      %805 = vst [vmem:[%s799 + $0x28] sm:$0xff] %v794
      %806 = vst [vmem:[%s799 + $0x30] sm:$0xff] %v795
      %807 = vst [vmem:[%s799 + $0x38] sm:$0xff] %v796
      %808 = vst [vmem:[%s799 + $0x40] sm:$0xff] %v797
      %809 = vst [vmem:[%s799 + $0x48] sm:$0xff] %v798
      %s810 = scalar_lea.vmem [#allocation2], 360
      %v811 = vld [vmem:[%s810] sm:$0xff]
      %v812 = vld [vmem:[%s810 + $0x8] sm:$0xff]
      %v813 = vld [vmem:[%s810 + $0x10] sm:$0xff]
      %v814 = vrot.slane %v811, 7
      %v815 = vrot.slane %v812, 7
      %v816 = vrot.slane %v813, 7
      %v817 = vsel %vm336, %v814, %v815
      %v818 = vsel %vm336, %v816, %v814
      %v819 = vmax.f32 %v811, %v818
      %v820 = vmax.f32 %v812, %v817
      %v821 = vrot.slane %v811, 6
      %v822 = vrot.slane %v812, 6
      %v823 = vrot.slane %v813, 6
      %v824 = vsel %vm372, %v821, %v822
      %v825 = vsel %vm372, %v823, %v821
      %v826 = vmax.f32 %v819, %v825
      %v827 = vmax.f32 %v820, %v824
      %v828 = vrot.slane %v811, 1
      %v829 = vrot.slane %v812, 1
      %v830 = vrot.slane %v813, 1
      %v831 = vsel %vm408, %v829, %v830
      %v832 = vsel %vm408, %v828, %v829
      %v833 = vmax.f32 %v826, %v832
      %v834 = vmax.f32 %v827, %v831
      %v835 = vrot.slane %v811, 2
      %v836 = vrot.slane %v812, 2
      %v837 = vrot.slane %v813, 2
      %v838 = vsel %vm444, %v836, %v837
      %v839 = vsel %vm444, %v835, %v836
      %v840 = vmax.f32 %v833, %v839
      %v841 = vmax.f32 %v834, %v838
      %s842 = scalar_lea.vmem [#allocation3], 272
      %843 = vst [vmem:[%s842] sm:$0xff] %v840
      %844 = vst [vmem:[%s842 + $0x8] sm:$0xff] %v841
      %v845 = vld [vmem:[#allocation3] sm:$0xff]
      %v846 = vld [vmem:[#allocation3 + $0x8] sm:$0xff]
      %v847 = vld [vmem:[#allocation3 + $0x10] sm:$0xff]
      %v848 = vld [vmem:[#allocation3 + $0x18] sm:$0xff]
      %v849 = vld [vmem:[#allocation3 + $0x20] sm:$0xff]
      %v850 = vld [vmem:[#allocation3 + $0x28] sm:$0xff]
      %v851 = vld [vmem:[#allocation3 + $0x30] sm:$0xff]
      %v852 = vld [vmem:[#allocation3 + $0x38] sm:$0xff]
      %v853 = vld [vmem:[#allocation3 + $0x40] sm:$0xff]
      %v854 = vld [vmem:[#allocation3 + $0x48] sm:$0xff]
      %v855 = vld [vmem:[#allocation3 + $0x50] sm:$0xff]
      %v856 = vld [vmem:[#allocation3 + $0x58] sm:$0xff]
      %v857 = vld [vmem:[#allocation3 + $0x60] sm:$0xff]
      %v858 = vld [vmem:[#allocation3 + $0x68] sm:$0xff]
      %v859 = vld [vmem:[#allocation3 + $0x70] sm:$0xff]
      %v860 = vld [vmem:[#allocation3 + $0x78] sm:$0xff]
      %s861 = scalar_lea.vmem [#allocation3], 16
      %v862 = vld [vmem:[%s861] sm:$0xff]
      %v863 = vld [vmem:[%s861 + $0x8] sm:$0xff]
      %v864 = vld [vmem:[%s861 + $0x10] sm:$0xff]
      %v865 = vld [vmem:[%s861 + $0x18] sm:$0xff]
      %v866 = vld [vmem:[%s861 + $0x20] sm:$0xff]
      %v867 = vld [vmem:[%s861 + $0x28] sm:$0xff]
      %v868 = vld [vmem:[%s861 + $0x30] sm:$0xff]
      %v869 = vld [vmem:[%s861 + $0x38] sm:$0xff]
      %v870 = vld [vmem:[%s861 + $0x40] sm:$0xff]
      %v871 = vld [vmem:[%s861 + $0x48] sm:$0xff]
      %v872 = vld [vmem:[%s861 + $0x50] sm:$0xff]
      %v873 = vld [vmem:[%s861 + $0x58] sm:$0xff]
      %v874 = vld [vmem:[%s861 + $0x60] sm:$0xff]
      %v875 = vld [vmem:[%s861 + $0x68] sm:$0xff]
      %v876 = vld [vmem:[%s861 + $0x70] sm:$0xff]
      %v877 = vld [vmem:[%s861 + $0x78] sm:$0xff]
      %v878 = vmax.f32 %v845, %v862
      %v879 = vmax.f32 %v846, %v863
      %v880 = vmax.f32 %v847, %v864
      %v881 = vmax.f32 %v848, %v865
      %v882 = vmax.f32 %v849, %v866
      %v883 = vmax.f32 %v850, %v867
      %v884 = vmax.f32 %v851, %v868
      %v885 = vmax.f32 %v852, %v869
      %v886 = vmax.f32 %v853, %v870
      %v887 = vmax.f32 %v854, %v871
      %v888 = vmax.f32 %v855, %v872
      %v889 = vmax.f32 %v856, %v873
      %v890 = vmax.f32 %v857, %v874
      %v891 = vmax.f32 %v858, %v875
      %v892 = vmax.f32 %v859, %v876
      %v893 = vmax.f32 %v860, %v877
      %v894 = vld [vmem:[%s465] sm:$0xff]
      %v895 = vld [vmem:[%s465 + $0x8] sm:$0xff]
      %v896 = vld [vmem:[%s465 + $0x10] sm:$0xff]
      %v897 = vld [vmem:[%s465 + $0x18] sm:$0xff]
      %v898 = vld [vmem:[%s465 + $0x20] sm:$0xff]
      %v899 = vld [vmem:[%s465 + $0x28] sm:$0xff]
      %v900 = vld [vmem:[%s465 + $0x30] sm:$0xff]
      %v901 = vld [vmem:[%s465 + $0x38] sm:$0xff]
      %v902 = vld [vmem:[%s465 + $0x40] sm:$0xff]
      %v903 = vld [vmem:[%s465 + $0x48] sm:$0xff]
      %v904 = vld [vmem:[%s465 + $0x50] sm:$0xff]
      %v905 = vld [vmem:[%s465 + $0x58] sm:$0xff]
      %v906 = vld [vmem:[%s465 + $0x60] sm:$0xff]
      %v907 = vld [vmem:[%s465 + $0x68] sm:$0xff]
      %v908 = vld [vmem:[%s465 + $0x70] sm:$0xff]
      %v909 = vld [vmem:[%s465 + $0x78] sm:$0xff]
      %v910 = vmax.f32 %v878, %v894
      %v911 = vmax.f32 %v879, %v895
      %v912 = vmax.f32 %v880, %v896
      %v913 = vmax.f32 %v881, %v897
      %v914 = vmax.f32 %v882, %v898
      %v915 = vmax.f32 %v883, %v899
      %v916 = vmax.f32 %v884, %v900
      %v917 = vmax.f32 %v885, %v901
      %v918 = vmax.f32 %v886, %v902
      %v919 = vmax.f32 %v887, %v903
      %v920 = vmax.f32 %v888, %v904
      %v921 = vmax.f32 %v889, %v905
      %v922 = vmax.f32 %v890, %v906
      %v923 = vmax.f32 %v891, %v907
      %v924 = vmax.f32 %v892, %v908
      %v925 = vmax.f32 %v893, %v909
      %s926 = scalar_lea.vmem [#allocation3], 48
      %v927 = vld [vmem:[%s926] sm:$0xff]
      %v928 = vld [vmem:[%s926 + $0x8] sm:$0xff]
      %v929 = vld [vmem:[%s926 + $0x10] sm:$0xff]
      %v930 = vld [vmem:[%s926 + $0x18] sm:$0xff]
      %v931 = vld [vmem:[%s926 + $0x20] sm:$0xff]
      %v932 = vld [vmem:[%s926 + $0x28] sm:$0xff]
      %v933 = vld [vmem:[%s926 + $0x30] sm:$0xff]
      %v934 = vld [vmem:[%s926 + $0x38] sm:$0xff]
      %v935 = vld [vmem:[%s926 + $0x40] sm:$0xff]
      %v936 = vld [vmem:[%s926 + $0x48] sm:$0xff]
      %v937 = vld [vmem:[%s926 + $0x50] sm:$0xff]
      %v938 = vld [vmem:[%s926 + $0x58] sm:$0xff]
      %v939 = vld [vmem:[%s926 + $0x60] sm:$0xff]
      %v940 = vld [vmem:[%s926 + $0x68] sm:$0xff]
      %v941 = vld [vmem:[%s926 + $0x70] sm:$0xff]
      %v942 = vld [vmem:[%s926 + $0x78] sm:$0xff]
      %v943 = vmax.f32 %v910, %v927
      %v944 = vmax.f32 %v911, %v928
      %v945 = vmax.f32 %v912, %v929
      %v946 = vmax.f32 %v913, %v930
      %v947 = vmax.f32 %v914, %v931
      %v948 = vmax.f32 %v915, %v932
      %v949 = vmax.f32 %v916, %v933
      %v950 = vmax.f32 %v917, %v934
      %v951 = vmax.f32 %v918, %v935
      %v952 = vmax.f32 %v919, %v936
      %v953 = vmax.f32 %v920, %v937
      %v954 = vmax.f32 %v921, %v938
      %v955 = vmax.f32 %v922, %v939
      %v956 = vmax.f32 %v923, %v940
      %v957 = vmax.f32 %v924, %v941
      %v958 = vmax.f32 %v925, %v942
      %s959 = scalar_lea.vmem [#allocation3], 64
      %v960 = vld [vmem:[%s959] sm:$0xff]
      %v961 = vld [vmem:[%s959 + $0x8] sm:$0xff]
      %v962 = vld [vmem:[%s959 + $0x10] sm:$0xff]
      %v963 = vld [vmem:[%s959 + $0x18] sm:$0xff]
      %v964 = vld [vmem:[%s959 + $0x20] sm:$0xff]
      %v965 = vld [vmem:[%s959 + $0x28] sm:$0xff]
      %v966 = vld [vmem:[%s959 + $0x30] sm:$0xff]
      %v967 = vld [vmem:[%s959 + $0x38] sm:$0xff]
      %v968 = vld [vmem:[%s959 + $0x40] sm:$0xff]
      %v969 = vld [vmem:[%s959 + $0x48] sm:$0xff]
      %v970 = vld [vmem:[%s959 + $0x50] sm:$0xff]
      %v971 = vld [vmem:[%s959 + $0x58] sm:$0xff]
      %v972 = vld [vmem:[%s959 + $0x60] sm:$0xff]
      %v973 = vld [vmem:[%s959 + $0x68] sm:$0xff]
      %v974 = vld [vmem:[%s959 + $0x70] sm:$0xff]
      %v975 = vld [vmem:[%s959 + $0x78] sm:$0xff]
      %v976 = vmax.f32 %v943, %v960
      %v977 = vmax.f32 %v944, %v961
      %v978 = vmax.f32 %v945, %v962
      %v979 = vmax.f32 %v946, %v963
      %v980 = vmax.f32 %v947, %v964
      %v981 = vmax.f32 %v948, %v965
      %v982 = vmax.f32 %v949, %v966
      %v983 = vmax.f32 %v950, %v967
      %v984 = vmax.f32 %v951, %v968
      %v985 = vmax.f32 %v952, %v969
      %v986 = vmax.f32 %v953, %v970
      %v987 = vmax.f32 %v954, %v971
      %v988 = vmax.f32 %v955, %v972
      %v989 = vmax.f32 %v956, %v973
      %v990 = vmax.f32 %v957, %v974
      %v991 = vmax.f32 %v958, %v975
      %992 = vst [vmem:[%s149 + $0x8] sm:$0xff] %v976
      %993 = vst [vmem:[%s149 + $0x28] sm:$0xff] %v977
      %994 = vst [vmem:[%s149 + $0x48] sm:$0xff] %v978
      %995 = vst [vmem:[%s149 + $0x68] sm:$0xff] %v979
      %996 = vst [vmem:[%s149 + $0x88] sm:$0xff] %v980
      %997 = vst [vmem:[%s149 + $0xa8] sm:$0xff] %v981
      %998 = vst [vmem:[%s149 + $0xc8] sm:$0xff] %v982
      %999 = vst [vmem:[%s149 + $0xe8] sm:$0xff] %v983
      %1000 = vst [vmem:[%s149 + $0x108] sm:$0xff] %v984
      %1001 = vst [vmem:[%s149 + $0x128] sm:$0xff] %v985
      %1002 = vst [vmem:[%s149 + $0x148] sm:$0xff] %v986
      %1003 = vst [vmem:[%s149 + $0x168] sm:$0xff] %v987
      %1004 = vst [vmem:[%s149 + $0x188] sm:$0xff] %v988
      %1005 = vst [vmem:[%s149 + $0x1a8] sm:$0xff] %v989
      %1006 = vst [vmem:[%s149 + $0x1c8] sm:$0xff] %v990
      %1007 = vst [vmem:[%s149 + $0x1e8] sm:$0xff] %v991
      %1008 = vst [vmem:[#allocation2] sm:$0xff] %v976
      %1009 = vst [vmem:[#allocation2 + $0x8] sm:$0xff] %v977
      %1010 = vst [vmem:[#allocation2 + $0x18] sm:$0xff] %v978
      %1011 = vst [vmem:[#allocation2 + $0x20] sm:$0xff] %v979
      %1012 = vst [vmem:[#allocation2 + $0x30] sm:$0xff] %v980
      %1013 = vst [vmem:[#allocation2 + $0x38] sm:$0xff] %v981
      %1014 = vst [vmem:[#allocation2 + $0x48] sm:$0xff] %v982
      %1015 = vst [vmem:[#allocation2 + $0x50] sm:$0xff] %v983
      %1016 = vst [vmem:[#allocation2 + $0x60] sm:$0xff] %v984
      %1017 = vst [vmem:[#allocation2 + $0x68] sm:$0xff] %v985
      %1018 = vst [vmem:[#allocation2 + $0x78] sm:$0xff] %v986
      %1019 = vst [vmem:[#allocation2 + $0x80] sm:$0xff] %v987
      %1020 = vst [vmem:[#allocation2 + $0x90] sm:$0xff] %v988
      %1021 = vst [vmem:[#allocation2 + $0x98] sm:$0xff] %v989
      %1022 = vst [vmem:[#allocation2 + $0xa8] sm:$0xff] %v990
      %1023 = vst [vmem:[#allocation2 + $0xb0] sm:$0xff] %v991
      %s1024 = scalar_lea.vmem [#allocation3], 128
      %v1025 = vld [vmem:[%s1024] sm:$0xff]
      %v1026 = vld [vmem:[%s1024 + $0x8] sm:$0xff]
      %v1027 = vld [vmem:[%s1024 + $0x10] sm:$0xff]
      %v1028 = vld [vmem:[%s1024 + $0x18] sm:$0xff]
      %v1029 = vld [vmem:[%s1024 + $0x20] sm:$0xff]
      %v1030 = vld [vmem:[%s1024 + $0x28] sm:$0xff]
      %v1031 = vld [vmem:[%s1024 + $0x30] sm:$0xff]
      %v1032 = vld [vmem:[%s1024 + $0x38] sm:$0xff]
      %v1033 = vld [vmem:[%s1024 + $0x40] sm:$0xff]
      %v1034 = vld [vmem:[%s1024 + $0x48] sm:$0xff]
      %v1035 = vld [vmem:[%s1024 + $0x50] sm:$0xff]
      %v1036 = vld [vmem:[%s1024 + $0x58] sm:$0xff]
      %v1037 = vld [vmem:[%s1024 + $0x60] sm:$0xff]
      %v1038 = vld [vmem:[%s1024 + $0x68] sm:$0xff]
      %v1039 = vld [vmem:[%s1024 + $0x70] sm:$0xff]
      %v1040 = vld [vmem:[%s1024 + $0x78] sm:$0xff]
      %s1041 = scalar_lea.vmem [#allocation3], 144
      %v1042 = vld [vmem:[%s1041] sm:$0xff]
      %v1043 = vld [vmem:[%s1041 + $0x8] sm:$0xff]
      %v1044 = vld [vmem:[%s1041 + $0x10] sm:$0xff]
      %v1045 = vld [vmem:[%s1041 + $0x18] sm:$0xff]
      %v1046 = vld [vmem:[%s1041 + $0x20] sm:$0xff]
      %v1047 = vld [vmem:[%s1041 + $0x28] sm:$0xff]
      %v1048 = vld [vmem:[%s1041 + $0x30] sm:$0xff]
      %v1049 = vld [vmem:[%s1041 + $0x38] sm:$0xff]
      %v1050 = vld [vmem:[%s1041 + $0x40] sm:$0xff]
      %v1051 = vld [vmem:[%s1041 + $0x48] sm:$0xff]
      %v1052 = vld [vmem:[%s1041 + $0x50] sm:$0xff]
      %v1053 = vld [vmem:[%s1041 + $0x58] sm:$0xff]
      %v1054 = vld [vmem:[%s1041 + $0x60] sm:$0xff]
      %v1055 = vld [vmem:[%s1041 + $0x68] sm:$0xff]
      %v1056 = vld [vmem:[%s1041 + $0x70] sm:$0xff]
      %v1057 = vld [vmem:[%s1041 + $0x78] sm:$0xff]
      %v1058 = vmax.f32 %v1025, %v1042
      %v1059 = vmax.f32 %v1026, %v1043
      %v1060 = vmax.f32 %v1027, %v1044
      %v1061 = vmax.f32 %v1028, %v1045
      %v1062 = vmax.f32 %v1029, %v1046
      %v1063 = vmax.f32 %v1030, %v1047
      %v1064 = vmax.f32 %v1031, %v1048
      %v1065 = vmax.f32 %v1032, %v1049
      %v1066 = vmax.f32 %v1033, %v1050
      %v1067 = vmax.f32 %v1034, %v1051
      %v1068 = vmax.f32 %v1035, %v1052
      %v1069 = vmax.f32 %v1036, %v1053
      %v1070 = vmax.f32 %v1037, %v1054
      %v1071 = vmax.f32 %v1038, %v1055
      %v1072 = vmax.f32 %v1039, %v1056
      %v1073 = vmax.f32 %v1040, %v1057
      %s1074 = scalar_lea.vmem [#allocation3], 160
      %v1075 = vld [vmem:[%s1074] sm:$0xff]
      %v1076 = vld [vmem:[%s1074 + $0x8] sm:$0xff]
      %v1077 = vld [vmem:[%s1074 + $0x10] sm:$0xff]
      %v1078 = vld [vmem:[%s1074 + $0x18] sm:$0xff]
      %v1079 = vld [vmem:[%s1074 + $0x20] sm:$0xff]
      %v1080 = vld [vmem:[%s1074 + $0x28] sm:$0xff]
      %v1081 = vld [vmem:[%s1074 + $0x30] sm:$0xff]
      %v1082 = vld [vmem:[%s1074 + $0x38] sm:$0xff]
      %v1083 = vld [vmem:[%s1074 + $0x40] sm:$0xff]
      %v1084 = vld [vmem:[%s1074 + $0x48] sm:$0xff]
      %v1085 = vld [vmem:[%s1074 + $0x50] sm:$0xff]
      %v1086 = vld [vmem:[%s1074 + $0x58] sm:$0xff]
      %v1087 = vld [vmem:[%s1074 + $0x60] sm:$0xff]
      %v1088 = vld [vmem:[%s1074 + $0x68] sm:$0xff]
      %v1089 = vld [vmem:[%s1074 + $0x70] sm:$0xff]
      %v1090 = vld [vmem:[%s1074 + $0x78] sm:$0xff]
      %v1091 = vmax.f32 %v1058, %v1075
      %v1092 = vmax.f32 %v1059, %v1076
      %v1093 = vmax.f32 %v1060, %v1077
      %v1094 = vmax.f32 %v1061, %v1078
      %v1095 = vmax.f32 %v1062, %v1079
      %v1096 = vmax.f32 %v1063, %v1080
      %v1097 = vmax.f32 %v1064, %v1081
      %v1098 = vmax.f32 %v1065, %v1082
      %v1099 = vmax.f32 %v1066, %v1083
      %v1100 = vmax.f32 %v1067, %v1084
      %v1101 = vmax.f32 %v1068, %v1085
      %v1102 = vmax.f32 %v1069, %v1086
      %v1103 = vmax.f32 %v1070, %v1087
      %v1104 = vmax.f32 %v1071, %v1088
      %v1105 = vmax.f32 %v1072, %v1089
      %v1106 = vmax.f32 %v1073, %v1090
      %s1107 = scalar_lea.vmem [#allocation3], 176
      %v1108 = vld [vmem:[%s1107] sm:$0xff]
      %v1109 = vld [vmem:[%s1107 + $0x8] sm:$0xff]
      %v1110 = vld [vmem:[%s1107 + $0x10] sm:$0xff]
      %v1111 = vld [vmem:[%s1107 + $0x18] sm:$0xff]
      %v1112 = vld [vmem:[%s1107 + $0x20] sm:$0xff]
      %v1113 = vld [vmem:[%s1107 + $0x28] sm:$0xff]
      %v1114 = vld [vmem:[%s1107 + $0x30] sm:$0xff]
      %v1115 = vld [vmem:[%s1107 + $0x38] sm:$0xff]
      %v1116 = vld [vmem:[%s1107 + $0x40] sm:$0xff]
      %v1117 = vld [vmem:[%s1107 + $0x48] sm:$0xff]
      %v1118 = vld [vmem:[%s1107 + $0x50] sm:$0xff]
      %v1119 = vld [vmem:[%s1107 + $0x58] sm:$0xff]
      %v1120 = vld [vmem:[%s1107 + $0x60] sm:$0xff]
      %v1121 = vld [vmem:[%s1107 + $0x68] sm:$0xff]
      %v1122 = vld [vmem:[%s1107 + $0x70] sm:$0xff]
      %v1123 = vld [vmem:[%s1107 + $0x78] sm:$0xff]
      %v1124 = vmax.f32 %v1091, %v1108
      %v1125 = vmax.f32 %v1092, %v1109
      %v1126 = vmax.f32 %v1093, %v1110
      %v1127 = vmax.f32 %v1094, %v1111
      %v1128 = vmax.f32 %v1095, %v1112
      %v1129 = vmax.f32 %v1096, %v1113
      %v1130 = vmax.f32 %v1097, %v1114
      %v1131 = vmax.f32 %v1098, %v1115
      %v1132 = vmax.f32 %v1099, %v1116
      %v1133 = vmax.f32 %v1100, %v1117
      %v1134 = vmax.f32 %v1101, %v1118
      %v1135 = vmax.f32 %v1102, %v1119
      %v1136 = vmax.f32 %v1103, %v1120
      %v1137 = vmax.f32 %v1104, %v1121
      %v1138 = vmax.f32 %v1105, %v1122
      %v1139 = vmax.f32 %v1106, %v1123
      %v1140 = vld [vmem:[%s799] sm:$0xff]
      %v1141 = vld [vmem:[%s799 + $0x8] sm:$0xff]
      %v1142 = vld [vmem:[%s799 + $0x10] sm:$0xff]
      %v1143 = vld [vmem:[%s799 + $0x18] sm:$0xff]
      %v1144 = vld [vmem:[%s799 + $0x20] sm:$0xff]
      %v1145 = vld [vmem:[%s799 + $0x28] sm:$0xff]
      %v1146 = vld [vmem:[%s799 + $0x30] sm:$0xff]
      %v1147 = vld [vmem:[%s799 + $0x38] sm:$0xff]
      %v1148 = vld [vmem:[%s799 + $0x40] sm:$0xff]
      %v1149 = vld [vmem:[%s799 + $0x48] sm:$0xff]
      %v1150 = vld [vmem:[%s799 + $0x50] sm:$0xff]
      %v1151 = vld [vmem:[%s799 + $0x58] sm:$0xff]
      %v1152 = vld [vmem:[%s799 + $0x60] sm:$0xff]
      %v1153 = vld [vmem:[%s799 + $0x68] sm:$0xff]
      %v1154 = vld [vmem:[%s799 + $0x70] sm:$0xff]
      %v1155 = vld [vmem:[%s799 + $0x78] sm:$0xff]
      %v1156 = vmax.f32 %v1124, %v1140
      %v1157 = vmax.f32 %v1125, %v1141
      %v1158 = vmax.f32 %v1126, %v1142
      %v1159 = vmax.f32 %v1127, %v1143
      %v1160 = vmax.f32 %v1128, %v1144
      %v1161 = vmax.f32 %v1129, %v1145
      %v1162 = vmax.f32 %v1130, %v1146
      %v1163 = vmax.f32 %v1131, %v1147
      %v1164 = vmax.f32 %v1132, %v1148
      %v1165 = vmax.f32 %v1133, %v1149
      %v1166 = vmax.f32 %v1134, %v1150
      %v1167 = vmax.f32 %v1135, %v1151
      %v1168 = vmax.f32 %v1136, %v1152
      %v1169 = vmax.f32 %v1137, %v1153
      %v1170 = vmax.f32 %v1138, %v1154
      %v1171 = vmax.f32 %v1139, %v1155
      %s1172 = scalar_lea.vmem %s149, 512
      %1173 = vst [vmem:[%s1172 + $0x8] sm:$0xff] %v1156
      %1174 = vst [vmem:[%s1172 + $0x28] sm:$0xff] %v1157
      %1175 = vst [vmem:[%s1172 + $0x48] sm:$0xff] %v1158
      %1176 = vst [vmem:[%s1172 + $0x68] sm:$0xff] %v1159
      %1177 = vst [vmem:[%s1172 + $0x88] sm:$0xff] %v1160
      %1178 = vst [vmem:[%s1172 + $0xa8] sm:$0xff] %v1161
      %1179 = vst [vmem:[%s1172 + $0xc8] sm:$0xff] %v1162
      %1180 = vst [vmem:[%s1172 + $0xe8] sm:$0xff] %v1163
      %1181 = vst [vmem:[%s1172 + $0x108] sm:$0xff] %v1164
      %1182 = vst [vmem:[%s1172 + $0x128] sm:$0xff] %v1165
      %1183 = vst [vmem:[%s1172 + $0x148] sm:$0xff] %v1166
      %1184 = vst [vmem:[%s1172 + $0x168] sm:$0xff] %v1167
      %1185 = vst [vmem:[%s1172 + $0x188] sm:$0xff] %v1168
      %1186 = vst [vmem:[%s1172 + $0x1a8] sm:$0xff] %v1169
      %1187 = vst [vmem:[%s1172 + $0x1c8] sm:$0xff] %v1170
      %1188 = vst [vmem:[%s1172 + $0x1e8] sm:$0xff] %v1171
      %s1189 = scalar_lea.vmem [#allocation2], 192
      %1190 = vst [vmem:[%s1189] sm:$0xff] %v1156
      %1191 = vst [vmem:[%s1189 + $0x8] sm:$0xff] %v1157
      %1192 = vst [vmem:[%s1189 + $0x18] sm:$0xff] %v1158
      %1193 = vst [vmem:[%s1189 + $0x20] sm:$0xff] %v1159
      %1194 = vst [vmem:[%s1189 + $0x30] sm:$0xff] %v1160
      %1195 = vst [vmem:[%s1189 + $0x38] sm:$0xff] %v1161
      %1196 = vst [vmem:[%s1189 + $0x48] sm:$0xff] %v1162
      %1197 = vst [vmem:[%s1189 + $0x50] sm:$0xff] %v1163
      %1198 = vst [vmem:[%s1189 + $0x60] sm:$0xff] %v1164
      %1199 = vst [vmem:[%s1189 + $0x68] sm:$0xff] %v1165
      %1200 = vst [vmem:[%s1189 + $0x78] sm:$0xff] %v1166
      %1201 = vst [vmem:[%s1189 + $0x80] sm:$0xff] %v1167
      %1202 = vst [vmem:[%s1189 + $0x90] sm:$0xff] %v1168
      %1203 = vst [vmem:[%s1189 + $0x98] sm:$0xff] %v1169
      %1204 = vst [vmem:[%s1189 + $0xa8] sm:$0xff] %v1170
      %1205 = vst [vmem:[%s1189 + $0xb0] sm:$0xff] %v1171
      %v1206 = vld [vmem:[#allocation2] sm:$0xff]
      %v1207 = vld [vmem:[#allocation2 + $0x8] sm:$0xff]
      %v1208 = vld [vmem:[#allocation2 + $0x10] sm:$0xff]
      %v1209 = vld [vmem:[#allocation2 + $0x18] sm:$0xff]
      %v1210 = vld [vmem:[#allocation2 + $0x20] sm:$0xff]
      %v1211 = vld [vmem:[#allocation2 + $0x28] sm:$0xff]
      %v1212 = vld [vmem:[#allocation2 + $0x30] sm:$0xff]
      %v1213 = vld [vmem:[#allocation2 + $0x38] sm:$0xff]
      %v1214 = vld [vmem:[#allocation2 + $0x40] sm:$0xff]
      %v1215 = vld [vmem:[#allocation2 + $0x48] sm:$0xff]
      %v1216 = vld [vmem:[#allocation2 + $0x50] sm:$0xff]
      %v1217 = vld [vmem:[#allocation2 + $0x58] sm:$0xff]
      %v1218 = vld [vmem:[#allocation2 + $0x60] sm:$0xff]
      %v1219 = vld [vmem:[#allocation2 + $0x68] sm:$0xff]
      %v1220 = vld [vmem:[#allocation2 + $0x70] sm:$0xff]
      %v1221 = vrot.slane %v1206, 7
      %v1222 = vrot.slane %v1209, 7
      %v1223 = vrot.slane %v1212, 7
      %v1224 = vrot.slane %v1215, 7
      %v1225 = vrot.slane %v1218, 7
      %v1226 = vrot.slane %v1207, 7
      %v1227 = vrot.slane %v1210, 7
      %v1228 = vrot.slane %v1213, 7
      %v1229 = vrot.slane %v1216, 7
      %v1230 = vrot.slane %v1219, 7
      %v1231 = vrot.slane %v1208, 7
      %v1232 = vrot.slane %v1211, 7
      %v1233 = vrot.slane %v1214, 7
      %v1234 = vrot.slane %v1217, 7
      %v1235 = vrot.slane %v1220, 7
      %v1236 = vsel %vm336, %v1221, %v1226
      %v1237 = vsel %vm336, %v1222, %v1227
      %v1238 = vsel %vm336, %v1223, %v1228
      %v1239 = vsel %vm336, %v1224, %v1229
      %v1240 = vsel %vm336, %v1225, %v1230
      %v1241 = vsel %vm336, %v1231, %v1221
      %v1242 = vsel %vm336, %v1232, %v1222
      %v1243 = vsel %vm336, %v1233, %v1223
      %v1244 = vsel %vm336, %v1234, %v1224
      %v1245 = vsel %vm336, %v1235, %v1225
      %v1246 = vmax.f32 %v1206, %v1241
      %v1247 = vmax.f32 %v1207, %v1236
      %v1248 = vmax.f32 %v1209, %v1242
      %v1249 = vmax.f32 %v1210, %v1237
      %v1250 = vmax.f32 %v1212, %v1243
      %v1251 = vmax.f32 %v1213, %v1238
      %v1252 = vmax.f32 %v1215, %v1244
      %v1253 = vmax.f32 %v1216, %v1239
      %v1254 = vmax.f32 %v1218, %v1245
      %v1255 = vmax.f32 %v1219, %v1240
      %v1256 = vrot.slane %v1206, 6
      %v1257 = vrot.slane %v1209, 6
      %v1258 = vrot.slane %v1212, 6
      %v1259 = vrot.slane %v1215, 6
      %v1260 = vrot.slane %v1218, 6
      %v1261 = vrot.slane %v1207, 6
      %v1262 = vrot.slane %v1210, 6
      %v1263 = vrot.slane %v1213, 6
      %v1264 = vrot.slane %v1216, 6
      %v1265 = vrot.slane %v1219, 6
      %v1266 = vrot.slane %v1208, 6
      %v1267 = vrot.slane %v1211, 6
      %v1268 = vrot.slane %v1214, 6
      %v1269 = vrot.slane %v1217, 6
      %v1270 = vrot.slane %v1220, 6
      %v1271 = vsel %vm372, %v1256, %v1261
      %v1272 = vsel %vm372, %v1257, %v1262
      %v1273 = vsel %vm372, %v1258, %v1263
      %v1274 = vsel %vm372, %v1259, %v1264
      %v1275 = vsel %vm372, %v1260, %v1265
      %v1276 = vsel %vm372, %v1266, %v1256
      %v1277 = vsel %vm372, %v1267, %v1257
      %v1278 = vsel %vm372, %v1268, %v1258
      %v1279 = vsel %vm372, %v1269, %v1259
      %v1280 = vsel %vm372, %v1270, %v1260
      %v1281 = vmax.f32 %v1246, %v1276
      %v1282 = vmax.f32 %v1247, %v1271
      %v1283 = vmax.f32 %v1248, %v1277
      %v1284 = vmax.f32 %v1249, %v1272
      %v1285 = vmax.f32 %v1250, %v1278
      %v1286 = vmax.f32 %v1251, %v1273
      %v1287 = vmax.f32 %v1252, %v1279
      %v1288 = vmax.f32 %v1253, %v1274
      %v1289 = vmax.f32 %v1254, %v1280
      %v1290 = vmax.f32 %v1255, %v1275
      %v1291 = vrot.slane %v1206, 1
      %v1292 = vrot.slane %v1209, 1
      %v1293 = vrot.slane %v1212, 1
      %v1294 = vrot.slane %v1215, 1
      %v1295 = vrot.slane %v1218, 1
      %v1296 = vrot.slane %v1207, 1
      %v1297 = vrot.slane %v1210, 1
      %v1298 = vrot.slane %v1213, 1
      %v1299 = vrot.slane %v1216, 1
      %v1300 = vrot.slane %v1219, 1
      %v1301 = vrot.slane %v1208, 1
      %v1302 = vrot.slane %v1211, 1
      %v1303 = vrot.slane %v1214, 1
      %v1304 = vrot.slane %v1217, 1
      %v1305 = vrot.slane %v1220, 1
      %v1306 = vsel %vm408, %v1296, %v1301
      %v1307 = vsel %vm408, %v1297, %v1302
      %v1308 = vsel %vm408, %v1298, %v1303
      %v1309 = vsel %vm408, %v1299, %v1304
      %v1310 = vsel %vm408, %v1300, %v1305
      %v1311 = vsel %vm408, %v1291, %v1296
      %v1312 = vsel %vm408, %v1292, %v1297
      %v1313 = vsel %vm408, %v1293, %v1298
      %v1314 = vsel %vm408, %v1294, %v1299
      %v1315 = vsel %vm408, %v1295, %v1300
      %v1316 = vmax.f32 %v1281, %v1311
      %v1317 = vmax.f32 %v1282, %v1306
      %v1318 = vmax.f32 %v1283, %v1312
      %v1319 = vmax.f32 %v1284, %v1307
      %v1320 = vmax.f32 %v1285, %v1313
      %v1321 = vmax.f32 %v1286, %v1308
      %v1322 = vmax.f32 %v1287, %v1314
      %v1323 = vmax.f32 %v1288, %v1309
      %v1324 = vmax.f32 %v1289, %v1315
      %v1325 = vmax.f32 %v1290, %v1310
      %v1326 = vrot.slane %v1206, 2
      %v1327 = vrot.slane %v1209, 2
      %v1328 = vrot.slane %v1212, 2
      %v1329 = vrot.slane %v1215, 2
      %v1330 = vrot.slane %v1218, 2
      %v1331 = vrot.slane %v1207, 2
      %v1332 = vrot.slane %v1210, 2
      %v1333 = vrot.slane %v1213, 2
      %v1334 = vrot.slane %v1216, 2
      %v1335 = vrot.slane %v1219, 2
      %v1336 = vrot.slane %v1208, 2
      %v1337 = vrot.slane %v1211, 2
      %v1338 = vrot.slane %v1214, 2
      %v1339 = vrot.slane %v1217, 2
      %v1340 = vrot.slane %v1220, 2
      %v1341 = vsel %vm444, %v1331, %v1336
      %v1342 = vsel %vm444, %v1332, %v1337
      %v1343 = vsel %vm444, %v1333, %v1338
      %v1344 = vsel %vm444, %v1334, %v1339
      %v1345 = vsel %vm444, %v1335, %v1340
      %v1346 = vsel %vm444, %v1326, %v1331
      %v1347 = vsel %vm444, %v1327, %v1332
      %v1348 = vsel %vm444, %v1328, %v1333
      %v1349 = vsel %vm444, %v1329, %v1334
      %v1350 = vsel %vm444, %v1330, %v1335
      %v1351 = vmax.f32 %v1316, %v1346
      %v1352 = vmax.f32 %v1317, %v1341
      %v1353 = vmax.f32 %v1318, %v1347
      %v1354 = vmax.f32 %v1319, %v1342
      %v1355 = vmax.f32 %v1320, %v1348
      %v1356 = vmax.f32 %v1321, %v1343
      %v1357 = vmax.f32 %v1322, %v1349
      %v1358 = vmax.f32 %v1323, %v1344
      %v1359 = vmax.f32 %v1324, %v1350
      %v1360 = vmax.f32 %v1325, %v1345
      %1361 = vst [vmem:[%s465] sm:$0xff] %v1351
      %1362 = vst [vmem:[%s465 + $0x8] sm:$0xff] %v1352
      %1363 = vst [vmem:[%s465 + $0x10] sm:$0xff] %v1353
      %1364 = vst [vmem:[%s465 + $0x18] sm:$0xff] %v1354
      %1365 = vst [vmem:[%s465 + $0x20] sm:$0xff] %v1355
      %1366 = vst [vmem:[%s465 + $0x28] sm:$0xff] %v1356
      %1367 = vst [vmem:[%s465 + $0x30] sm:$0xff] %v1357
      %1368 = vst [vmem:[%s465 + $0x38] sm:$0xff] %v1358
      %1369 = vst [vmem:[%s465 + $0x40] sm:$0xff] %v1359
      %1370 = vst [vmem:[%s465 + $0x48] sm:$0xff] %v1360
      %v1371 = vld [vmem:[%s476] sm:$0xff]
      %v1372 = vld [vmem:[%s476 + $0x8] sm:$0xff]
      %v1373 = vld [vmem:[%s476 + $0x10] sm:$0xff]
      %v1374 = vld [vmem:[%s476 + $0x18] sm:$0xff]
      %v1375 = vld [vmem:[%s476 + $0x20] sm:$0xff]
      %v1376 = vld [vmem:[%s476 + $0x28] sm:$0xff]
      %v1377 = vld [vmem:[%s476 + $0x30] sm:$0xff]
      %v1378 = vld [vmem:[%s476 + $0x38] sm:$0xff]
      %v1379 = vld [vmem:[%s476 + $0x40] sm:$0xff]
      %v1380 = vld [vmem:[%s476 + $0x48] sm:$0xff]
      %v1381 = vld [vmem:[%s476 + $0x50] sm:$0xff]
      %v1382 = vld [vmem:[%s476 + $0x58] sm:$0xff]
      %v1383 = vld [vmem:[%s476 + $0x60] sm:$0xff]
      %v1384 = vld [vmem:[%s476 + $0x68] sm:$0xff]
      %v1385 = vld [vmem:[%s476 + $0x70] sm:$0xff]
      %v1386 = vrot.slane %v1371, 7
      %v1387 = vrot.slane %v1374, 7
      %v1388 = vrot.slane %v1377, 7
      %v1389 = vrot.slane %v1380, 7
      %v1390 = vrot.slane %v1383, 7
      %v1391 = vrot.slane %v1372, 7
      %v1392 = vrot.slane %v1375, 7
      %v1393 = vrot.slane %v1378, 7
      %v1394 = vrot.slane %v1381, 7
      %v1395 = vrot.slane %v1384, 7
      %v1396 = vrot.slane %v1373, 7
      %v1397 = vrot.slane %v1376, 7
      %v1398 = vrot.slane %v1379, 7
      %v1399 = vrot.slane %v1382, 7
      %v1400 = vrot.slane %v1385, 7
      %v1401 = vsel %vm336, %v1386, %v1391
      %v1402 = vsel %vm336, %v1387, %v1392
      %v1403 = vsel %vm336, %v1388, %v1393
      %v1404 = vsel %vm336, %v1389, %v1394
      %v1405 = vsel %vm336, %v1390, %v1395
      %v1406 = vsel %vm336, %v1396, %v1386
      %v1407 = vsel %vm336, %v1397, %v1387
      %v1408 = vsel %vm336, %v1398, %v1388
      %v1409 = vsel %vm336, %v1399, %v1389
      %v1410 = vsel %vm336, %v1400, %v1390
      %v1411 = vmax.f32 %v1371, %v1406
      %v1412 = vmax.f32 %v1372, %v1401
      %v1413 = vmax.f32 %v1374, %v1407
      %v1414 = vmax.f32 %v1375, %v1402
      %v1415 = vmax.f32 %v1377, %v1408
      %v1416 = vmax.f32 %v1378, %v1403
      %v1417 = vmax.f32 %v1380, %v1409
      %v1418 = vmax.f32 %v1381, %v1404
      %v1419 = vmax.f32 %v1383, %v1410
      %v1420 = vmax.f32 %v1384, %v1405
      %v1421 = vrot.slane %v1371, 6
      %v1422 = vrot.slane %v1374, 6
      %v1423 = vrot.slane %v1377, 6
      %v1424 = vrot.slane %v1380, 6
      %v1425 = vrot.slane %v1383, 6
      %v1426 = vrot.slane %v1372, 6
      %v1427 = vrot.slane %v1375, 6
      %v1428 = vrot.slane %v1378, 6
      %v1429 = vrot.slane %v1381, 6
      %v1430 = vrot.slane %v1384, 6
      %v1431 = vrot.slane %v1373, 6
      %v1432 = vrot.slane %v1376, 6
      %v1433 = vrot.slane %v1379, 6
      %v1434 = vrot.slane %v1382, 6
      %v1435 = vrot.slane %v1385, 6
      %v1436 = vsel %vm372, %v1421, %v1426
      %v1437 = vsel %vm372, %v1422, %v1427
      %v1438 = vsel %vm372, %v1423, %v1428
      %v1439 = vsel %vm372, %v1424, %v1429
      %v1440 = vsel %vm372, %v1425, %v1430
      %v1441 = vsel %vm372, %v1431, %v1421
      %v1442 = vsel %vm372, %v1432, %v1422
      %v1443 = vsel %vm372, %v1433, %v1423
      %v1444 = vsel %vm372, %v1434, %v1424
      %v1445 = vsel %vm372, %v1435, %v1425
      %v1446 = vmax.f32 %v1411, %v1441
      %v1447 = vmax.f32 %v1412, %v1436
      %v1448 = vmax.f32 %v1413, %v1442
      %v1449 = vmax.f32 %v1414, %v1437
      %v1450 = vmax.f32 %v1415, %v1443
      %v1451 = vmax.f32 %v1416, %v1438
      %v1452 = vmax.f32 %v1417, %v1444
      %v1453 = vmax.f32 %v1418, %v1439
      %v1454 = vmax.f32 %v1419, %v1445
      %v1455 = vmax.f32 %v1420, %v1440
      %v1456 = vrot.slane %v1371, 1
      %v1457 = vrot.slane %v1374, 1
      %v1458 = vrot.slane %v1377, 1
      %v1459 = vrot.slane %v1380, 1
      %v1460 = vrot.slane %v1383, 1
      %v1461 = vrot.slane %v1372, 1
      %v1462 = vrot.slane %v1375, 1
      %v1463 = vrot.slane %v1378, 1
      %v1464 = vrot.slane %v1381, 1
      %v1465 = vrot.slane %v1384, 1
      %v1466 = vrot.slane %v1373, 1
      %v1467 = vrot.slane %v1376, 1
      %v1468 = vrot.slane %v1379, 1
      %v1469 = vrot.slane %v1382, 1
      %v1470 = vrot.slane %v1385, 1
      %v1471 = vsel %vm408, %v1461, %v1466
      %v1472 = vsel %vm408, %v1462, %v1467
      %v1473 = vsel %vm408, %v1463, %v1468
      %v1474 = vsel %vm408, %v1464, %v1469
      %v1475 = vsel %vm408, %v1465, %v1470
      %v1476 = vsel %vm408, %v1456, %v1461
      %v1477 = vsel %vm408, %v1457, %v1462
      %v1478 = vsel %vm408, %v1458, %v1463
      %v1479 = vsel %vm408, %v1459, %v1464
      %v1480 = vsel %vm408, %v1460, %v1465
      %v1481 = vmax.f32 %v1446, %v1476
      %v1482 = vmax.f32 %v1447, %v1471
      %v1483 = vmax.f32 %v1448, %v1477
      %v1484 = vmax.f32 %v1449, %v1472
      %v1485 = vmax.f32 %v1450, %v1478
      %v1486 = vmax.f32 %v1451, %v1473
      %v1487 = vmax.f32 %v1452, %v1479
      %v1488 = vmax.f32 %v1453, %v1474
      %v1489 = vmax.f32 %v1454, %v1480
      %v1490 = vmax.f32 %v1455, %v1475
      %v1491 = vrot.slane %v1371, 2
      %v1492 = vrot.slane %v1374, 2
      %v1493 = vrot.slane %v1377, 2
      %v1494 = vrot.slane %v1380, 2
      %v1495 = vrot.slane %v1383, 2
      %v1496 = vrot.slane %v1372, 2
      %v1497 = vrot.slane %v1375, 2
      %v1498 = vrot.slane %v1378, 2
      %v1499 = vrot.slane %v1381, 2
      %v1500 = vrot.slane %v1384, 2
      %v1501 = vrot.slane %v1373, 2
      %v1502 = vrot.slane %v1376, 2
      %v1503 = vrot.slane %v1379, 2
      %v1504 = vrot.slane %v1382, 2
      %v1505 = vrot.slane %v1385, 2
      %v1506 = vsel %vm444, %v1496, %v1501
      %v1507 = vsel %vm444, %v1497, %v1502
      %v1508 = vsel %vm444, %v1498, %v1503
      %v1509 = vsel %vm444, %v1499, %v1504
      %v1510 = vsel %vm444, %v1500, %v1505
      %v1511 = vsel %vm444, %v1491, %v1496
      %v1512 = vsel %vm444, %v1492, %v1497
      %v1513 = vsel %vm444, %v1493, %v1498
      %v1514 = vsel %vm444, %v1494, %v1499
      %v1515 = vsel %vm444, %v1495, %v1500
      %v1516 = vmax.f32 %v1481, %v1511
      %v1517 = vmax.f32 %v1482, %v1506
      %v1518 = vmax.f32 %v1483, %v1512
      %v1519 = vmax.f32 %v1484, %v1507
      %v1520 = vmax.f32 %v1485, %v1513
      %v1521 = vmax.f32 %v1486, %v1508
      %v1522 = vmax.f32 %v1487, %v1514
      %v1523 = vmax.f32 %v1488, %v1509
      %v1524 = vmax.f32 %v1489, %v1515
      %v1525 = vmax.f32 %v1490, %v1510
      %1526 = vst [vmem:[%s632] sm:$0xff] %v1516
      %1527 = vst [vmem:[%s632 + $0x8] sm:$0xff] %v1517
      %1528 = vst [vmem:[%s632 + $0x10] sm:$0xff] %v1518
      %1529 = vst [vmem:[%s632 + $0x18] sm:$0xff] %v1519
      %1530 = vst [vmem:[%s632 + $0x20] sm:$0xff] %v1520
      %1531 = vst [vmem:[%s632 + $0x28] sm:$0xff] %v1521
      %1532 = vst [vmem:[%s632 + $0x30] sm:$0xff] %v1522
      %1533 = vst [vmem:[%s632 + $0x38] sm:$0xff] %v1523
      %1534 = vst [vmem:[%s632 + $0x40] sm:$0xff] %v1524
      %1535 = vst [vmem:[%s632 + $0x48] sm:$0xff] %v1525
      %v1536 = vld [vmem:[%s643] sm:$0xff]
      %v1537 = vld [vmem:[%s643 + $0x8] sm:$0xff]
      %v1538 = vld [vmem:[%s643 + $0x10] sm:$0xff]
      %v1539 = vld [vmem:[%s643 + $0x18] sm:$0xff]
      %v1540 = vld [vmem:[%s643 + $0x20] sm:$0xff]
      %v1541 = vld [vmem:[%s643 + $0x28] sm:$0xff]
      %v1542 = vld [vmem:[%s643 + $0x30] sm:$0xff]
      %v1543 = vld [vmem:[%s643 + $0x38] sm:$0xff]
      %v1544 = vld [vmem:[%s643 + $0x40] sm:$0xff]
      %v1545 = vld [vmem:[%s643 + $0x48] sm:$0xff]
      %v1546 = vld [vmem:[%s643 + $0x50] sm:$0xff]
      %v1547 = vld [vmem:[%s643 + $0x58] sm:$0xff]
      %v1548 = vld [vmem:[%s643 + $0x60] sm:$0xff]
      %v1549 = vld [vmem:[%s643 + $0x68] sm:$0xff]
      %v1550 = vld [vmem:[%s643 + $0x70] sm:$0xff]
      %v1551 = vrot.slane %v1536, 7
      %v1552 = vrot.slane %v1539, 7
      %v1553 = vrot.slane %v1542, 7
      %v1554 = vrot.slane %v1545, 7
      %v1555 = vrot.slane %v1548, 7
      %v1556 = vrot.slane %v1537, 7
      %v1557 = vrot.slane %v1540, 7
      %v1558 = vrot.slane %v1543, 7
      %v1559 = vrot.slane %v1546, 7
      %v1560 = vrot.slane %v1549, 7
      %v1561 = vrot.slane %v1538, 7
      %v1562 = vrot.slane %v1541, 7
      %v1563 = vrot.slane %v1544, 7
      %v1564 = vrot.slane %v1547, 7
      %v1565 = vrot.slane %v1550, 7
      %v1566 = vsel %vm336, %v1551, %v1556
      %v1567 = vsel %vm336, %v1552, %v1557
      %v1568 = vsel %vm336, %v1553, %v1558
      %v1569 = vsel %vm336, %v1554, %v1559
      %v1570 = vsel %vm336, %v1555, %v1560
      %v1571 = vsel %vm336, %v1561, %v1551
      %v1572 = vsel %vm336, %v1562, %v1552
      %v1573 = vsel %vm336, %v1563, %v1553
      %v1574 = vsel %vm336, %v1564, %v1554
      %v1575 = vsel %vm336, %v1565, %v1555
      %v1576 = vmax.f32 %v1536, %v1571
      %v1577 = vmax.f32 %v1537, %v1566
      %v1578 = vmax.f32 %v1539, %v1572
      %v1579 = vmax.f32 %v1540, %v1567
      %v1580 = vmax.f32 %v1542, %v1573
      %v1581 = vmax.f32 %v1543, %v1568
      %v1582 = vmax.f32 %v1545, %v1574
      %v1583 = vmax.f32 %v1546, %v1569
      %v1584 = vmax.f32 %v1548, %v1575
      %v1585 = vmax.f32 %v1549, %v1570
      %v1586 = vrot.slane %v1536, 6
      %v1587 = vrot.slane %v1539, 6
      %v1588 = vrot.slane %v1542, 6
      %v1589 = vrot.slane %v1545, 6
      %v1590 = vrot.slane %v1548, 6
      %v1591 = vrot.slane %v1537, 6
      %v1592 = vrot.slane %v1540, 6
      %v1593 = vrot.slane %v1543, 6
      %v1594 = vrot.slane %v1546, 6
      %v1595 = vrot.slane %v1549, 6
      %v1596 = vrot.slane %v1538, 6
      %v1597 = vrot.slane %v1541, 6
      %v1598 = vrot.slane %v1544, 6
      %v1599 = vrot.slane %v1547, 6
      %v1600 = vrot.slane %v1550, 6
      %v1601 = vsel %vm372, %v1586, %v1591
      %v1602 = vsel %vm372, %v1587, %v1592
      %v1603 = vsel %vm372, %v1588, %v1593
      %v1604 = vsel %vm372, %v1589, %v1594
      %v1605 = vsel %vm372, %v1590, %v1595
      %v1606 = vsel %vm372, %v1596, %v1586
      %v1607 = vsel %vm372, %v1597, %v1587
      %v1608 = vsel %vm372, %v1598, %v1588
      %v1609 = vsel %vm372, %v1599, %v1589
      %v1610 = vsel %vm372, %v1600, %v1590
      %v1611 = vmax.f32 %v1576, %v1606
      %v1612 = vmax.f32 %v1577, %v1601
      %v1613 = vmax.f32 %v1578, %v1607
      %v1614 = vmax.f32 %v1579, %v1602
      %v1615 = vmax.f32 %v1580, %v1608
      %v1616 = vmax.f32 %v1581, %v1603
      %v1617 = vmax.f32 %v1582, %v1609
      %v1618 = vmax.f32 %v1583, %v1604
      %v1619 = vmax.f32 %v1584, %v1610
      %v1620 = vmax.f32 %v1585, %v1605
      %v1621 = vrot.slane %v1536, 1
      %v1622 = vrot.slane %v1539, 1
      %v1623 = vrot.slane %v1542, 1
      %v1624 = vrot.slane %v1545, 1
      %v1625 = vrot.slane %v1548, 1
      %v1626 = vrot.slane %v1537, 1
      %v1627 = vrot.slane %v1540, 1
      %v1628 = vrot.slane %v1543, 1
      %v1629 = vrot.slane %v1546, 1
      %v1630 = vrot.slane %v1549, 1
      %v1631 = vrot.slane %v1538, 1
      %v1632 = vrot.slane %v1541, 1
      %v1633 = vrot.slane %v1544, 1
      %v1634 = vrot.slane %v1547, 1
      %v1635 = vrot.slane %v1550, 1
      %v1636 = vsel %vm408, %v1626, %v1631
      %v1637 = vsel %vm408, %v1627, %v1632
      %v1638 = vsel %vm408, %v1628, %v1633
      %v1639 = vsel %vm408, %v1629, %v1634
      %v1640 = vsel %vm408, %v1630, %v1635
      %v1641 = vsel %vm408, %v1621, %v1626
      %v1642 = vsel %vm408, %v1622, %v1627
      %v1643 = vsel %vm408, %v1623, %v1628
      %v1644 = vsel %vm408, %v1624, %v1629
      %v1645 = vsel %vm408, %v1625, %v1630
      %v1646 = vmax.f32 %v1611, %v1641
      %v1647 = vmax.f32 %v1612, %v1636
      %v1648 = vmax.f32 %v1613, %v1642
      %v1649 = vmax.f32 %v1614, %v1637
      %v1650 = vmax.f32 %v1615, %v1643
      %v1651 = vmax.f32 %v1616, %v1638
      %v1652 = vmax.f32 %v1617, %v1644
      %v1653 = vmax.f32 %v1618, %v1639
      %v1654 = vmax.f32 %v1619, %v1645
      %v1655 = vmax.f32 %v1620, %v1640
      %v1656 = vrot.slane %v1536, 2
      %v1657 = vrot.slane %v1539, 2
      %v1658 = vrot.slane %v1542, 2
      %v1659 = vrot.slane %v1545, 2
      %v1660 = vrot.slane %v1548, 2
      %v1661 = vrot.slane %v1537, 2
      %v1662 = vrot.slane %v1540, 2
      %v1663 = vrot.slane %v1543, 2
      %v1664 = vrot.slane %v1546, 2
      %v1665 = vrot.slane %v1549, 2
      %v1666 = vrot.slane %v1538, 2
      %v1667 = vrot.slane %v1541, 2
      %v1668 = vrot.slane %v1544, 2
      %v1669 = vrot.slane %v1547, 2
      %v1670 = vrot.slane %v1550, 2
      %v1671 = vsel %vm444, %v1661, %v1666
      %v1672 = vsel %vm444, %v1662, %v1667
      %v1673 = vsel %vm444, %v1663, %v1668
      %v1674 = vsel %vm444, %v1664, %v1669
      %v1675 = vsel %vm444, %v1665, %v1670
      %v1676 = vsel %vm444, %v1656, %v1661
      %v1677 = vsel %vm444, %v1657, %v1662
      %v1678 = vsel %vm444, %v1658, %v1663
      %v1679 = vsel %vm444, %v1659, %v1664
      %v1680 = vsel %vm444, %v1660, %v1665
      %v1681 = vmax.f32 %v1646, %v1676
      %v1682 = vmax.f32 %v1647, %v1671
      %v1683 = vmax.f32 %v1648, %v1677
      %v1684 = vmax.f32 %v1649, %v1672
      %v1685 = vmax.f32 %v1650, %v1678
      %v1686 = vmax.f32 %v1651, %v1673
      %v1687 = vmax.f32 %v1652, %v1679
      %v1688 = vmax.f32 %v1653, %v1674
      %v1689 = vmax.f32 %v1654, %v1680
      %v1690 = vmax.f32 %v1655, %v1675
      %1691 = vst [vmem:[%s799] sm:$0xff] %v1681
      %1692 = vst [vmem:[%s799 + $0x8] sm:$0xff] %v1682
      %1693 = vst [vmem:[%s799 + $0x10] sm:$0xff] %v1683
      %1694 = vst [vmem:[%s799 + $0x18] sm:$0xff] %v1684
      %1695 = vst [vmem:[%s799 + $0x20] sm:$0xff] %v1685
      %1696 = vst [vmem:[%s799 + $0x28] sm:$0xff] %v1686
      %1697 = vst [vmem:[%s799 + $0x30] sm:$0xff] %v1687
      %1698 = vst [vmem:[%s799 + $0x38] sm:$0xff] %v1688
      %1699 = vst [vmem:[%s799 + $0x40] sm:$0xff] %v1689
      %1700 = vst [vmem:[%s799 + $0x48] sm:$0xff] %v1690
      %v1701 = vld [vmem:[%s810] sm:$0xff]
      %v1702 = vld [vmem:[%s810 + $0x8] sm:$0xff]
      %v1703 = vld [vmem:[%s810 + $0x10] sm:$0xff]
      %v1704 = vrot.slane %v1701, 7
      %v1705 = vrot.slane %v1702, 7
      %v1706 = vrot.slane %v1703, 7
      %v1707 = vsel %vm336, %v1704, %v1705
      %v1708 = vsel %vm336, %v1706, %v1704
      %v1709 = vmax.f32 %v1701, %v1708
      %v1710 = vmax.f32 %v1702, %v1707
      %v1711 = vrot.slane %v1701, 6
      %v1712 = vrot.slane %v1702, 6
      %v1713 = vrot.slane %v1703, 6
      %v1714 = vsel %vm372, %v1711, %v1712
      %v1715 = vsel %vm372, %v1713, %v1711
      %v1716 = vmax.f32 %v1709, %v1715
      %v1717 = vmax.f32 %v1710, %v1714
      %v1718 = vrot.slane %v1701, 1
      %v1719 = vrot.slane %v1702, 1
      %v1720 = vrot.slane %v1703, 1
      %v1721 = vsel %vm408, %v1719, %v1720
      %v1722 = vsel %vm408, %v1718, %v1719
      %v1723 = vmax.f32 %v1716, %v1722
      %v1724 = vmax.f32 %v1717, %v1721
      %v1725 = vrot.slane %v1701, 2
      %v1726 = vrot.slane %v1702, 2
      %v1727 = vrot.slane %v1703, 2
      %v1728 = vsel %vm444, %v1726, %v1727
      %v1729 = vsel %vm444, %v1725, %v1726
      %v1730 = vmax.f32 %v1723, %v1729
      %v1731 = vmax.f32 %v1724, %v1728
      %1732 = vst [vmem:[%s842] sm:$0xff] %v1730
      %1733 = vst [vmem:[%s842 + $0x8] sm:$0xff] %v1731
      %v1734 = vld [vmem:[#allocation3] sm:$0xff]
      %v1735 = vld [vmem:[#allocation3 + $0x8] sm:$0xff]
      %v1736 = vld [vmem:[#allocation3 + $0x10] sm:$0xff]
      %v1737 = vld [vmem:[#allocation3 + $0x18] sm:$0xff]
      %v1738 = vld [vmem:[#allocation3 + $0x20] sm:$0xff]
      %v1739 = vld [vmem:[#allocation3 + $0x28] sm:$0xff]
      %v1740 = vld [vmem:[#allocation3 + $0x30] sm:$0xff]
      %v1741 = vld [vmem:[#allocation3 + $0x38] sm:$0xff]
      %v1742 = vld [vmem:[#allocation3 + $0x40] sm:$0xff]
      %v1743 = vld [vmem:[#allocation3 + $0x48] sm:$0xff]
      %v1744 = vld [vmem:[#allocation3 + $0x50] sm:$0xff]
      %v1745 = vld [vmem:[#allocation3 + $0x58] sm:$0xff]
      %v1746 = vld [vmem:[#allocation3 + $0x60] sm:$0xff]
      %v1747 = vld [vmem:[#allocation3 + $0x68] sm:$0xff]
      %v1748 = vld [vmem:[#allocation3 + $0x70] sm:$0xff]
      %v1749 = vld [vmem:[#allocation3 + $0x78] sm:$0xff]
      %v1750 = vld [vmem:[%s861] sm:$0xff]
      %v1751 = vld [vmem:[%s861 + $0x8] sm:$0xff]
      %v1752 = vld [vmem:[%s861 + $0x10] sm:$0xff]
      %v1753 = vld [vmem:[%s861 + $0x18] sm:$0xff]
      %v1754 = vld [vmem:[%s861 + $0x20] sm:$0xff]
      %v1755 = vld [vmem:[%s861 + $0x28] sm:$0xff]
      %v1756 = vld [vmem:[%s861 + $0x30] sm:$0xff]
      %v1757 = vld [vmem:[%s861 + $0x38] sm:$0xff]
      %v1758 = vld [vmem:[%s861 + $0x40] sm:$0xff]
      %v1759 = vld [vmem:[%s861 + $0x48] sm:$0xff]
      %v1760 = vld [vmem:[%s861 + $0x50] sm:$0xff]
      %v1761 = vld [vmem:[%s861 + $0x58] sm:$0xff]
      %v1762 = vld [vmem:[%s861 + $0x60] sm:$0xff]
      %v1763 = vld [vmem:[%s861 + $0x68] sm:$0xff]
      %v1764 = vld [vmem:[%s861 + $0x70] sm:$0xff]
      %v1765 = vld [vmem:[%s861 + $0x78] sm:$0xff]
      %v1766 = vmax.f32 %v1734, %v1750
      %v1767 = vmax.f32 %v1735, %v1751
      %v1768 = vmax.f32 %v1736, %v1752
      %v1769 = vmax.f32 %v1737, %v1753
      %v1770 = vmax.f32 %v1738, %v1754
      %v1771 = vmax.f32 %v1739, %v1755
      %v1772 = vmax.f32 %v1740, %v1756
      %v1773 = vmax.f32 %v1741, %v1757
      %v1774 = vmax.f32 %v1742, %v1758
      %v1775 = vmax.f32 %v1743, %v1759
      %v1776 = vmax.f32 %v1744, %v1760
      %v1777 = vmax.f32 %v1745, %v1761
      %v1778 = vmax.f32 %v1746, %v1762
      %v1779 = vmax.f32 %v1747, %v1763
      %v1780 = vmax.f32 %v1748, %v1764
      %v1781 = vmax.f32 %v1749, %v1765
      %v1782 = vld [vmem:[%s465] sm:$0xff]
      %v1783 = vld [vmem:[%s465 + $0x8] sm:$0xff]
      %v1784 = vld [vmem:[%s465 + $0x10] sm:$0xff]
      %v1785 = vld [vmem:[%s465 + $0x18] sm:$0xff]
      %v1786 = vld [vmem:[%s465 + $0x20] sm:$0xff]
      %v1787 = vld [vmem:[%s465 + $0x28] sm:$0xff]
      %v1788 = vld [vmem:[%s465 + $0x30] sm:$0xff]
      %v1789 = vld [vmem:[%s465 + $0x38] sm:$0xff]
      %v1790 = vld [vmem:[%s465 + $0x40] sm:$0xff]
      %v1791 = vld [vmem:[%s465 + $0x48] sm:$0xff]
      %v1792 = vld [vmem:[%s465 + $0x50] sm:$0xff]
      %v1793 = vld [vmem:[%s465 + $0x58] sm:$0xff]
      %v1794 = vld [vmem:[%s465 + $0x60] sm:$0xff]
      %v1795 = vld [vmem:[%s465 + $0x68] sm:$0xff]
      %v1796 = vld [vmem:[%s465 + $0x70] sm:$0xff]
      %v1797 = vld [vmem:[%s465 + $0x78] sm:$0xff]
      %v1798 = vmax.f32 %v1766, %v1782
      %v1799 = vmax.f32 %v1767, %v1783
      %v1800 = vmax.f32 %v1768, %v1784
      %v1801 = vmax.f32 %v1769, %v1785
      %v1802 = vmax.f32 %v1770, %v1786
      %v1803 = vmax.f32 %v1771, %v1787
      %v1804 = vmax.f32 %v1772, %v1788
      %v1805 = vmax.f32 %v1773, %v1789
      %v1806 = vmax.f32 %v1774, %v1790
      %v1807 = vmax.f32 %v1775, %v1791
      %v1808 = vmax.f32 %v1776, %v1792
      %v1809 = vmax.f32 %v1777, %v1793
      %v1810 = vmax.f32 %v1778, %v1794
      %v1811 = vmax.f32 %v1779, %v1795
      %v1812 = vmax.f32 %v1780, %v1796
      %v1813 = vmax.f32 %v1781, %v1797
      %v1814 = vld [vmem:[%s926] sm:$0xff]
      %v1815 = vld [vmem:[%s926 + $0x8] sm:$0xff]
      %v1816 = vld [vmem:[%s926 + $0x10] sm:$0xff]
      %v1817 = vld [vmem:[%s926 + $0x18] sm:$0xff]
      %v1818 = vld [vmem:[%s926 + $0x20] sm:$0xff]
      %v1819 = vld [vmem:[%s926 + $0x28] sm:$0xff]
      %v1820 = vld [vmem:[%s926 + $0x30] sm:$0xff]
      %v1821 = vld [vmem:[%s926 + $0x38] sm:$0xff]
      %v1822 = vld [vmem:[%s926 + $0x40] sm:$0xff]
      %v1823 = vld [vmem:[%s926 + $0x48] sm:$0xff]
      %v1824 = vld [vmem:[%s926 + $0x50] sm:$0xff]
      %v1825 = vld [vmem:[%s926 + $0x58] sm:$0xff]
      %v1826 = vld [vmem:[%s926 + $0x60] sm:$0xff]
      %v1827 = vld [vmem:[%s926 + $0x68] sm:$0xff]
      %v1828 = vld [vmem:[%s926 + $0x70] sm:$0xff]
      %v1829 = vld [vmem:[%s926 + $0x78] sm:$0xff]
      %v1830 = vmax.f32 %v1798, %v1814
      %v1831 = vmax.f32 %v1799, %v1815
      %v1832 = vmax.f32 %v1800, %v1816
      %v1833 = vmax.f32 %v1801, %v1817
      %v1834 = vmax.f32 %v1802, %v1818
      %v1835 = vmax.f32 %v1803, %v1819
      %v1836 = vmax.f32 %v1804, %v1820
      %v1837 = vmax.f32 %v1805, %v1821
      %v1838 = vmax.f32 %v1806, %v1822
      %v1839 = vmax.f32 %v1807, %v1823
      %v1840 = vmax.f32 %v1808, %v1824
      %v1841 = vmax.f32 %v1809, %v1825
      %v1842 = vmax.f32 %v1810, %v1826
      %v1843 = vmax.f32 %v1811, %v1827
      %v1844 = vmax.f32 %v1812, %v1828
      %v1845 = vmax.f32 %v1813, %v1829
      %v1846 = vld [vmem:[%s959] sm:$0xff]
      %v1847 = vld [vmem:[%s959 + $0x8] sm:$0xff]
      %v1848 = vld [vmem:[%s959 + $0x10] sm:$0xff]
      %v1849 = vld [vmem:[%s959 + $0x18] sm:$0xff]
      %v1850 = vld [vmem:[%s959 + $0x20] sm:$0xff]
      %v1851 = vld [vmem:[%s959 + $0x28] sm:$0xff]
      %v1852 = vld [vmem:[%s959 + $0x30] sm:$0xff]
      %v1853 = vld [vmem:[%s959 + $0x38] sm:$0xff]
      %v1854 = vld [vmem:[%s959 + $0x40] sm:$0xff]
      %v1855 = vld [vmem:[%s959 + $0x48] sm:$0xff]
      %v1856 = vld [vmem:[%s959 + $0x50] sm:$0xff]
      %v1857 = vld [vmem:[%s959 + $0x58] sm:$0xff]
      %v1858 = vld [vmem:[%s959 + $0x60] sm:$0xff]
      %v1859 = vld [vmem:[%s959 + $0x68] sm:$0xff]
      %v1860 = vld [vmem:[%s959 + $0x70] sm:$0xff]
      %v1861 = vld [vmem:[%s959 + $0x78] sm:$0xff]
      %v1862 = vmax.f32 %v1830, %v1846
      %v1863 = vmax.f32 %v1831, %v1847
      %v1864 = vmax.f32 %v1832, %v1848
      %v1865 = vmax.f32 %v1833, %v1849
      %v1866 = vmax.f32 %v1834, %v1850
      %v1867 = vmax.f32 %v1835, %v1851
      %v1868 = vmax.f32 %v1836, %v1852
      %v1869 = vmax.f32 %v1837, %v1853
      %v1870 = vmax.f32 %v1838, %v1854
      %v1871 = vmax.f32 %v1839, %v1855
      %v1872 = vmax.f32 %v1840, %v1856
      %v1873 = vmax.f32 %v1841, %v1857
      %v1874 = vmax.f32 %v1842, %v1858
      %v1875 = vmax.f32 %v1843, %v1859
      %v1876 = vmax.f32 %v1844, %v1860
      %v1877 = vmax.f32 %v1845, %v1861
      %1878 = vst [vmem:[%s149 + $0x10] sm:$0xff] %v1862
      %1879 = vst [vmem:[%s149 + $0x30] sm:$0xff] %v1863
      %1880 = vst [vmem:[%s149 + $0x50] sm:$0xff] %v1864
      %1881 = vst [vmem:[%s149 + $0x70] sm:$0xff] %v1865
      %1882 = vst [vmem:[%s149 + $0x90] sm:$0xff] %v1866
      %1883 = vst [vmem:[%s149 + $0xb0] sm:$0xff] %v1867
      %1884 = vst [vmem:[%s149 + $0xd0] sm:$0xff] %v1868
      %1885 = vst [vmem:[%s149 + $0xf0] sm:$0xff] %v1869
      %1886 = vst [vmem:[%s149 + $0x110] sm:$0xff] %v1870
      %1887 = vst [vmem:[%s149 + $0x130] sm:$0xff] %v1871
      %1888 = vst [vmem:[%s149 + $0x150] sm:$0xff] %v1872
      %1889 = vst [vmem:[%s149 + $0x170] sm:$0xff] %v1873
      %1890 = vst [vmem:[%s149 + $0x190] sm:$0xff] %v1874
      %1891 = vst [vmem:[%s149 + $0x1b0] sm:$0xff] %v1875
      %1892 = vst [vmem:[%s149 + $0x1d0] sm:$0xff] %v1876
      %1893 = vst [vmem:[%s149 + $0x1f0] sm:$0xff] %v1877
      %1894 = vst [vmem:[#allocation2] sm:$0xff] %v1862
      %1895 = vst [vmem:[#allocation2 + $0x8] sm:$0xff] %v1863
      %1896 = vst [vmem:[#allocation2 + $0x18] sm:$0xff] %v1864
      %1897 = vst [vmem:[#allocation2 + $0x20] sm:$0xff] %v1865
      %1898 = vst [vmem:[#allocation2 + $0x30] sm:$0xff] %v1866
      %1899 = vst [vmem:[#allocation2 + $0x38] sm:$0xff] %v1867
      %1900 = vst [vmem:[#allocation2 + $0x48] sm:$0xff] %v1868
      %1901 = vst [vmem:[#allocation2 + $0x50] sm:$0xff] %v1869
      %1902 = vst [vmem:[#allocation2 + $0x60] sm:$0xff] %v1870
      %1903 = vst [vmem:[#allocation2 + $0x68] sm:$0xff] %v1871
      %1904 = vst [vmem:[#allocation2 + $0x78] sm:$0xff] %v1872
      %1905 = vst [vmem:[#allocation2 + $0x80] sm:$0xff] %v1873
      %1906 = vst [vmem:[#allocation2 + $0x90] sm:$0xff] %v1874
      %1907 = vst [vmem:[#allocation2 + $0x98] sm:$0xff] %v1875
      %1908 = vst [vmem:[#allocation2 + $0xa8] sm:$0xff] %v1876
      %1909 = vst [vmem:[#allocation2 + $0xb0] sm:$0xff] %v1877
      %v1910 = vld [vmem:[%s1024] sm:$0xff]
      %v1911 = vld [vmem:[%s1024 + $0x8] sm:$0xff]
      %v1912 = vld [vmem:[%s1024 + $0x10] sm:$0xff]
      %v1913 = vld [vmem:[%s1024 + $0x18] sm:$0xff]
      %v1914 = vld [vmem:[%s1024 + $0x20] sm:$0xff]
      %v1915 = vld [vmem:[%s1024 + $0x28] sm:$0xff]
      %v1916 = vld [vmem:[%s1024 + $0x30] sm:$0xff]
      %v1917 = vld [vmem:[%s1024 + $0x38] sm:$0xff]
      %v1918 = vld [vmem:[%s1024 + $0x40] sm:$0xff]
      %v1919 = vld [vmem:[%s1024 + $0x48] sm:$0xff]
      %v1920 = vld [vmem:[%s1024 + $0x50] sm:$0xff]
      %v1921 = vld [vmem:[%s1024 + $0x58] sm:$0xff]
      %v1922 = vld [vmem:[%s1024 + $0x60] sm:$0xff]
      %v1923 = vld [vmem:[%s1024 + $0x68] sm:$0xff]
      %v1924 = vld [vmem:[%s1024 + $0x70] sm:$0xff]
      %v1925 = vld [vmem:[%s1024 + $0x78] sm:$0xff]
      %v1926 = vld [vmem:[%s1041] sm:$0xff]
      %v1927 = vld [vmem:[%s1041 + $0x8] sm:$0xff]
      %v1928 = vld [vmem:[%s1041 + $0x10] sm:$0xff]
      %v1929 = vld [vmem:[%s1041 + $0x18] sm:$0xff]
      %v1930 = vld [vmem:[%s1041 + $0x20] sm:$0xff]
      %v1931 = vld [vmem:[%s1041 + $0x28] sm:$0xff]
      %v1932 = vld [vmem:[%s1041 + $0x30] sm:$0xff]
      %v1933 = vld [vmem:[%s1041 + $0x38] sm:$0xff]
      %v1934 = vld [vmem:[%s1041 + $0x40] sm:$0xff]
      %v1935 = vld [vmem:[%s1041 + $0x48] sm:$0xff]
      %v1936 = vld [vmem:[%s1041 + $0x50] sm:$0xff]
      %v1937 = vld [vmem:[%s1041 + $0x58] sm:$0xff]
      %v1938 = vld [vmem:[%s1041 + $0x60] sm:$0xff]
      %v1939 = vld [vmem:[%s1041 + $0x68] sm:$0xff]
      %v1940 = vld [vmem:[%s1041 + $0x70] sm:$0xff]
      %v1941 = vld [vmem:[%s1041 + $0x78] sm:$0xff]
      %v1942 = vmax.f32 %v1910, %v1926
      %v1943 = vmax.f32 %v1911, %v1927
      %v1944 = vmax.f32 %v1912, %v1928
      %v1945 = vmax.f32 %v1913, %v1929
      %v1946 = vmax.f32 %v1914, %v1930
      %v1947 = vmax.f32 %v1915, %v1931
      %v1948 = vmax.f32 %v1916, %v1932
      %v1949 = vmax.f32 %v1917, %v1933
      %v1950 = vmax.f32 %v1918, %v1934
      %v1951 = vmax.f32 %v1919, %v1935
      %v1952 = vmax.f32 %v1920, %v1936
      %v1953 = vmax.f32 %v1921, %v1937
      %v1954 = vmax.f32 %v1922, %v1938
      %v1955 = vmax.f32 %v1923, %v1939
      %v1956 = vmax.f32 %v1924, %v1940
      %v1957 = vmax.f32 %v1925, %v1941
      %v1958 = vld [vmem:[%s1074] sm:$0xff]
      %v1959 = vld [vmem:[%s1074 + $0x8] sm:$0xff]
      %v1960 = vld [vmem:[%s1074 + $0x10] sm:$0xff]
      %v1961 = vld [vmem:[%s1074 + $0x18] sm:$0xff]
      %v1962 = vld [vmem:[%s1074 + $0x20] sm:$0xff]
      %v1963 = vld [vmem:[%s1074 + $0x28] sm:$0xff]
      %v1964 = vld [vmem:[%s1074 + $0x30] sm:$0xff]
      %v1965 = vld [vmem:[%s1074 + $0x38] sm:$0xff]
      %v1966 = vld [vmem:[%s1074 + $0x40] sm:$0xff]
      %v1967 = vld [vmem:[%s1074 + $0x48] sm:$0xff]
      %v1968 = vld [vmem:[%s1074 + $0x50] sm:$0xff]
      %v1969 = vld [vmem:[%s1074 + $0x58] sm:$0xff]
      %v1970 = vld [vmem:[%s1074 + $0x60] sm:$0xff]
      %v1971 = vld [vmem:[%s1074 + $0x68] sm:$0xff]
      %v1972 = vld [vmem:[%s1074 + $0x70] sm:$0xff]
      %v1973 = vld [vmem:[%s1074 + $0x78] sm:$0xff]
      %v1974 = vmax.f32 %v1942, %v1958
      %v1975 = vmax.f32 %v1943, %v1959
      %v1976 = vmax.f32 %v1944, %v1960
      %v1977 = vmax.f32 %v1945, %v1961
      %v1978 = vmax.f32 %v1946, %v1962
      %v1979 = vmax.f32 %v1947, %v1963
      %v1980 = vmax.f32 %v1948, %v1964
      %v1981 = vmax.f32 %v1949, %v1965
      %v1982 = vmax.f32 %v1950, %v1966
      %v1983 = vmax.f32 %v1951, %v1967
      %v1984 = vmax.f32 %v1952, %v1968
      %v1985 = vmax.f32 %v1953, %v1969
      %v1986 = vmax.f32 %v1954, %v1970
      %v1987 = vmax.f32 %v1955, %v1971
      %v1988 = vmax.f32 %v1956, %v1972
      %v1989 = vmax.f32 %v1957, %v1973
      %v1990 = vld [vmem:[%s1107] sm:$0xff]
      %v1991 = vld [vmem:[%s1107 + $0x8] sm:$0xff]
      %v1992 = vld [vmem:[%s1107 + $0x10] sm:$0xff]
      %v1993 = vld [vmem:[%s1107 + $0x18] sm:$0xff]
      %v1994 = vld [vmem:[%s1107 + $0x20] sm:$0xff]
      %v1995 = vld [vmem:[%s1107 + $0x28] sm:$0xff]
      %v1996 = vld [vmem:[%s1107 + $0x30] sm:$0xff]
      %v1997 = vld [vmem:[%s1107 + $0x38] sm:$0xff]
      %v1998 = vld [vmem:[%s1107 + $0x40] sm:$0xff]
      %v1999 = vld [vmem:[%s1107 + $0x48] sm:$0xff]
      %v2000 = vld [vmem:[%s1107 + $0x50] sm:$0xff]
      %v2001 = vld [vmem:[%s1107 + $0x58] sm:$0xff]
      %v2002 = vld [vmem:[%s1107 + $0x60] sm:$0xff]
      %v2003 = vld [vmem:[%s1107 + $0x68] sm:$0xff]
      %v2004 = vld [vmem:[%s1107 + $0x70] sm:$0xff]
      %v2005 = vld [vmem:[%s1107 + $0x78] sm:$0xff]
      %v2006 = vmax.f32 %v1974, %v1990
      %v2007 = vmax.f32 %v1975, %v1991
      %v2008 = vmax.f32 %v1976, %v1992
      %v2009 = vmax.f32 %v1977, %v1993
      %v2010 = vmax.f32 %v1978, %v1994
      %v2011 = vmax.f32 %v1979, %v1995
      %v2012 = vmax.f32 %v1980, %v1996
      %v2013 = vmax.f32 %v1981, %v1997
      %v2014 = vmax.f32 %v1982, %v1998
      %v2015 = vmax.f32 %v1983, %v1999
      %v2016 = vmax.f32 %v1984, %v2000
      %v2017 = vmax.f32 %v1985, %v2001
      %v2018 = vmax.f32 %v1986, %v2002
      %v2019 = vmax.f32 %v1987, %v2003
      %v2020 = vmax.f32 %v1988, %v2004
      %v2021 = vmax.f32 %v1989, %v2005
      %v2022 = vld [vmem:[%s799] sm:$0xff]
      %v2023 = vld [vmem:[%s799 + $0x8] sm:$0xff]
      %v2024 = vld [vmem:[%s799 + $0x10] sm:$0xff]
      %v2025 = vld [vmem:[%s799 + $0x18] sm:$0xff]
      %v2026 = vld [vmem:[%s799 + $0x20] sm:$0xff]
      %v2027 = vld [vmem:[%s799 + $0x28] sm:$0xff]
      %v2028 = vld [vmem:[%s799 + $0x30] sm:$0xff]
      %v2029 = vld [vmem:[%s799 + $0x38] sm:$0xff]
      %v2030 = vld [vmem:[%s799 + $0x40] sm:$0xff]
      %v2031 = vld [vmem:[%s799 + $0x48] sm:$0xff]
      %v2032 = vld [vmem:[%s799 + $0x50] sm:$0xff]
      %v2033 = vld [vmem:[%s799 + $0x58] sm:$0xff]
      %v2034 = vld [vmem:[%s799 + $0x60] sm:$0xff]
      %v2035 = vld [vmem:[%s799 + $0x68] sm:$0xff]
      %v2036 = vld [vmem:[%s799 + $0x70] sm:$0xff]
      %v2037 = vld [vmem:[%s799 + $0x78] sm:$0xff]
      %v2038 = vmax.f32 %v2006, %v2022
      %v2039 = vmax.f32 %v2007, %v2023
      %v2040 = vmax.f32 %v2008, %v2024
      %v2041 = vmax.f32 %v2009, %v2025
      %v2042 = vmax.f32 %v2010, %v2026
      %v2043 = vmax.f32 %v2011, %v2027
      %v2044 = vmax.f32 %v2012, %v2028
      %v2045 = vmax.f32 %v2013, %v2029
      %v2046 = vmax.f32 %v2014, %v2030
      %v2047 = vmax.f32 %v2015, %v2031
      %v2048 = vmax.f32 %v2016, %v2032
      %v2049 = vmax.f32 %v2017, %v2033
      %v2050 = vmax.f32 %v2018, %v2034
      %v2051 = vmax.f32 %v2019, %v2035
      %v2052 = vmax.f32 %v2020, %v2036
      %v2053 = vmax.f32 %v2021, %v2037
      %2054 = vst [vmem:[%s1172 + $0x10] sm:$0xff] %v2038
      %2055 = vst [vmem:[%s1172 + $0x30] sm:$0xff] %v2039
      %2056 = vst [vmem:[%s1172 + $0x50] sm:$0xff] %v2040
      %2057 = vst [vmem:[%s1172 + $0x70] sm:$0xff] %v2041
      %2058 = vst [vmem:[%s1172 + $0x90] sm:$0xff] %v2042
      %2059 = vst [vmem:[%s1172 + $0xb0] sm:$0xff] %v2043
      %2060 = vst [vmem:[%s1172 + $0xd0] sm:$0xff] %v2044
      %2061 = vst [vmem:[%s1172 + $0xf0] sm:$0xff] %v2045
      %2062 = vst [vmem:[%s1172 + $0x110] sm:$0xff] %v2046
      %2063 = vst [vmem:[%s1172 + $0x130] sm:$0xff] %v2047
      %2064 = vst [vmem:[%s1172 + $0x150] sm:$0xff] %v2048
      %2065 = vst [vmem:[%s1172 + $0x170] sm:$0xff] %v2049
      %2066 = vst [vmem:[%s1172 + $0x190] sm:$0xff] %v2050
      %2067 = vst [vmem:[%s1172 + $0x1b0] sm:$0xff] %v2051
      %2068 = vst [vmem:[%s1172 + $0x1d0] sm:$0xff] %v2052
      %2069 = vst [vmem:[%s1172 + $0x1f0] sm:$0xff] %v2053
      %2070 = vst [vmem:[%s1189] sm:$0xff] %v2038
      %2071 = vst [vmem:[%s1189 + $0x8] sm:$0xff] %v2039
      %2072 = vst [vmem:[%s1189 + $0x18] sm:$0xff] %v2040
      %2073 = vst [vmem:[%s1189 + $0x20] sm:$0xff] %v2041
      %2074 = vst [vmem:[%s1189 + $0x30] sm:$0xff] %v2042
      %2075 = vst [vmem:[%s1189 + $0x38] sm:$0xff] %v2043
      %2076 = vst [vmem:[%s1189 + $0x48] sm:$0xff] %v2044
      %2077 = vst [vmem:[%s1189 + $0x50] sm:$0xff] %v2045
      %2078 = vst [vmem:[%s1189 + $0x60] sm:$0xff] %v2046
      %2079 = vst [vmem:[%s1189 + $0x68] sm:$0xff] %v2047
      %2080 = vst [vmem:[%s1189 + $0x78] sm:$0xff] %v2048
      %2081 = vst [vmem:[%s1189 + $0x80] sm:$0xff] %v2049
      %2082 = vst [vmem:[%s1189 + $0x90] sm:$0xff] %v2050
      %2083 = vst [vmem:[%s1189 + $0x98] sm:$0xff] %v2051
      %2084 = vst [vmem:[%s1189 + $0xa8] sm:$0xff] %v2052
      %2085 = vst [vmem:[%s1189 + $0xb0] sm:$0xff] %v2053
      %v2086 = vld [vmem:[#allocation2] sm:$0xff]
      %v2087 = vld [vmem:[#allocation2 + $0x8] sm:$0xff]
      %v2088 = vld [vmem:[#allocation2 + $0x10] sm:$0xff]
      %v2089 = vld [vmem:[#allocation2 + $0x18] sm:$0xff]
      %v2090 = vld [vmem:[#allocation2 + $0x20] sm:$0xff]
      %v2091 = vld [vmem:[#allocation2 + $0x28] sm:$0xff]
      %v2092 = vld [vmem:[#allocation2 + $0x30] sm:$0xff]
      %v2093 = vld [vmem:[#allocation2 + $0x38] sm:$0xff]
      %v2094 = vld [vmem:[#allocation2 + $0x40] sm:$0xff]
      %v2095 = vld [vmem:[#allocation2 + $0x48] sm:$0xff]
      %v2096 = vld [vmem:[#allocation2 + $0x50] sm:$0xff]
      %v2097 = vld [vmem:[#allocation2 + $0x58] sm:$0xff]
      %v2098 = vld [vmem:[#allocation2 + $0x60] sm:$0xff]
      %v2099 = vld [vmem:[#allocation2 + $0x68] sm:$0xff]
      %v2100 = vld [vmem:[#allocation2 + $0x70] sm:$0xff]
      %v2101 = vrot.slane %v2086, 7
      %v2102 = vrot.slane %v2089, 7
      %v2103 = vrot.slane %v2092, 7
      %v2104 = vrot.slane %v2095, 7
      %v2105 = vrot.slane %v2098, 7
      %v2106 = vrot.slane %v2087, 7
      %v2107 = vrot.slane %v2090, 7
      %v2108 = vrot.slane %v2093, 7
      %v2109 = vrot.slane %v2096, 7
      %v2110 = vrot.slane %v2099, 7
      %v2111 = vrot.slane %v2088, 7
      %v2112 = vrot.slane %v2091, 7
      %v2113 = vrot.slane %v2094, 7
      %v2114 = vrot.slane %v2097, 7
      %v2115 = vrot.slane %v2100, 7
      %v2116 = vsel %vm336, %v2101, %v2106
      %v2117 = vsel %vm336, %v2102, %v2107
      %v2118 = vsel %vm336, %v2103, %v2108
      %v2119 = vsel %vm336, %v2104, %v2109
      %v2120 = vsel %vm336, %v2105, %v2110
      %v2121 = vsel %vm336, %v2111, %v2101
      %v2122 = vsel %vm336, %v2112, %v2102
      %v2123 = vsel %vm336, %v2113, %v2103
      %v2124 = vsel %vm336, %v2114, %v2104
      %v2125 = vsel %vm336, %v2115, %v2105
      %v2126 = vmax.f32 %v2086, %v2121
      %v2127 = vmax.f32 %v2087, %v2116
      %v2128 = vmax.f32 %v2089, %v2122
      %v2129 = vmax.f32 %v2090, %v2117
      %v2130 = vmax.f32 %v2092, %v2123
      %v2131 = vmax.f32 %v2093, %v2118
      %v2132 = vmax.f32 %v2095, %v2124
      %v2133 = vmax.f32 %v2096, %v2119
      %v2134 = vmax.f32 %v2098, %v2125
      %v2135 = vmax.f32 %v2099, %v2120
      %v2136 = vrot.slane %v2086, 6
      %v2137 = vrot.slane %v2089, 6
      %v2138 = vrot.slane %v2092, 6
      %v2139 = vrot.slane %v2095, 6
      %v2140 = vrot.slane %v2098, 6
      %v2141 = vrot.slane %v2087, 6
      %v2142 = vrot.slane %v2090, 6
      %v2143 = vrot.slane %v2093, 6
      %v2144 = vrot.slane %v2096, 6
      %v2145 = vrot.slane %v2099, 6
      %v2146 = vrot.slane %v2088, 6
      %v2147 = vrot.slane %v2091, 6
      %v2148 = vrot.slane %v2094, 6
      %v2149 = vrot.slane %v2097, 6
      %v2150 = vrot.slane %v2100, 6
      %v2151 = vsel %vm372, %v2136, %v2141
      %v2152 = vsel %vm372, %v2137, %v2142
      %v2153 = vsel %vm372, %v2138, %v2143
      %v2154 = vsel %vm372, %v2139, %v2144
      %v2155 = vsel %vm372, %v2140, %v2145
      %v2156 = vsel %vm372, %v2146, %v2136
      %v2157 = vsel %vm372, %v2147, %v2137
      %v2158 = vsel %vm372, %v2148, %v2138
      %v2159 = vsel %vm372, %v2149, %v2139
      %v2160 = vsel %vm372, %v2150, %v2140
      %v2161 = vmax.f32 %v2126, %v2156
      %v2162 = vmax.f32 %v2127, %v2151
      %v2163 = vmax.f32 %v2128, %v2157
      %v2164 = vmax.f32 %v2129, %v2152
      %v2165 = vmax.f32 %v2130, %v2158
      %v2166 = vmax.f32 %v2131, %v2153
      %v2167 = vmax.f32 %v2132, %v2159
      %v2168 = vmax.f32 %v2133, %v2154
      %v2169 = vmax.f32 %v2134, %v2160
      %v2170 = vmax.f32 %v2135, %v2155
      %v2171 = vrot.slane %v2086, 1
      %v2172 = vrot.slane %v2089, 1
      %v2173 = vrot.slane %v2092, 1
      %v2174 = vrot.slane %v2095, 1
      %v2175 = vrot.slane %v2098, 1
      %v2176 = vrot.slane %v2087, 1
      %v2177 = vrot.slane %v2090, 1
      %v2178 = vrot.slane %v2093, 1
      %v2179 = vrot.slane %v2096, 1
      %v2180 = vrot.slane %v2099, 1
      %v2181 = vrot.slane %v2088, 1
      %v2182 = vrot.slane %v2091, 1
      %v2183 = vrot.slane %v2094, 1
      %v2184 = vrot.slane %v2097, 1
      %v2185 = vrot.slane %v2100, 1
      %v2186 = vsel %vm408, %v2176, %v2181
      %v2187 = vsel %vm408, %v2177, %v2182
      %v2188 = vsel %vm408, %v2178, %v2183
      %v2189 = vsel %vm408, %v2179, %v2184
      %v2190 = vsel %vm408, %v2180, %v2185
      %v2191 = vsel %vm408, %v2171, %v2176
      %v2192 = vsel %vm408, %v2172, %v2177
      %v2193 = vsel %vm408, %v2173, %v2178
      %v2194 = vsel %vm408, %v2174, %v2179
      %v2195 = vsel %vm408, %v2175, %v2180
      %v2196 = vmax.f32 %v2161, %v2191
      %v2197 = vmax.f32 %v2162, %v2186
      %v2198 = vmax.f32 %v2163, %v2192
      %v2199 = vmax.f32 %v2164, %v2187
      %v2200 = vmax.f32 %v2165, %v2193
      %v2201 = vmax.f32 %v2166, %v2188
      %v2202 = vmax.f32 %v2167, %v2194
      %v2203 = vmax.f32 %v2168, %v2189
      %v2204 = vmax.f32 %v2169, %v2195
      %v2205 = vmax.f32 %v2170, %v2190
      %v2206 = vrot.slane %v2086, 2
      %v2207 = vrot.slane %v2089, 2
      %v2208 = vrot.slane %v2092, 2
      %v2209 = vrot.slane %v2095, 2
      %v2210 = vrot.slane %v2098, 2
      %v2211 = vrot.slane %v2087, 2
      %v2212 = vrot.slane %v2090, 2
      %v2213 = vrot.slane %v2093, 2
      %v2214 = vrot.slane %v2096, 2
      %v2215 = vrot.slane %v2099, 2
      %v2216 = vrot.slane %v2088, 2
      %v2217 = vrot.slane %v2091, 2
      %v2218 = vrot.slane %v2094, 2
      %v2219 = vrot.slane %v2097, 2
      %v2220 = vrot.slane %v2100, 2
      %v2221 = vsel %vm444, %v2211, %v2216
      %v2222 = vsel %vm444, %v2212, %v2217
      %v2223 = vsel %vm444, %v2213, %v2218
      %v2224 = vsel %vm444, %v2214, %v2219
      %v2225 = vsel %vm444, %v2215, %v2220
      %v2226 = vsel %vm444, %v2206, %v2211
      %v2227 = vsel %vm444, %v2207, %v2212
      %v2228 = vsel %vm444, %v2208, %v2213
      %v2229 = vsel %vm444, %v2209, %v2214
      %v2230 = vsel %vm444, %v2210, %v2215
      %v2231 = vmax.f32 %v2196, %v2226
      %v2232 = vmax.f32 %v2197, %v2221
      %v2233 = vmax.f32 %v2198, %v2227
      %v2234 = vmax.f32 %v2199, %v2222
      %v2235 = vmax.f32 %v2200, %v2228
      %v2236 = vmax.f32 %v2201, %v2223
      %v2237 = vmax.f32 %v2202, %v2229
      %v2238 = vmax.f32 %v2203, %v2224
      %v2239 = vmax.f32 %v2204, %v2230
      %v2240 = vmax.f32 %v2205, %v2225
      %2241 = vst [vmem:[%s465] sm:$0xff] %v2231
      %2242 = vst [vmem:[%s465 + $0x8] sm:$0xff] %v2232
      %2243 = vst [vmem:[%s465 + $0x10] sm:$0xff] %v2233
      %2244 = vst [vmem:[%s465 + $0x18] sm:$0xff] %v2234
      %2245 = vst [vmem:[%s465 + $0x20] sm:$0xff] %v2235
      %2246 = vst [vmem:[%s465 + $0x28] sm:$0xff] %v2236
      %2247 = vst [vmem:[%s465 + $0x30] sm:$0xff] %v2237
      %2248 = vst [vmem:[%s465 + $0x38] sm:$0xff] %v2238
      %2249 = vst [vmem:[%s465 + $0x40] sm:$0xff] %v2239
      %2250 = vst [vmem:[%s465 + $0x48] sm:$0xff] %v2240
      %v2251 = vld [vmem:[%s476] sm:$0xff]
      %v2252 = vld [vmem:[%s476 + $0x8] sm:$0xff]
      %v2253 = vld [vmem:[%s476 + $0x10] sm:$0xff]
      %v2254 = vld [vmem:[%s476 + $0x18] sm:$0xff]
      %v2255 = vld [vmem:[%s476 + $0x20] sm:$0xff]
      %v2256 = vld [vmem:[%s476 + $0x28] sm:$0xff]
      %v2257 = vld [vmem:[%s476 + $0x30] sm:$0xff]
      %v2258 = vld [vmem:[%s476 + $0x38] sm:$0xff]
      %v2259 = vld [vmem:[%s476 + $0x40] sm:$0xff]
      %v2260 = vld [vmem:[%s476 + $0x48] sm:$0xff]
      %v2261 = vld [vmem:[%s476 + $0x50] sm:$0xff]
      %v2262 = vld [vmem:[%s476 + $0x58] sm:$0xff]
      %v2263 = vld [vmem:[%s476 + $0x60] sm:$0xff]
      %v2264 = vld [vmem:[%s476 + $0x68] sm:$0xff]
      %v2265 = vld [vmem:[%s476 + $0x70] sm:$0xff]
      %v2266 = vrot.slane %v2251, 7
      %v2267 = vrot.slane %v2254, 7
      %v2268 = vrot.slane %v2257, 7
      %v2269 = vrot.slane %v2260, 7
      %v2270 = vrot.slane %v2263, 7
      %v2271 = vrot.slane %v2252, 7
      %v2272 = vrot.slane %v2255, 7
      %v2273 = vrot.slane %v2258, 7
      %v2274 = vrot.slane %v2261, 7
      %v2275 = vrot.slane %v2264, 7
      %v2276 = vrot.slane %v2253, 7
      %v2277 = vrot.slane %v2256, 7
      %v2278 = vrot.slane %v2259, 7
      %v2279 = vrot.slane %v2262, 7
      %v2280 = vrot.slane %v2265, 7
      %v2281 = vsel %vm336, %v2266, %v2271
      %v2282 = vsel %vm336, %v2267, %v2272
      %v2283 = vsel %vm336, %v2268, %v2273
      %v2284 = vsel %vm336, %v2269, %v2274
      %v2285 = vsel %vm336, %v2270, %v2275
      %v2286 = vsel %vm336, %v2276, %v2266
      %v2287 = vsel %vm336, %v2277, %v2267
      %v2288 = vsel %vm336, %v2278, %v2268
      %v2289 = vsel %vm336, %v2279, %v2269
      %v2290 = vsel %vm336, %v2280, %v2270
      %v2291 = vmax.f32 %v2251, %v2286
      %v2292 = vmax.f32 %v2252, %v2281
      %v2293 = vmax.f32 %v2254, %v2287
      %v2294 = vmax.f32 %v2255, %v2282
      %v2295 = vmax.f32 %v2257, %v2288
      %v2296 = vmax.f32 %v2258, %v2283
      %v2297 = vmax.f32 %v2260, %v2289
      %v2298 = vmax.f32 %v2261, %v2284
      %v2299 = vmax.f32 %v2263, %v2290
      %v2300 = vmax.f32 %v2264, %v2285
      %v2301 = vrot.slane %v2251, 6
      %v2302 = vrot.slane %v2254, 6
      %v2303 = vrot.slane %v2257, 6
      %v2304 = vrot.slane %v2260, 6
      %v2305 = vrot.slane %v2263, 6
      %v2306 = vrot.slane %v2252, 6
      %v2307 = vrot.slane %v2255, 6
      %v2308 = vrot.slane %v2258, 6
      %v2309 = vrot.slane %v2261, 6
      %v2310 = vrot.slane %v2264, 6
      %v2311 = vrot.slane %v2253, 6
      %v2312 = vrot.slane %v2256, 6
      %v2313 = vrot.slane %v2259, 6
      %v2314 = vrot.slane %v2262, 6
      %v2315 = vrot.slane %v2265, 6
      %v2316 = vsel %vm372, %v2301, %v2306
      %v2317 = vsel %vm372, %v2302, %v2307
      %v2318 = vsel %vm372, %v2303, %v2308
      %v2319 = vsel %vm372, %v2304, %v2309
      %v2320 = vsel %vm372, %v2305, %v2310
      %v2321 = vsel %vm372, %v2311, %v2301
      %v2322 = vsel %vm372, %v2312, %v2302
      %v2323 = vsel %vm372, %v2313, %v2303
      %v2324 = vsel %vm372, %v2314, %v2304
      %v2325 = vsel %vm372, %v2315, %v2305
      %v2326 = vmax.f32 %v2291, %v2321
      %v2327 = vmax.f32 %v2292, %v2316
      %v2328 = vmax.f32 %v2293, %v2322
      %v2329 = vmax.f32 %v2294, %v2317
      %v2330 = vmax.f32 %v2295, %v2323
      %v2331 = vmax.f32 %v2296, %v2318
      %v2332 = vmax.f32 %v2297, %v2324
      %v2333 = vmax.f32 %v2298, %v2319
      %v2334 = vmax.f32 %v2299, %v2325
      %v2335 = vmax.f32 %v2300, %v2320
      %v2336 = vrot.slane %v2251, 1
      %v2337 = vrot.slane %v2254, 1
      %v2338 = vrot.slane %v2257, 1
      %v2339 = vrot.slane %v2260, 1
      %v2340 = vrot.slane %v2263, 1
      %v2341 = vrot.slane %v2252, 1
      %v2342 = vrot.slane %v2255, 1
      %v2343 = vrot.slane %v2258, 1
      %v2344 = vrot.slane %v2261, 1
      %v2345 = vrot.slane %v2264, 1
      %v2346 = vrot.slane %v2253, 1
      %v2347 = vrot.slane %v2256, 1
      %v2348 = vrot.slane %v2259, 1
      %v2349 = vrot.slane %v2262, 1
      %v2350 = vrot.slane %v2265, 1
      %v2351 = vsel %vm408, %v2341, %v2346
      %v2352 = vsel %vm408, %v2342, %v2347
      %v2353 = vsel %vm408, %v2343, %v2348
      %v2354 = vsel %vm408, %v2344, %v2349
      %v2355 = vsel %vm408, %v2345, %v2350
      %v2356 = vsel %vm408, %v2336, %v2341
      %v2357 = vsel %vm408, %v2337, %v2342
      %v2358 = vsel %vm408, %v2338, %v2343
      %v2359 = vsel %vm408, %v2339, %v2344
      %v2360 = vsel %vm408, %v2340, %v2345
      %v2361 = vmax.f32 %v2326, %v2356
      %v2362 = vmax.f32 %v2327, %v2351
      %v2363 = vmax.f32 %v2328, %v2357
      %v2364 = vmax.f32 %v2329, %v2352
      %v2365 = vmax.f32 %v2330, %v2358
      %v2366 = vmax.f32 %v2331, %v2353
      %v2367 = vmax.f32 %v2332, %v2359
      %v2368 = vmax.f32 %v2333, %v2354
      %v2369 = vmax.f32 %v2334, %v2360
      %v2370 = vmax.f32 %v2335, %v2355
      %v2371 = vrot.slane %v2251, 2
      %v2372 = vrot.slane %v2254, 2
      %v2373 = vrot.slane %v2257, 2
      %v2374 = vrot.slane %v2260, 2
      %v2375 = vrot.slane %v2263, 2
      %v2376 = vrot.slane %v2252, 2
      %v2377 = vrot.slane %v2255, 2
      %v2378 = vrot.slane %v2258, 2
      %v2379 = vrot.slane %v2261, 2
      %v2380 = vrot.slane %v2264, 2
      %v2381 = vrot.slane %v2253, 2
      %v2382 = vrot.slane %v2256, 2
      %v2383 = vrot.slane %v2259, 2
      %v2384 = vrot.slane %v2262, 2
      %v2385 = vrot.slane %v2265, 2
      %v2386 = vsel %vm444, %v2376, %v2381
      %v2387 = vsel %vm444, %v2377, %v2382
      %v2388 = vsel %vm444, %v2378, %v2383
      %v2389 = vsel %vm444, %v2379, %v2384
      %v2390 = vsel %vm444, %v2380, %v2385
      %v2391 = vsel %vm444, %v2371, %v2376
      %v2392 = vsel %vm444, %v2372, %v2377
      %v2393 = vsel %vm444, %v2373, %v2378
      %v2394 = vsel %vm444, %v2374, %v2379
      %v2395 = vsel %vm444, %v2375, %v2380
      %v2396 = vmax.f32 %v2361, %v2391
      %v2397 = vmax.f32 %v2362, %v2386
      %v2398 = vmax.f32 %v2363, %v2392
      %v2399 = vmax.f32 %v2364, %v2387
      %v2400 = vmax.f32 %v2365, %v2393
      %v2401 = vmax.f32 %v2366, %v2388
      %v2402 = vmax.f32 %v2367, %v2394
      %v2403 = vmax.f32 %v2368, %v2389
      %v2404 = vmax.f32 %v2369, %v2395
      %v2405 = vmax.f32 %v2370, %v2390
      %2406 = vst [vmem:[%s632] sm:$0xff] %v2396
      %2407 = vst [vmem:[%s632 + $0x8] sm:$0xff] %v2397
      %2408 = vst [vmem:[%s632 + $0x10] sm:$0xff] %v2398
      %2409 = vst [vmem:[%s632 + $0x18] sm:$0xff] %v2399
      %2410 = vst [vmem:[%s632 + $0x20] sm:$0xff] %v2400
      %2411 = vst [vmem:[%s632 + $0x28] sm:$0xff] %v2401
      %2412 = vst [vmem:[%s632 + $0x30] sm:$0xff] %v2402
      %2413 = vst [vmem:[%s632 + $0x38] sm:$0xff] %v2403
      %2414 = vst [vmem:[%s632 + $0x40] sm:$0xff] %v2404
      %2415 = vst [vmem:[%s632 + $0x48] sm:$0xff] %v2405
      %v2416 = vld [vmem:[%s643] sm:$0xff]
      %v2417 = vld [vmem:[%s643 + $0x8] sm:$0xff]
      %v2418 = vld [vmem:[%s643 + $0x10] sm:$0xff]
      %v2419 = vld [vmem:[%s643 + $0x18] sm:$0xff]
      %v2420 = vld [vmem:[%s643 + $0x20] sm:$0xff]
      %v2421 = vld [vmem:[%s643 + $0x28] sm:$0xff]
      %v2422 = vld [vmem:[%s643 + $0x30] sm:$0xff]
      %v2423 = vld [vmem:[%s643 + $0x38] sm:$0xff]
      %v2424 = vld [vmem:[%s643 + $0x40] sm:$0xff]
      %v2425 = vld [vmem:[%s643 + $0x48] sm:$0xff]
      %v2426 = vld [vmem:[%s643 + $0x50] sm:$0xff]
      %v2427 = vld [vmem:[%s643 + $0x58] sm:$0xff]
      %v2428 = vld [vmem:[%s643 + $0x60] sm:$0xff]
      %v2429 = vld [vmem:[%s643 + $0x68] sm:$0xff]
      %v2430 = vld [vmem:[%s643 + $0x70] sm:$0xff]
      %v2431 = vrot.slane %v2416, 7
      %v2432 = vrot.slane %v2419, 7
      %v2433 = vrot.slane %v2422, 7
      %v2434 = vrot.slane %v2425, 7
      %v2435 = vrot.slane %v2428, 7
      %v2436 = vrot.slane %v2417, 7
      %v2437 = vrot.slane %v2420, 7
      %v2438 = vrot.slane %v2423, 7
      %v2439 = vrot.slane %v2426, 7
      %v2440 = vrot.slane %v2429, 7
      %v2441 = vrot.slane %v2418, 7
      %v2442 = vrot.slane %v2421, 7
      %v2443 = vrot.slane %v2424, 7
      %v2444 = vrot.slane %v2427, 7
      %v2445 = vrot.slane %v2430, 7
      %v2446 = vsel %vm336, %v2431, %v2436
      %v2447 = vsel %vm336, %v2432, %v2437
      %v2448 = vsel %vm336, %v2433, %v2438
      %v2449 = vsel %vm336, %v2434, %v2439
      %v2450 = vsel %vm336, %v2435, %v2440
      %v2451 = vsel %vm336, %v2441, %v2431
      %v2452 = vsel %vm336, %v2442, %v2432
      %v2453 = vsel %vm336, %v2443, %v2433
      %v2454 = vsel %vm336, %v2444, %v2434
      %v2455 = vsel %vm336, %v2445, %v2435
      %v2456 = vmax.f32 %v2416, %v2451
      %v2457 = vmax.f32 %v2417, %v2446
      %v2458 = vmax.f32 %v2419, %v2452
      %v2459 = vmax.f32 %v2420, %v2447
      %v2460 = vmax.f32 %v2422, %v2453
      %v2461 = vmax.f32 %v2423, %v2448
      %v2462 = vmax.f32 %v2425, %v2454
      %v2463 = vmax.f32 %v2426, %v2449
      %v2464 = vmax.f32 %v2428, %v2455
      %v2465 = vmax.f32 %v2429, %v2450
      %v2466 = vrot.slane %v2416, 6
      %v2467 = vrot.slane %v2419, 6
      %v2468 = vrot.slane %v2422, 6
      %v2469 = vrot.slane %v2425, 6
      %v2470 = vrot.slane %v2428, 6
      %v2471 = vrot.slane %v2417, 6
      %v2472 = vrot.slane %v2420, 6
      %v2473 = vrot.slane %v2423, 6
      %v2474 = vrot.slane %v2426, 6
      %v2475 = vrot.slane %v2429, 6
      %v2476 = vrot.slane %v2418, 6
      %v2477 = vrot.slane %v2421, 6
      %v2478 = vrot.slane %v2424, 6
      %v2479 = vrot.slane %v2427, 6
      %v2480 = vrot.slane %v2430, 6
      %v2481 = vsel %vm372, %v2466, %v2471
      %v2482 = vsel %vm372, %v2467, %v2472
      %v2483 = vsel %vm372, %v2468, %v2473
      %v2484 = vsel %vm372, %v2469, %v2474
      %v2485 = vsel %vm372, %v2470, %v2475
      %v2486 = vsel %vm372, %v2476, %v2466
      %v2487 = vsel %vm372, %v2477, %v2467
      %v2488 = vsel %vm372, %v2478, %v2468
      %v2489 = vsel %vm372, %v2479, %v2469
      %v2490 = vsel %vm372, %v2480, %v2470
      %v2491 = vmax.f32 %v2456, %v2486
      %v2492 = vmax.f32 %v2457, %v2481
      %v2493 = vmax.f32 %v2458, %v2487
      %v2494 = vmax.f32 %v2459, %v2482
      %v2495 = vmax.f32 %v2460, %v2488
      %v2496 = vmax.f32 %v2461, %v2483
      %v2497 = vmax.f32 %v2462, %v2489
      %v2498 = vmax.f32 %v2463, %v2484
      %v2499 = vmax.f32 %v2464, %v2490
      %v2500 = vmax.f32 %v2465, %v2485
      %v2501 = vrot.slane %v2416, 1
      %v2502 = vrot.slane %v2419, 1
      %v2503 = vrot.slane %v2422, 1
      %v2504 = vrot.slane %v2425, 1
      %v2505 = vrot.slane %v2428, 1
      %v2506 = vrot.slane %v2417, 1
      %v2507 = vrot.slane %v2420, 1
      %v2508 = vrot.slane %v2423, 1
      %v2509 = vrot.slane %v2426, 1
      %v2510 = vrot.slane %v2429, 1
      %v2511 = vrot.slane %v2418, 1
      %v2512 = vrot.slane %v2421, 1
      %v2513 = vrot.slane %v2424, 1
      %v2514 = vrot.slane %v2427, 1
      %v2515 = vrot.slane %v2430, 1
      %v2516 = vsel %vm408, %v2506, %v2511
      %v2517 = vsel %vm408, %v2507, %v2512
      %v2518 = vsel %vm408, %v2508, %v2513
      %v2519 = vsel %vm408, %v2509, %v2514
      %v2520 = vsel %vm408, %v2510, %v2515
      %v2521 = vsel %vm408, %v2501, %v2506
      %v2522 = vsel %vm408, %v2502, %v2507
      %v2523 = vsel %vm408, %v2503, %v2508
      %v2524 = vsel %vm408, %v2504, %v2509
      %v2525 = vsel %vm408, %v2505, %v2510
      %v2526 = vmax.f32 %v2491, %v2521
      %v2527 = vmax.f32 %v2492, %v2516
      %v2528 = vmax.f32 %v2493, %v2522
      %v2529 = vmax.f32 %v2494, %v2517
      %v2530 = vmax.f32 %v2495, %v2523
      %v2531 = vmax.f32 %v2496, %v2518
      %v2532 = vmax.f32 %v2497, %v2524
      %v2533 = vmax.f32 %v2498, %v2519
      %v2534 = vmax.f32 %v2499, %v2525
      %v2535 = vmax.f32 %v2500, %v2520
      %v2536 = vrot.slane %v2416, 2
      %v2537 = vrot.slane %v2419, 2
      %v2538 = vrot.slane %v2422, 2
      %v2539 = vrot.slane %v2425, 2
      %v2540 = vrot.slane %v2428, 2
      %v2541 = vrot.slane %v2417, 2
      %v2542 = vrot.slane %v2420, 2
      %v2543 = vrot.slane %v2423, 2
      %v2544 = vrot.slane %v2426, 2
      %v2545 = vrot.slane %v2429, 2
      %v2546 = vrot.slane %v2418, 2
      %v2547 = vrot.slane %v2421, 2
      %v2548 = vrot.slane %v2424, 2
      %v2549 = vrot.slane %v2427, 2
      %v2550 = vrot.slane %v2430, 2
      %v2551 = vsel %vm444, %v2541, %v2546
      %v2552 = vsel %vm444, %v2542, %v2547
      %v2553 = vsel %vm444, %v2543, %v2548
      %v2554 = vsel %vm444, %v2544, %v2549
      %v2555 = vsel %vm444, %v2545, %v2550
      %v2556 = vsel %vm444, %v2536, %v2541
      %v2557 = vsel %vm444, %v2537, %v2542
      %v2558 = vsel %vm444, %v2538, %v2543
      %v2559 = vsel %vm444, %v2539, %v2544
      %v2560 = vsel %vm444, %v2540, %v2545
      %v2561 = vmax.f32 %v2526, %v2556
      %v2562 = vmax.f32 %v2527, %v2551
      %v2563 = vmax.f32 %v2528, %v2557
      %v2564 = vmax.f32 %v2529, %v2552
      %v2565 = vmax.f32 %v2530, %v2558
      %v2566 = vmax.f32 %v2531, %v2553
      %v2567 = vmax.f32 %v2532, %v2559
      %v2568 = vmax.f32 %v2533, %v2554
      %v2569 = vmax.f32 %v2534, %v2560
      %v2570 = vmax.f32 %v2535, %v2555
      %2571 = vst [vmem:[%s799] sm:$0xff] %v2561
      %2572 = vst [vmem:[%s799 + $0x8] sm:$0xff] %v2562
      %2573 = vst [vmem:[%s799 + $0x10] sm:$0xff] %v2563
      %2574 = vst [vmem:[%s799 + $0x18] sm:$0xff] %v2564
      %2575 = vst [vmem:[%s799 + $0x20] sm:$0xff] %v2565
      %2576 = vst [vmem:[%s799 + $0x28] sm:$0xff] %v2566
      %2577 = vst [vmem:[%s799 + $0x30] sm:$0xff] %v2567
      %2578 = vst [vmem:[%s799 + $0x38] sm:$0xff] %v2568
      %2579 = vst [vmem:[%s799 + $0x40] sm:$0xff] %v2569
      %2580 = vst [vmem:[%s799 + $0x48] sm:$0xff] %v2570
      %v2581 = vld [vmem:[%s810] sm:$0xff]
      %v2582 = vld [vmem:[%s810 + $0x8] sm:$0xff]
      %v2583 = vld [vmem:[%s810 + $0x10] sm:$0xff]
      %v2584 = vrot.slane %v2581, 7
      %v2585 = vrot.slane %v2582, 7
      %v2586 = vrot.slane %v2583, 7
      %v2587 = vsel %vm336, %v2584, %v2585
      %v2588 = vsel %vm336, %v2586, %v2584
      %v2589 = vmax.f32 %v2581, %v2588
      %v2590 = vmax.f32 %v2582, %v2587
      %v2591 = vrot.slane %v2581, 6
      %v2592 = vrot.slane %v2582, 6
      %v2593 = vrot.slane %v2583, 6
      %v2594 = vsel %vm372, %v2591, %v2592
      %v2595 = vsel %vm372, %v2593, %v2591
      %v2596 = vmax.f32 %v2589, %v2595
      %v2597 = vmax.f32 %v2590, %v2594
      %v2598 = vrot.slane %v2581, 1
      %v2599 = vrot.slane %v2582, 1
      %v2600 = vrot.slane %v2583, 1
      %v2601 = vsel %vm408, %v2599, %v2600
      %v2602 = vsel %vm408, %v2598, %v2599
      %v2603 = vmax.f32 %v2596, %v2602
      %v2604 = vmax.f32 %v2597, %v2601
      %v2605 = vrot.slane %v2581, 2
      %v2606 = vrot.slane %v2582, 2
      %v2607 = vrot.slane %v2583, 2
      %v2608 = vsel %vm444, %v2606, %v2607
      %v2609 = vsel %vm444, %v2605, %v2606
      %v2610 = vmax.f32 %v2603, %v2609
      %v2611 = vmax.f32 %v2604, %v2608
      %2612 = vst [vmem:[%s842] sm:$0xff] %v2610
      %2613 = vst [vmem:[%s842 + $0x8] sm:$0xff] %v2611
      %v2614 = vld [vmem:[#allocation3] sm:$0xff]
      %v2615 = vld [vmem:[#allocation3 + $0x8] sm:$0xff]
      %v2616 = vld [vmem:[#allocation3 + $0x10] sm:$0xff]
      %v2617 = vld [vmem:[#allocation3 + $0x18] sm:$0xff]
      %v2618 = vld [vmem:[#allocation3 + $0x20] sm:$0xff]
      %v2619 = vld [vmem:[#allocation3 + $0x28] sm:$0xff]
      %v2620 = vld [vmem:[#allocation3 + $0x30] sm:$0xff]
      %v2621 = vld [vmem:[#allocation3 + $0x38] sm:$0xff]
      %v2622 = vld [vmem:[#allocation3 + $0x40] sm:$0xff]
      %v2623 = vld [vmem:[#allocation3 + $0x48] sm:$0xff]
      %v2624 = vld [vmem:[#allocation3 + $0x50] sm:$0xff]
      %v2625 = vld [vmem:[#allocation3 + $0x58] sm:$0xff]
      %v2626 = vld [vmem:[#allocation3 + $0x60] sm:$0xff]
      %v2627 = vld [vmem:[#allocation3 + $0x68] sm:$0xff]
      %v2628 = vld [vmem:[#allocation3 + $0x70] sm:$0xff]
      %v2629 = vld [vmem:[#allocation3 + $0x78] sm:$0xff]
      %v2630 = vld [vmem:[%s861] sm:$0xff]
      %v2631 = vld [vmem:[%s861 + $0x8] sm:$0xff]
      %v2632 = vld [vmem:[%s861 + $0x10] sm:$0xff]
      %v2633 = vld [vmem:[%s861 + $0x18] sm:$0xff]
      %v2634 = vld [vmem:[%s861 + $0x20] sm:$0xff]
      %v2635 = vld [vmem:[%s861 + $0x28] sm:$0xff]
      %v2636 = vld [vmem:[%s861 + $0x30] sm:$0xff]
      %v2637 = vld [vmem:[%s861 + $0x38] sm:$0xff]
      %v2638 = vld [vmem:[%s861 + $0x40] sm:$0xff]
      %v2639 = vld [vmem:[%s861 + $0x48] sm:$0xff]
      %v2640 = vld [vmem:[%s861 + $0x50] sm:$0xff]
      %v2641 = vld [vmem:[%s861 + $0x58] sm:$0xff]
      %v2642 = vld [vmem:[%s861 + $0x60] sm:$0xff]
      %v2643 = vld [vmem:[%s861 + $0x68] sm:$0xff]
      %v2644 = vld [vmem:[%s861 + $0x70] sm:$0xff]
      %v2645 = vld [vmem:[%s861 + $0x78] sm:$0xff]
      %v2646 = vmax.f32 %v2614, %v2630
      %v2647 = vmax.f32 %v2615, %v2631
      %v2648 = vmax.f32 %v2616, %v2632
      %v2649 = vmax.f32 %v2617, %v2633
      %v2650 = vmax.f32 %v2618, %v2634
      %v2651 = vmax.f32 %v2619, %v2635
      %v2652 = vmax.f32 %v2620, %v2636
      %v2653 = vmax.f32 %v2621, %v2637
      %v2654 = vmax.f32 %v2622, %v2638
      %v2655 = vmax.f32 %v2623, %v2639
      %v2656 = vmax.f32 %v2624, %v2640
      %v2657 = vmax.f32 %v2625, %v2641
      %v2658 = vmax.f32 %v2626, %v2642
      %v2659 = vmax.f32 %v2627, %v2643
      %v2660 = vmax.f32 %v2628, %v2644
      %v2661 = vmax.f32 %v2629, %v2645
      %v2662 = vld [vmem:[%s465] sm:$0xff]
      %v2663 = vld [vmem:[%s465 + $0x8] sm:$0xff]
      %v2664 = vld [vmem:[%s465 + $0x10] sm:$0xff]
      %v2665 = vld [vmem:[%s465 + $0x18] sm:$0xff]
      %v2666 = vld [vmem:[%s465 + $0x20] sm:$0xff]
      %v2667 = vld [vmem:[%s465 + $0x28] sm:$0xff]
      %v2668 = vld [vmem:[%s465 + $0x30] sm:$0xff]
      %v2669 = vld [vmem:[%s465 + $0x38] sm:$0xff]
      %v2670 = vld [vmem:[%s465 + $0x40] sm:$0xff]
      %v2671 = vld [vmem:[%s465 + $0x48] sm:$0xff]
      %v2672 = vld [vmem:[%s465 + $0x50] sm:$0xff]
      %v2673 = vld [vmem:[%s465 + $0x58] sm:$0xff]
      %v2674 = vld [vmem:[%s465 + $0x60] sm:$0xff]
      %v2675 = vld [vmem:[%s465 + $0x68] sm:$0xff]
      %v2676 = vld [vmem:[%s465 + $0x70] sm:$0xff]
      %v2677 = vld [vmem:[%s465 + $0x78] sm:$0xff]
      %v2678 = vmax.f32 %v2646, %v2662
      %v2679 = vmax.f32 %v2647, %v2663
      %v2680 = vmax.f32 %v2648, %v2664
      %v2681 = vmax.f32 %v2649, %v2665
      %v2682 = vmax.f32 %v2650, %v2666
      %v2683 = vmax.f32 %v2651, %v2667
      %v2684 = vmax.f32 %v2652, %v2668
      %v2685 = vmax.f32 %v2653, %v2669
      %v2686 = vmax.f32 %v2654, %v2670
      %v2687 = vmax.f32 %v2655, %v2671
      %v2688 = vmax.f32 %v2656, %v2672
      %v2689 = vmax.f32 %v2657, %v2673
      %v2690 = vmax.f32 %v2658, %v2674
      %v2691 = vmax.f32 %v2659, %v2675
      %v2692 = vmax.f32 %v2660, %v2676
      %v2693 = vmax.f32 %v2661, %v2677
      %v2694 = vld [vmem:[%s926] sm:$0xff]
      %v2695 = vld [vmem:[%s926 + $0x8] sm:$0xff]
      %v2696 = vld [vmem:[%s926 + $0x10] sm:$0xff]
      %v2697 = vld [vmem:[%s926 + $0x18] sm:$0xff]
      %v2698 = vld [vmem:[%s926 + $0x20] sm:$0xff]
      %v2699 = vld [vmem:[%s926 + $0x28] sm:$0xff]
      %v2700 = vld [vmem:[%s926 + $0x30] sm:$0xff]
      %v2701 = vld [vmem:[%s926 + $0x38] sm:$0xff]
      %v2702 = vld [vmem:[%s926 + $0x40] sm:$0xff]
      %v2703 = vld [vmem:[%s926 + $0x48] sm:$0xff]
      %v2704 = vld [vmem:[%s926 + $0x50] sm:$0xff]
      %v2705 = vld [vmem:[%s926 + $0x58] sm:$0xff]
      %v2706 = vld [vmem:[%s926 + $0x60] sm:$0xff]
      %v2707 = vld [vmem:[%s926 + $0x68] sm:$0xff]
      %v2708 = vld [vmem:[%s926 + $0x70] sm:$0xff]
      %v2709 = vld [vmem:[%s926 + $0x78] sm:$0xff]
      %v2710 = vmax.f32 %v2678, %v2694
      %v2711 = vmax.f32 %v2679, %v2695
      %v2712 = vmax.f32 %v2680, %v2696
      %v2713 = vmax.f32 %v2681, %v2697
      %v2714 = vmax.f32 %v2682, %v2698
      %v2715 = vmax.f32 %v2683, %v2699
      %v2716 = vmax.f32 %v2684, %v2700
      %v2717 = vmax.f32 %v2685, %v2701
      %v2718 = vmax.f32 %v2686, %v2702
      %v2719 = vmax.f32 %v2687, %v2703
      %v2720 = vmax.f32 %v2688, %v2704
      %v2721 = vmax.f32 %v2689, %v2705
      %v2722 = vmax.f32 %v2690, %v2706
      %v2723 = vmax.f32 %v2691, %v2707
      %v2724 = vmax.f32 %v2692, %v2708
      %v2725 = vmax.f32 %v2693, %v2709
      %v2726 = vld [vmem:[%s959] sm:$0xff]
      %v2727 = vld [vmem:[%s959 + $0x8] sm:$0xff]
      %v2728 = vld [vmem:[%s959 + $0x10] sm:$0xff]
      %v2729 = vld [vmem:[%s959 + $0x18] sm:$0xff]
      %v2730 = vld [vmem:[%s959 + $0x20] sm:$0xff]
      %v2731 = vld [vmem:[%s959 + $0x28] sm:$0xff]
      %v2732 = vld [vmem:[%s959 + $0x30] sm:$0xff]
      %v2733 = vld [vmem:[%s959 + $0x38] sm:$0xff]
      %v2734 = vld [vmem:[%s959 + $0x40] sm:$0xff]
      %v2735 = vld [vmem:[%s959 + $0x48] sm:$0xff]
      %v2736 = vld [vmem:[%s959 + $0x50] sm:$0xff]
      %v2737 = vld [vmem:[%s959 + $0x58] sm:$0xff]
      %v2738 = vld [vmem:[%s959 + $0x60] sm:$0xff]
      %v2739 = vld [vmem:[%s959 + $0x68] sm:$0xff]
      %v2740 = vld [vmem:[%s959 + $0x70] sm:$0xff]
      %v2741 = vld [vmem:[%s959 + $0x78] sm:$0xff]
      %v2742 = vmax.f32 %v2710, %v2726
      %v2743 = vmax.f32 %v2711, %v2727
      %v2744 = vmax.f32 %v2712, %v2728
      %v2745 = vmax.f32 %v2713, %v2729
      %v2746 = vmax.f32 %v2714, %v2730
      %v2747 = vmax.f32 %v2715, %v2731
      %v2748 = vmax.f32 %v2716, %v2732
      %v2749 = vmax.f32 %v2717, %v2733
      %v2750 = vmax.f32 %v2718, %v2734
      %v2751 = vmax.f32 %v2719, %v2735
      %v2752 = vmax.f32 %v2720, %v2736
      %v2753 = vmax.f32 %v2721, %v2737
      %v2754 = vmax.f32 %v2722, %v2738
      %v2755 = vmax.f32 %v2723, %v2739
      %v2756 = vmax.f32 %v2724, %v2740
      %v2757 = vmax.f32 %v2725, %v2741
      %2758 = vst [vmem:[%s149 + $0x18] sm:$0xff] %v2742
      %2759 = vst [vmem:[%s149 + $0x38] sm:$0xff] %v2743
      %2760 = vst [vmem:[%s149 + $0x58] sm:$0xff] %v2744
      %2761 = vst [vmem:[%s149 + $0x78] sm:$0xff] %v2745
      %2762 = vst [vmem:[%s149 + $0x98] sm:$0xff] %v2746
      %2763 = vst [vmem:[%s149 + $0xb8] sm:$0xff] %v2747
      %2764 = vst [vmem:[%s149 + $0xd8] sm:$0xff] %v2748
      %2765 = vst [vmem:[%s149 + $0xf8] sm:$0xff] %v2749
      %2766 = vst [vmem:[%s149 + $0x118] sm:$0xff] %v2750
      %2767 = vst [vmem:[%s149 + $0x138] sm:$0xff] %v2751
      %2768 = vst [vmem:[%s149 + $0x158] sm:$0xff] %v2752
      %2769 = vst [vmem:[%s149 + $0x178] sm:$0xff] %v2753
      %2770 = vst [vmem:[%s149 + $0x198] sm:$0xff] %v2754
      %2771 = vst [vmem:[%s149 + $0x1b8] sm:$0xff] %v2755
      %2772 = vst [vmem:[%s149 + $0x1d8] sm:$0xff] %v2756
      %2773 = vst [vmem:[%s149 + $0x1f8] sm:$0xff] %v2757
      %v2774 = vld [vmem:[%s1024] sm:$0xff]
      %v2775 = vld [vmem:[%s1024 + $0x8] sm:$0xff]
      %v2776 = vld [vmem:[%s1024 + $0x10] sm:$0xff]
      %v2777 = vld [vmem:[%s1024 + $0x18] sm:$0xff]
      %v2778 = vld [vmem:[%s1024 + $0x20] sm:$0xff]
      %v2779 = vld [vmem:[%s1024 + $0x28] sm:$0xff]
      %v2780 = vld [vmem:[%s1024 + $0x30] sm:$0xff]
      %v2781 = vld [vmem:[%s1024 + $0x38] sm:$0xff]
      %v2782 = vld [vmem:[%s1024 + $0x40] sm:$0xff]
      %v2783 = vld [vmem:[%s1024 + $0x48] sm:$0xff]
      %v2784 = vld [vmem:[%s1024 + $0x50] sm:$0xff]
      %v2785 = vld [vmem:[%s1024 + $0x58] sm:$0xff]
      %v2786 = vld [vmem:[%s1024 + $0x60] sm:$0xff]
      %v2787 = vld [vmem:[%s1024 + $0x68] sm:$0xff]
      %v2788 = vld [vmem:[%s1024 + $0x70] sm:$0xff]
      %v2789 = vld [vmem:[%s1024 + $0x78] sm:$0xff]
      %v2790 = vld [vmem:[%s1041] sm:$0xff]
      %v2791 = vld [vmem:[%s1041 + $0x8] sm:$0xff]
      %v2792 = vld [vmem:[%s1041 + $0x10] sm:$0xff]
      %v2793 = vld [vmem:[%s1041 + $0x18] sm:$0xff]
      %v2794 = vld [vmem:[%s1041 + $0x20] sm:$0xff]
      %v2795 = vld [vmem:[%s1041 + $0x28] sm:$0xff]
      %v2796 = vld [vmem:[%s1041 + $0x30] sm:$0xff]
      %v2797 = vld [vmem:[%s1041 + $0x38] sm:$0xff]
      %v2798 = vld [vmem:[%s1041 + $0x40] sm:$0xff]
      %v2799 = vld [vmem:[%s1041 + $0x48] sm:$0xff]
      %v2800 = vld [vmem:[%s1041 + $0x50] sm:$0xff]
      %v2801 = vld [vmem:[%s1041 + $0x58] sm:$0xff]
      %v2802 = vld [vmem:[%s1041 + $0x60] sm:$0xff]
      %v2803 = vld [vmem:[%s1041 + $0x68] sm:$0xff]
      %v2804 = vld [vmem:[%s1041 + $0x70] sm:$0xff]
      %v2805 = vld [vmem:[%s1041 + $0x78] sm:$0xff]
      %v2806 = vmax.f32 %v2774, %v2790
      %v2807 = vmax.f32 %v2775, %v2791
      %v2808 = vmax.f32 %v2776, %v2792
      %v2809 = vmax.f32 %v2777, %v2793
      %v2810 = vmax.f32 %v2778, %v2794
      %v2811 = vmax.f32 %v2779, %v2795
      %v2812 = vmax.f32 %v2780, %v2796
      %v2813 = vmax.f32 %v2781, %v2797
      %v2814 = vmax.f32 %v2782, %v2798
      %v2815 = vmax.f32 %v2783, %v2799
      %v2816 = vmax.f32 %v2784, %v2800
      %v2817 = vmax.f32 %v2785, %v2801
      %v2818 = vmax.f32 %v2786, %v2802
      %v2819 = vmax.f32 %v2787, %v2803
      %v2820 = vmax.f32 %v2788, %v2804
      %v2821 = vmax.f32 %v2789, %v2805
      %v2822 = vld [vmem:[%s1074] sm:$0xff]
      %v2823 = vld [vmem:[%s1074 + $0x8] sm:$0xff]
      %v2824 = vld [vmem:[%s1074 + $0x10] sm:$0xff]
      %v2825 = vld [vmem:[%s1074 + $0x18] sm:$0xff]
      %v2826 = vld [vmem:[%s1074 + $0x20] sm:$0xff]
      %v2827 = vld [vmem:[%s1074 + $0x28] sm:$0xff]
      %v2828 = vld [vmem:[%s1074 + $0x30] sm:$0xff]
      %v2829 = vld [vmem:[%s1074 + $0x38] sm:$0xff]
      %v2830 = vld [vmem:[%s1074 + $0x40] sm:$0xff]
      %v2831 = vld [vmem:[%s1074 + $0x48] sm:$0xff]
      %v2832 = vld [vmem:[%s1074 + $0x50] sm:$0xff]
      %v2833 = vld [vmem:[%s1074 + $0x58] sm:$0xff]
      %v2834 = vld [vmem:[%s1074 + $0x60] sm:$0xff]
      %v2835 = vld [vmem:[%s1074 + $0x68] sm:$0xff]
      %v2836 = vld [vmem:[%s1074 + $0x70] sm:$0xff]
      %v2837 = vld [vmem:[%s1074 + $0x78] sm:$0xff]
      %v2838 = vmax.f32 %v2806, %v2822
      %v2839 = vmax.f32 %v2807, %v2823
      %v2840 = vmax.f32 %v2808, %v2824
      %v2841 = vmax.f32 %v2809, %v2825
      %v2842 = vmax.f32 %v2810, %v2826
      %v2843 = vmax.f32 %v2811, %v2827
      %v2844 = vmax.f32 %v2812, %v2828
      %v2845 = vmax.f32 %v2813, %v2829
      %v2846 = vmax.f32 %v2814, %v2830
      %v2847 = vmax.f32 %v2815, %v2831
      %v2848 = vmax.f32 %v2816, %v2832
      %v2849 = vmax.f32 %v2817, %v2833
      %v2850 = vmax.f32 %v2818, %v2834
      %v2851 = vmax.f32 %v2819, %v2835
      %v2852 = vmax.f32 %v2820, %v2836
      %v2853 = vmax.f32 %v2821, %v2837
      %v2854 = vld [vmem:[%s1107] sm:$0xff]
      %v2855 = vld [vmem:[%s1107 + $0x8] sm:$0xff]
      %v2856 = vld [vmem:[%s1107 + $0x10] sm:$0xff]
      %v2857 = vld [vmem:[%s1107 + $0x18] sm:$0xff]
      %v2858 = vld [vmem:[%s1107 + $0x20] sm:$0xff]
      %v2859 = vld [vmem:[%s1107 + $0x28] sm:$0xff]
      %v2860 = vld [vmem:[%s1107 + $0x30] sm:$0xff]
      %v2861 = vld [vmem:[%s1107 + $0x38] sm:$0xff]
      %v2862 = vld [vmem:[%s1107 + $0x40] sm:$0xff]
      %v2863 = vld [vmem:[%s1107 + $0x48] sm:$0xff]
      %v2864 = vld [vmem:[%s1107 + $0x50] sm:$0xff]
      %v2865 = vld [vmem:[%s1107 + $0x58] sm:$0xff]
      %v2866 = vld [vmem:[%s1107 + $0x60] sm:$0xff]
      %v2867 = vld [vmem:[%s1107 + $0x68] sm:$0xff]
      %v2868 = vld [vmem:[%s1107 + $0x70] sm:$0xff]
      %v2869 = vld [vmem:[%s1107 + $0x78] sm:$0xff]
      %v2870 = vmax.f32 %v2838, %v2854
      %v2871 = vmax.f32 %v2839, %v2855
      %v2872 = vmax.f32 %v2840, %v2856
      %v2873 = vmax.f32 %v2841, %v2857
      %v2874 = vmax.f32 %v2842, %v2858
      %v2875 = vmax.f32 %v2843, %v2859
      %v2876 = vmax.f32 %v2844, %v2860
      %v2877 = vmax.f32 %v2845, %v2861
      %v2878 = vmax.f32 %v2846, %v2862
      %v2879 = vmax.f32 %v2847, %v2863
      %v2880 = vmax.f32 %v2848, %v2864
      %v2881 = vmax.f32 %v2849, %v2865
      %v2882 = vmax.f32 %v2850, %v2866
      %v2883 = vmax.f32 %v2851, %v2867
      %v2884 = vmax.f32 %v2852, %v2868
      %v2885 = vmax.f32 %v2853, %v2869
      %v2886 = vld [vmem:[%s799] sm:$0xff]
      %v2887 = vld [vmem:[%s799 + $0x8] sm:$0xff]
      %v2888 = vld [vmem:[%s799 + $0x10] sm:$0xff]
      %v2889 = vld [vmem:[%s799 + $0x18] sm:$0xff]
      %v2890 = vld [vmem:[%s799 + $0x20] sm:$0xff]
      %v2891 = vld [vmem:[%s799 + $0x28] sm:$0xff]
      %v2892 = vld [vmem:[%s799 + $0x30] sm:$0xff]
      %v2893 = vld [vmem:[%s799 + $0x38] sm:$0xff]
      %v2894 = vld [vmem:[%s799 + $0x40] sm:$0xff]
      %v2895 = vld [vmem:[%s799 + $0x48] sm:$0xff]
      %v2896 = vld [vmem:[%s799 + $0x50] sm:$0xff]
      %v2897 = vld [vmem:[%s799 + $0x58] sm:$0xff]
      %v2898 = vld [vmem:[%s799 + $0x60] sm:$0xff]
      %v2899 = vld [vmem:[%s799 + $0x68] sm:$0xff]
      %v2900 = vld [vmem:[%s799 + $0x70] sm:$0xff]
      %v2901 = vld [vmem:[%s799 + $0x78] sm:$0xff]
      %v2902 = vmax.f32 %v2870, %v2886
      %v2903 = vmax.f32 %v2871, %v2887
      %v2904 = vmax.f32 %v2872, %v2888
      %v2905 = vmax.f32 %v2873, %v2889
      %v2906 = vmax.f32 %v2874, %v2890
      %v2907 = vmax.f32 %v2875, %v2891
      %v2908 = vmax.f32 %v2876, %v2892
      %v2909 = vmax.f32 %v2877, %v2893
      %v2910 = vmax.f32 %v2878, %v2894
      %v2911 = vmax.f32 %v2879, %v2895
      %v2912 = vmax.f32 %v2880, %v2896
      %v2913 = vmax.f32 %v2881, %v2897
      %v2914 = vmax.f32 %v2882, %v2898
      %v2915 = vmax.f32 %v2883, %v2899
      %v2916 = vmax.f32 %v2884, %v2900
      %v2917 = vmax.f32 %v2885, %v2901
      %2918 = vst [vmem:[%s1172 + $0x18] sm:$0xff] %v2902
      %2919 = vst [vmem:[%s1172 + $0x38] sm:$0xff] %v2903
      %2920 = vst [vmem:[%s1172 + $0x58] sm:$0xff] %v2904
      %2921 = vst [vmem:[%s1172 + $0x78] sm:$0xff] %v2905
      %2922 = vst [vmem:[%s1172 + $0x98] sm:$0xff] %v2906
      %2923 = vst [vmem:[%s1172 + $0xb8] sm:$0xff] %v2907
      %2924 = vst [vmem:[%s1172 + $0xd8] sm:$0xff] %v2908
      %2925 = vst [vmem:[%s1172 + $0xf8] sm:$0xff] %v2909
      %2926 = vst [vmem:[%s1172 + $0x118] sm:$0xff] %v2910
      %2927 = vst [vmem:[%s1172 + $0x138] sm:$0xff] %v2911
      %2928 = vst [vmem:[%s1172 + $0x158] sm:$0xff] %v2912
      %2929 = vst [vmem:[%s1172 + $0x178] sm:$0xff] %v2913
      %2930 = vst [vmem:[%s1172 + $0x198] sm:$0xff] %v2914
      %2931 = vst [vmem:[%s1172 + $0x1b8] sm:$0xff] %v2915
      %2932 = vst [vmem:[%s1172 + $0x1d8] sm:$0xff] %v2916
      %2933 = vst [vmem:[%s1172 + $0x1f8] sm:$0xff] %v2917
      %s2934 = smul.u32 4, %s17
      %p2935 = scmp.lt.s32.totalorder %s16, 1
      %s2936 = scalar_select %p2935, %s16, 1
      %p2937 = scmp.lt.s32.totalorder %s2934, 3
      %s2938 = scalar_select %p2937, %s2934, 3
      %s2939 = smul.addr %s2936, 128
      %s2940 = sadd.s32 %s2938, %s2939
      %s2941 = smul.addr %s2940, 8
      %s2942 = scalar_lea.vmem %s1, %s2941
      // Predicated region
      $region25: #{spp.1} parent=23 // pred_check
        %p2943 = pneg %p72
      $region26: #{spp.1} parent=23 // pred_check_branch
        %2945 = sbr.rel (%p2943) target = $region28
      $region27: #{spp.1} parent=23 // pred_region
        %s2946 = smul.u32 4, %s17
      $region28: #{spp.1} parent=23 // pred_fallthru
        _
    $region24: #{spp.1} parent=5 // pred_fallthru
      _
    %p2947 = scmp.le.s32.totalorder 2, %s7
    // Predicated region
    $region29: #{spp.1} parent=5 // pred_check
      %p2948 = pneg %p2947
    $region30: #{spp.1} parent=5 // pred_check_branch
      %2950 = sbr.rel (%p2948) target = $region32
    $region31: #{spp.1} parent=5 // pred_region
      %s2951 = ssub.s32 %s7, 2
      // Predicated region
      $region33: #{spp.1} parent=31 // pred_check
        %p2952 = pneg %p78
      $region34: #{spp.1} parent=31 // pred_check_branch
        %2954 = sbr.rel (%p2952) target = $region36
      $region35: #{spp.1} parent=31 // pred_region
        %s2955 = smul.u32 4, %s19
        %p2956 = scmp.lt.s32.totalorder %s18, 1
        %s2957 = scalar_select %p2956, %s18, 1
        %p2958 = scmp.lt.s32.totalorder %s2955, 3
        %s2959 = scalar_select %p2958, %s2955, 3
        %s2960 = smul.addr %s2957, 128
        %s2961 = sadd.s32 %s2959, %s2960
        %s2962 = smul.addr %s2961, 8
        %s2963 = scalar_lea.vmem %s1, %s2962
      $region36: #{spp.1} parent=31 // pred_fallthru
        _
    $region32: #{spp.1} parent=5 // pred_fallthru
      _
  $region6: #{spp.1} parent=0 // loop_footer
    %s11 = sadd.s32 1, %s7
  $region7: #{spp.1} parent=0 // loop_footer_branch
    %6 = sbr.rel target = $region3
  $region8: #{spp.1} parent=0 // loop_exit
    _

</llo_original>
